<compile_context>
chip_gen: v7x
topology: tpu7x:2x2x1
jax: 0.10.0
libtpu: 0.0.40
codegen_flags: <defaults>
</compile_context>

<pallas_src>
import functools

import numpy as np
import jax
import jax.numpy as jnp
from jax import lax
from jax.experimental import pallas as pl
from jax.experimental.pallas import tpu as pltpu


def _round_up(v, m):
    return (v + m - 1) // m * m


# ------------------------------ Pallas kernel ------------------------------ #

def fused_convnet_kernel(x_ref, w_ref, cb_ref, wfc_ref, fb_ref, o_ref, acc_ref,
                         *, n_batch, sq_pad, wq, cout, n_classes):
    """Fused 3x3 'same' conv + bias + ReLU + 2x2 maxpool + Linear.

    x_ref   : (R, Cin_p)          f32  parity-split padded image rows (wrapper)
    w_ref   : (16, Cin_p, 4*Co)   f32  per-(parity,shift) conv weights; one
                                       Co-wide lane block per pooling quadrant
                                       (taps already masked per quadrant)
    cb_ref  : (1, Co)             f32  conv bias
    wfc_ref : (K, sq_pad, Co)     f32  FC weight in (pool-position, channel)
                                       order, zeros at guard/pad positions
    fb_ref  : (K,)                f32  FC bias (SMEM scalars)
    o_ref   : (N, 128)            f32  lane-dense logits (first K lanes valid)
    acc_ref : (N*sq_pad, 4*Co)    f32  VMEM scratch for the conv accumulator
    """
    m_rows = n_batch * sq_pad

    # ---- conv: accumulate 16 (parity, shift) slabs into one (M, 4*Co) value.
    # Each slab is a contiguous row window of x_ref; its weight slice already
    # carries the per-quadrant tap masking, so a plain accumulate is exact.
    # Live vregs stay ~2x22 (no spill), unlike the old 64-vreg accumulator.
    acc = None
    for rh in range(2):
        for rw in range(2):
            base = (rh * 2 + rw) * m_rows
            for qh in range(2):
                for qw in range(2):
                    slab = ((rh * 2 + rw) * 2 + qh) * 2 + qw
                    lhs = x_ref[pl.ds(base + qh * wq + qw, m_rows), :]
                    part = jnp.dot(lhs, w_ref[slab],
                                   preferred_element_type=jnp.float32)
                    acc = part if acc is None else acc + part
    acc_ref[...] = acc

    # ---- 2x2 max-pool == elementwise max over the 4 quadrant lane blocks;
    # per-channel bias and ReLU commute with the max, so apply them after.
    m = jnp.maximum(
        jnp.maximum(acc_ref[:, 0 * cout:1 * cout], acc_ref[:, 1 * cout:2 * cout]),
        jnp.maximum(acc_ref[:, 2 * cout:3 * cout], acc_ref[:, 3 * cout:4 * cout]))
    pooled = jnp.maximum(m + cb_ref[...], 0.0)                 # (M, Co) f32

    # ---- fused FC epilogue (N, K tiny -> VPU/XLU filler).  Guard/pad rows
    # are zeroed in wfc so no explicit masking is needed.  Logits are built
    # into one lane-dense (N, 128) value and stored exactly once.
    # TODO(synk): for num_classes >= 16 restructure this as an MXU matmul.
    out_rows, out_lanes = o_ref.shape
    row_id = lax.broadcasted_iota(jnp.int32, (out_rows, out_lanes), 0)
    lane_id = lax.broadcasted_iota(jnp.int32, (out_rows, out_lanes), 1)
    logits = jnp.zeros((out_rows, out_lanes), jnp.float32)
    for n in range(n_batch):                                   # static unroll
        pn = pooled[n * sq_pad:(n + 1) * sq_pad, :]            # (sq_pad, Co)
        for k in range(n_classes):                             # static unroll
            s = jnp.sum(pn * wfc_ref[k], axis=1, keepdims=True)    # lane reduce
            s = jnp.sum(s, axis=0, keepdims=True) + fb_ref[k]      # sublane red.
            logits = jnp.where((row_id == n) & (lane_id == k), s, logits)
    o_ref[...] = logits                                        # single store


# --------------------------- one-time weight prep --------------------------- #

def prepare_weights(conv_w, conv_b, fc_w, fc_b, *, img_size):
    """Re-layout the PyTorch parameters for the fused kernel (run ONCE).

    Conv weight -> (16, Cin_p, 4*Cout):  slab = ((rh*2+rw)*2+qh)*2+qw and the
    lane block (a*2+b)*Cout+co holds w[co, ci, 2qh+rh-a, 2qw+rw-b] (0 if that
    tap is out of range), so each pooling quadrant's conv is a masked matmul.
    FC weight  -> (K, Sq_pad, Cout) in (pool-position, channel) order with
    zeros on the guard row/col and pad rows (no batch tiling).
    """
    cout, cin, kh, kw = conv_w.shape
    assert (kh, kw) == (3, 3), "kernel is specialized for 3x3 'same' conv"
    n_classes = fc_w.shape[0]
    H, W = img_size
    assert H % 2 == 0 and W % 2 == 0, "even H/W required (2x2 pooling)"
    hp, wp = H // 2, W // 2
    hq, wq = hp + 1, wp + 1
    sq = hq * wq
    sq_pad = _round_up(sq, 8)
    cin_pad = _round_up(cin, 8)

    # conv weight: 4 quadrant-shifted zero pads -> regroup taps by (parity, shift)
    wpads = [[jnp.pad(conv_w, ((0, 0), (0, 0), (a, 1 - a), (b, 1 - b)))
              for b in range(2)] for a in range(2)]
    wq_ = jnp.stack([jnp.stack(r, axis=0) for r in wpads], axis=0)
    # dims [a, b, co, ci, sh, sw] with sh = 2*qh + rh, sw = 2*qw + rw
    wq_ = wq_.reshape(2, 2, cout, cin, 2, 2, 2, 2)       # [a,b,co,ci,qh,rh,qw,rw]
    wq_ = jnp.transpose(wq_, (5, 7, 4, 6, 3, 0, 1, 2))   # [rh,rw,qh,qw,ci,a,b,co]
    wq_ = wq_.reshape(16, cin, 4 * cout)
    w_rhs = jnp.pad(wq_, ((0, 0), (0, cin_pad - cin), (0, 0))).astype(jnp.float32)

    cb = conv_b.reshape(1, cout).astype(jnp.float32)

    # fc weight: PyTorch flatten order is co*hp*wp + pi*wp + pj
    wfc = fc_w.reshape(n_classes, cout, hp, wp)
    wfc = jnp.transpose(wfc, (0, 2, 3, 1))               # (K, hp, wp, Co)
    wfc = jnp.pad(wfc, ((0, 0), (0, 1), (0, 1), (0, 0))) # zero guard row/col
    wfc = wfc.reshape(n_classes, sq, cout)
    wfc = jnp.pad(wfc, ((0, 0), (0, sq_pad - sq), (0, 0))).astype(jnp.float32)

    fb = fc_b.astype(jnp.float32)                        # (K,) -> SMEM
    return w_rhs, cb, wfc, fb


# ------------------------------ JAX wrapper --------------------------------- #

@jax.jit
def simple_convnet_forward(x, w_rhs, cb, wfc, fb):
    """x: (N, 3, H, W) f32 NCHW (like PyTorch).  Returns (N, num_classes) f32."""
    N, cin, H, W = x.shape
    assert H % 2 == 0 and W % 2 == 0, "even H/W required (2x2 pooling)"
    hp, wp = H // 2, W // 2
    hq, wq = hp + 1, wp + 1
    sq = hq * wq
    sq_pad = _round_up(sq, 8)
    cout = cb.shape[1]
    n_classes = wfc.shape[0]
    cin_pad = w_rhs.shape[1]
    assert wfc.shape[1] == sq_pad and w_rhs.shape[2] == 4 * cout
    m_rows = N * sq_pad
    out_lanes = 128
    assert n_classes <= out_lanes

    # --- per-call glue: only a parity re-layout of the tiny padded image ---
    # (rows = parity-block-major, sample, pool-row, pool-col; cols = channel)
    xg = jnp.transpose(x, (0, 2, 3, 1))                        # NCHW -> NHWC
    xg = jnp.pad(xg, ((0, 0), (1, 1), (1, 1), (0, 0)))         # 'same' halo
    xg = xg.reshape(N, hq, 2, wq, 2, cin)
    xg = jnp.transpose(xg, (2, 4, 0, 1, 3, 5))                 # (rh,rw,n,u,v,ci)
    xg = xg.reshape(4, N, sq, cin)
    xg = jnp.pad(xg, ((0, 0), (0, 0), (0, sq_pad - sq), (0, cin_pad - cin)))
    xg = xg.reshape(4 * m_rows, cin_pad).astype(jnp.float32)
    # guard rows so every shifted slab window [off, off + m_rows) is in bounds
    n_rows = _round_up(4 * m_rows + wq + 1, 8)
    xg = jnp.pad(xg, ((0, n_rows - 4 * m_rows), (0, 0)))

    kernel = functools.partial(fused_convnet_kernel, n_batch=N, sq_pad=sq_pad,
                               wq=wq, cout=cout, n_classes=n_classes)
    vmem = pl.BlockSpec(memory_space=pltpu.MemorySpace.VMEM)
    smem = pl.BlockSpec(memory_space=pltpu.MemorySpace.SMEM)
    # Grid-less single invocation: total VMEM footprint is ~200 KiB here.
    # TODO(synk): for large N/H/W reintroduce a "parallel" batch grid (v7x has
    # 2 TensorCores and only 64 MiB VMEM) and switch conv operands to bf16.
    out = pl.pallas_call(
        kernel,
        out_shape=jax.ShapeDtypeStruct((N, out_lanes), jnp.float32),
        in_specs=[vmem, vmem, vmem, vmem, smem],
        out_specs=vmem,
        scratch_shapes=[pltpu.VMEM((m_rows, 4 * cout), jnp.float32)],
    )(xg, w_rhs, cb, wfc, fb)
    return out[:, :n_classes]


# ------------------------------ pure-JAX ref -------------------------------- #

def reference_forward(x, conv_w, conv_b, fc_w, fc_b):
    conv = lax.conv_general_dilated(
        x, conv_w, window_strides=(1, 1), padding="SAME",
        dimension_numbers=("NCHW", "OIHW", "NCHW"),
    ) + conv_b.reshape(1, -1, 1, 1)
    act = jnp.maximum(conv, 0.0)
    pooled = lax.reduce_window(
        act, -jnp.inf, lax.max, (1, 1, 2, 2), (1, 1, 2, 2), "VALID")
    flat = pooled.reshape(x.shape[0], -1)
    return flat @ fc_w.T + fc_b


# ---------------------------------- main ------------------------------------ #

if __name__ == "__main__":
    # Small shapes consistent with the module: img_size=(16,16), 32 filters, 2 classes.
    N, Cin, H, W = 2, 3, 16, 16
    num_filters, num_classes = 32, 2
    feat = (H // 2) * (W // 2) * num_filters  # 2048

    key = jax.random.PRNGKey(0)
    kx, kw1, kb1, kw2, kb2 = jax.random.split(key, 5)
    x = jax.random.normal(kx, (N, Cin, H, W), jnp.float32)

    bnd1 = 1.0 / np.sqrt(Cin * 3 * 3)
    conv_w = jax.random.uniform(kw1, (num_filters, Cin, 3, 3), jnp.float32, -bnd1, bnd1)
    conv_b = jax.random.uniform(kb1, (num_filters,), jnp.float32, -bnd1, bnd1)
    bnd2 = 1.0 / np.sqrt(feat)
    fc_w = jax.random.uniform(kw2, (num_classes, feat), jnp.float32, -bnd2, bnd2)
    fc_b = jax.random.uniform(kb2, (num_classes,), jnp.float32, -bnd2, bnd2)

    # One-time parameter re-layout (outside the per-call path).
    params = prepare_weights(conv_w, conv_b, fc_w, fc_b, img_size=(H, W))

    out = jax.block_until_ready(simple_convnet_forward(x, *params))
    ref = jax.block_until_ready(reference_forward(x, conv_w, conv_b, fc_w, fc_b))
    # Loose tolerance covers the case where the MXU lowers f32 matmuls via
    # bf16 passes on some generations; typically this matches to ~1e-5.
    np.testing.assert_allclose(np.asarray(out), np.asarray(ref), rtol=2e-2, atol=2e-2)

    print("KERNEL_OK")
</pallas_src>

<mosaic_0001>
module attributes {stable_mosaic.version = 11 : i64} {
  func.func @fused_convnet_kernel(%arg0: memref<720x8xf32, #tpu.memory_space<vmem>>, %arg1: memref<16x8x128xf32, #tpu.memory_space<vmem>>, %arg2: memref<1x32xf32, #tpu.memory_space<vmem>>, %arg3: memref<2x88x32xf32, #tpu.memory_space<vmem>>, %arg4: memref<2xf32, #tpu.memory_space<smem>>, %arg5: memref<2x128xf32, #tpu.memory_space<vmem>>, %arg6: memref<176x128xf32, #tpu.memory_space<vmem>>) attributes {dimension_semantics = [], scalar_prefetch = 0 : i64, scratch_operands = 1 : i64, tpu.core_type = #tpu.core_type<tc>} {
    %c0 = arith.constant 0 : index
    %c0_0 = arith.constant 0 : index
    %0 = vector.load %arg0[%c0, %c0_0] : memref<720x8xf32, #tpu.memory_space<vmem>>, vector<176x8xf32>
    %c0_1 = arith.constant 0 : index
    %c0_2 = arith.constant 0 : index
    %c0_3 = arith.constant 0 : index
    %1 = vector.load %arg1[%c0_1, %c0_2, %c0_3] : memref<16x8x128xf32, #tpu.memory_space<vmem>>, vector<1x8x128xf32>
    %2 = vector.shape_cast %1 : vector<1x8x128xf32> to vector<8x128xf32>
    %cst = arith.constant dense<0.000000e+00> : vector<176x128xf32>
    %3 = tpu.matmul %0, %2, %cst {dimension_numbers = #tpu.dot_dimension_numbers<[1], [0], [0], [1], [0, 0, 1, 1], [], []>} : vector<176x8xf32>, vector<8x128xf32>, vector<176x128xf32> -> vector<176x128xf32>
    %c1 = arith.constant 1 : index
    %c0_4 = arith.constant 0 : index
    %4 = vector.load %arg0[%c1, %c0_4] : memref<720x8xf32, #tpu.memory_space<vmem>>, vector<176x8xf32>
    %c1_5 = arith.constant 1 : index
    %c0_6 = arith.constant 0 : index
    %c0_7 = arith.constant 0 : index
    %5 = vector.load %arg1[%c1_5, %c0_6, %c0_7] : memref<16x8x128xf32, #tpu.memory_space<vmem>>, vector<1x8x128xf32>
    %6 = vector.shape_cast %5 : vector<1x8x128xf32> to vector<8x128xf32>
    %cst_8 = arith.constant dense<0.000000e+00> : vector<176x128xf32>
    %7 = tpu.matmul %4, %6, %cst_8 {dimension_numbers = #tpu.dot_dimension_numbers<[1], [0], [0], [1], [0, 0, 1, 1], [], []>} : vector<176x8xf32>, vector<8x128xf32>, vector<176x128xf32> -> vector<176x128xf32>
    %8 = arith.addf %3, %7 : vector<176x128xf32>
    %c9 = arith.constant 9 : index
    %c0_9 = arith.constant 0 : index
    %9 = vector.load %arg0[%c9, %c0_9] : memref<720x8xf32, #tpu.memory_space<vmem>>, vector<176x8xf32>
    %c2 = arith.constant 2 : index
    %c0_10 = arith.constant 0 : index
    %c0_11 = arith.constant 0 : index
    %10 = vector.load %arg1[%c2, %c0_10, %c0_11] : memref<16x8x128xf32, #tpu.memory_space<vmem>>, vector<1x8x128xf32>
    %11 = vector.shape_cast %10 : vector<1x8x128xf32> to vector<8x128xf32>
    %cst_12 = arith.constant dense<0.000000e+00> : vector<176x128xf32>
    %12 = tpu.matmul %9, %11, %cst_12 {dimension_numbers = #tpu.dot_dimension_numbers<[1], [0], [0], [1], [0, 0, 1, 1], [], []>} : vector<176x8xf32>, vector<8x128xf32>, vector<176x128xf32> -> vector<176x128xf32>
    %13 = arith.addf %8, %12 : vector<176x128xf32>
    %c10 = arith.constant 10 : index
    %c0_13 = arith.constant 0 : index
    %14 = vector.load %arg0[%c10, %c0_13] : memref<720x8xf32, #tpu.memory_space<vmem>>, vector<176x8xf32>
    %c3 = arith.constant 3 : index
    %c0_14 = arith.constant 0 : index
    %c0_15 = arith.constant 0 : index
    %15 = vector.load %arg1[%c3, %c0_14, %c0_15] : memref<16x8x128xf32, #tpu.memory_space<vmem>>, vector<1x8x128xf32>
    %16 = vector.shape_cast %15 : vector<1x8x128xf32> to vector<8x128xf32>
    %cst_16 = arith.constant dense<0.000000e+00> : vector<176x128xf32>
    %17 = tpu.matmul %14, %16, %cst_16 {dimension_numbers = #tpu.dot_dimension_numbers<[1], [0], [0], [1], [0, 0, 1, 1], [], []>} : vector<176x8xf32>, vector<8x128xf32>, vector<176x128xf32> -> vector<176x128xf32>
    %18 = arith.addf %13, %17 : vector<176x128xf32>
    %c176 = arith.constant 176 : index
    %c0_17 = arith.constant 0 : index
    %19 = vector.load %arg0[%c176, %c0_17] : memref<720x8xf32, #tpu.memory_space<vmem>>, vector<176x8xf32>
    %c4 = arith.constant 4 : index
    %c0_18 = arith.constant 0 : index
    %c0_19 = arith.constant 0 : index
    %20 = vector.load %arg1[%c4, %c0_18, %c0_19] : memref<16x8x128xf32, #tpu.memory_space<vmem>>, vector<1x8x128xf32>
    %21 = vector.shape_cast %20 : vector<1x8x128xf32> to vector<8x128xf32>
    %cst_20 = arith.constant dense<0.000000e+00> : vector<176x128xf32>
    %22 = tpu.matmul %19, %21, %cst_20 {dimension_numbers = #tpu.dot_dimension_numbers<[1], [0], [0], [1], [0, 0, 1, 1], [], []>} : vector<176x8xf32>, vector<8x128xf32>, vector<176x128xf32> -> vector<176x128xf32>
    %23 = arith.addf %18, %22 : vector<176x128xf32>
    %c177 = arith.constant 177 : index
    %c0_21 = arith.constant 0 : index
    %24 = vector.load %arg0[%c177, %c0_21] : memref<720x8xf32, #tpu.memory_space<vmem>>, vector<176x8xf32>
    %c5 = arith.constant 5 : index
    %c0_22 = arith.constant 0 : index
    %c0_23 = arith.constant 0 : index
    %25 = vector.load %arg1[%c5, %c0_22, %c0_23] : memref<16x8x128xf32, #tpu.memory_space<vmem>>, vector<1x8x128xf32>
    %26 = vector.shape_cast %25 : vector<1x8x128xf32> to vector<8x128xf32>
    %cst_24 = arith.constant dense<0.000000e+00> : vector<176x128xf32>
    %27 = tpu.matmul %24, %26, %cst_24 {dimension_numbers = #tpu.dot_dimension_numbers<[1], [0], [0], [1], [0, 0, 1, 1], [], []>} : vector<176x8xf32>, vector<8x128xf32>, vector<176x128xf32> -> vector<176x128xf32>
    %28 = arith.addf %23, %27 : vector<176x128xf32>
    %c185 = arith.constant 185 : index
    %c0_25 = arith.constant 0 : index
    %29 = vector.load %arg0[%c185, %c0_25] : memref<720x8xf32, #tpu.memory_space<vmem>>, vector<176x8xf32>
    %c6 = arith.constant 6 : index
    %c0_26 = arith.constant 0 : index
    %c0_27 = arith.constant 0 : index
    %30 = vector.load %arg1[%c6, %c0_26, %c0_27] : memref<16x8x128xf32, #tpu.memory_space<vmem>>, vector<1x8x128xf32>
    %31 = vector.shape_cast %30 : vector<1x8x128xf32> to vector<8x128xf32>
    %cst_28 = arith.constant dense<0.000000e+00> : vector<176x128xf32>
    %32 = tpu.matmul %29, %31, %cst_28 {dimension_numbers = #tpu.dot_dimension_numbers<[1], [0], [0], [1], [0, 0, 1, 1], [], []>} : vector<176x8xf32>, vector<8x128xf32>, vector<176x128xf32> -> vector<176x128xf32>
    %33 = arith.addf %28, %32 : vector<176x128xf32>
    %c186 = arith.constant 186 : index
    %c0_29 = arith.constant 0 : index
    %34 = vector.load %arg0[%c186, %c0_29] : memref<720x8xf32, #tpu.memory_space<vmem>>, vector<176x8xf32>
    %c7 = arith.constant 7 : index
    %c0_30 = arith.constant 0 : index
    %c0_31 = arith.constant 0 : index
    %35 = vector.load %arg1[%c7, %c0_30, %c0_31] : memref<16x8x128xf32, #tpu.memory_space<vmem>>, vector<1x8x128xf32>
    %36 = vector.shape_cast %35 : vector<1x8x128xf32> to vector<8x128xf32>
    %cst_32 = arith.constant dense<0.000000e+00> : vector<176x128xf32>
    %37 = tpu.matmul %34, %36, %cst_32 {dimension_numbers = #tpu.dot_dimension_numbers<[1], [0], [0], [1], [0, 0, 1, 1], [], []>} : vector<176x8xf32>, vector<8x128xf32>, vector<176x128xf32> -> vector<176x128xf32>
    %38 = arith.addf %33, %37 : vector<176x128xf32>
    %c352 = arith.constant 352 : index
    %c0_33 = arith.constant 0 : index
    %39 = vector.load %arg0[%c352, %c0_33] : memref<720x8xf32, #tpu.memory_space<vmem>>, vector<176x8xf32>
    %c8 = arith.constant 8 : index
    %c0_34 = arith.constant 0 : index
    %c0_35 = arith.constant 0 : index
    %40 = vector.load %arg1[%c8, %c0_34, %c0_35] : memref<16x8x128xf32, #tpu.memory_space<vmem>>, vector<1x8x128xf32>
    %41 = vector.shape_cast %40 : vector<1x8x128xf32> to vector<8x128xf32>
    %cst_36 = arith.constant dense<0.000000e+00> : vector<176x128xf32>
    %42 = tpu.matmul %39, %41, %cst_36 {dimension_numbers = #tpu.dot_dimension_numbers<[1], [0], [0], [1], [0, 0, 1, 1], [], []>} : vector<176x8xf32>, vector<8x128xf32>, vector<176x128xf32> -> vector<176x128xf32>
    %43 = arith.addf %38, %42 : vector<176x128xf32>
    %c353 = arith.constant 353 : index
    %c0_37 = arith.constant 0 : index
    %44 = vector.load %arg0[%c353, %c0_37] : memref<720x8xf32, #tpu.memory_space<vmem>>, vector<176x8xf32>
    %c9_38 = arith.constant 9 : index
    %c0_39 = arith.constant 0 : index
    %c0_40 = arith.constant 0 : index
    %45 = vector.load %arg1[%c9_38, %c0_39, %c0_40] : memref<16x8x128xf32, #tpu.memory_space<vmem>>, vector<1x8x128xf32>
    %46 = vector.shape_cast %45 : vector<1x8x128xf32> to vector<8x128xf32>
    %cst_41 = arith.constant dense<0.000000e+00> : vector<176x128xf32>
    %47 = tpu.matmul %44, %46, %cst_41 {dimension_numbers = #tpu.dot_dimension_numbers<[1], [0], [0], [1], [0, 0, 1, 1], [], []>} : vector<176x8xf32>, vector<8x128xf32>, vector<176x128xf32> -> vector<176x128xf32>
    %48 = arith.addf %43, %47 : vector<176x128xf32>
    %c361 = arith.constant 361 : index
    %c0_42 = arith.constant 0 : index
    %49 = vector.load %arg0[%c361, %c0_42] : memref<720x8xf32, #tpu.memory_space<vmem>>, vector<176x8xf32>
    %c10_43 = arith.constant 10 : index
    %c0_44 = arith.constant 0 : index
    %c0_45 = arith.constant 0 : index
    %50 = vector.load %arg1[%c10_43, %c0_44, %c0_45] : memref<16x8x128xf32, #tpu.memory_space<vmem>>, vector<1x8x128xf32>
    %51 = vector.shape_cast %50 : vector<1x8x128xf32> to vector<8x128xf32>
    %cst_46 = arith.constant dense<0.000000e+00> : vector<176x128xf32>
    %52 = tpu.matmul %49, %51, %cst_46 {dimension_numbers = #tpu.dot_dimension_numbers<[1], [0], [0], [1], [0, 0, 1, 1], [], []>} : vector<176x8xf32>, vector<8x128xf32>, vector<176x128xf32> -> vector<176x128xf32>
    %53 = arith.addf %48, %52 : vector<176x128xf32>
    %c362 = arith.constant 362 : index
    %c0_47 = arith.constant 0 : index
    %54 = vector.load %arg0[%c362, %c0_47] : memref<720x8xf32, #tpu.memory_space<vmem>>, vector<176x8xf32>
    %c11 = arith.constant 11 : index
    %c0_48 = arith.constant 0 : index
    %c0_49 = arith.constant 0 : index
    %55 = vector.load %arg1[%c11, %c0_48, %c0_49] : memref<16x8x128xf32, #tpu.memory_space<vmem>>, vector<1x8x128xf32>
    %56 = vector.shape_cast %55 : vector<1x8x128xf32> to vector<8x128xf32>
    %cst_50 = arith.constant dense<0.000000e+00> : vector<176x128xf32>
    %57 = tpu.matmul %54, %56, %cst_50 {dimension_numbers = #tpu.dot_dimension_numbers<[1], [0], [0], [1], [0, 0, 1, 1], [], []>} : vector<176x8xf32>, vector<8x128xf32>, vector<176x128xf32> -> vector<176x128xf32>
    %58 = arith.addf %53, %57 : vector<176x128xf32>
    %c528 = arith.constant 528 : index
    %c0_51 = arith.constant 0 : index
    %59 = vector.load %arg0[%c528, %c0_51] : memref<720x8xf32, #tpu.memory_space<vmem>>, vector<176x8xf32>
    %c12 = arith.constant 12 : index
    %c0_52 = arith.constant 0 : index
    %c0_53 = arith.constant 0 : index
    %60 = vector.load %arg1[%c12, %c0_52, %c0_53] : memref<16x8x128xf32, #tpu.memory_space<vmem>>, vector<1x8x128xf32>
    %61 = vector.shape_cast %60 : vector<1x8x128xf32> to vector<8x128xf32>
    %cst_54 = arith.constant dense<0.000000e+00> : vector<176x128xf32>
    %62 = tpu.matmul %59, %61, %cst_54 {dimension_numbers = #tpu.dot_dimension_numbers<[1], [0], [0], [1], [0, 0, 1, 1], [], []>} : vector<176x8xf32>, vector<8x128xf32>, vector<176x128xf32> -> vector<176x128xf32>
    %63 = arith.addf %58, %62 : vector<176x128xf32>
    %c529 = arith.constant 529 : index
    %c0_55 = arith.constant 0 : index
    %64 = vector.load %arg0[%c529, %c0_55] : memref<720x8xf32, #tpu.memory_space<vmem>>, vector<176x8xf32>
    %c13 = arith.constant 13 : index
    %c0_56 = arith.constant 0 : index
    %c0_57 = arith.constant 0 : index
    %65 = vector.load %arg1[%c13, %c0_56, %c0_57] : memref<16x8x128xf32, #tpu.memory_space<vmem>>, vector<1x8x128xf32>
    %66 = vector.shape_cast %65 : vector<1x8x128xf32> to vector<8x128xf32>
    %cst_58 = arith.constant dense<0.000000e+00> : vector<176x128xf32>
    %67 = tpu.matmul %64, %66, %cst_58 {dimension_numbers = #tpu.dot_dimension_numbers<[1], [0], [0], [1], [0, 0, 1, 1], [], []>} : vector<176x8xf32>, vector<8x128xf32>, vector<176x128xf32> -> vector<176x128xf32>
    %68 = arith.addf %63, %67 : vector<176x128xf32>
    %c537 = arith.constant 537 : index
    %c0_59 = arith.constant 0 : index
    %69 = vector.load %arg0[%c537, %c0_59] : memref<720x8xf32, #tpu.memory_space<vmem>>, vector<176x8xf32>
    %c14 = arith.constant 14 : index
    %c0_60 = arith.constant 0 : index
    %c0_61 = arith.constant 0 : index
    %70 = vector.load %arg1[%c14, %c0_60, %c0_61] : memref<16x8x128xf32, #tpu.memory_space<vmem>>, vector<1x8x128xf32>
    %71 = vector.shape_cast %70 : vector<1x8x128xf32> to vector<8x128xf32>
    %cst_62 = arith.constant dense<0.000000e+00> : vector<176x128xf32>
    %72 = tpu.matmul %69, %71, %cst_62 {dimension_numbers = #tpu.dot_dimension_numbers<[1], [0], [0], [1], [0, 0, 1, 1], [], []>} : vector<176x8xf32>, vector<8x128xf32>, vector<176x128xf32> -> vector<176x128xf32>
    %73 = arith.addf %68, %72 : vector<176x128xf32>
    %c538 = arith.constant 538 : index
    %c0_63 = arith.constant 0 : index
    %74 = vector.load %arg0[%c538, %c0_63] : memref<720x8xf32, #tpu.memory_space<vmem>>, vector<176x8xf32>
    %c15 = arith.constant 15 : index
    %c0_64 = arith.constant 0 : index
    %c0_65 = arith.constant 0 : index
    %75 = vector.load %arg1[%c15, %c0_64, %c0_65] : memref<16x8x128xf32, #tpu.memory_space<vmem>>, vector<1x8x128xf32>
    %76 = vector.shape_cast %75 : vector<1x8x128xf32> to vector<8x128xf32>
    %cst_66 = arith.constant dense<0.000000e+00> : vector<176x128xf32>
    %77 = tpu.matmul %74, %76, %cst_66 {dimension_numbers = #tpu.dot_dimension_numbers<[1], [0], [0], [1], [0, 0, 1, 1], [], []>} : vector<176x8xf32>, vector<8x128xf32>, vector<176x128xf32> -> vector<176x128xf32>
    %78 = arith.addf %73, %77 : vector<176x128xf32>
    %c0_67 = arith.constant 0 : index
    %c0_68 = arith.constant 0 : index
    %79 = vector.load %arg6[%c0_67, %c0_68] : memref<176x128xf32, #tpu.memory_space<vmem>>, vector<176x128xf32>
    tpu.vector_store %arg6[%c0_67, %c0_68], %78 {strides = array<i32>} : memref<176x128xf32, #tpu.memory_space<vmem>>, vector<176x128xf32>,
    %c0_69 = arith.constant 0 : index
    %c0_70 = arith.constant 0 : index
    %80 = vector.load %arg6[%c0_69, %c0_70] : memref<176x128xf32, #tpu.memory_space<vmem>>, vector<176x32xf32>
    %c0_71 = arith.constant 0 : index
    %c32 = arith.constant 32 : index
    %81 = vector.load %arg6[%c0_71, %c32] : memref<176x128xf32, #tpu.memory_space<vmem>>, vector<176x32xf32>
    %82 = arith.maximumf %80, %81 : vector<176x32xf32>
    %c0_72 = arith.constant 0 : index
    %c64 = arith.constant 64 : index
    %83 = vector.load %arg6[%c0_72, %c64] : memref<176x128xf32, #tpu.memory_space<vmem>>, vector<176x32xf32>
    %c0_73 = arith.constant 0 : index
    %c96 = arith.constant 96 : index
    %84 = vector.load %arg6[%c0_73, %c96] : memref<176x128xf32, #tpu.memory_space<vmem>>, vector<176x32xf32>
    %85 = arith.maximumf %83, %84 : vector<176x32xf32>
    %86 = arith.maximumf %82, %85 : vector<176x32xf32>
    %c0_74 = arith.constant 0 : index
    %c0_75 = arith.constant 0 : index
    %87 = vector.load %arg2[%c0_74, %c0_75] : memref<1x32xf32, #tpu.memory_space<vmem>>, vector<1x32xf32>
    %88 = vector.broadcast %87 : vector<1x32xf32> to vector<176x32xf32>
    %89 = arith.addf %86, %88 : vector<176x32xf32>
    %cst_76 = arith.constant 0.000000e+00 : f32
    %90 = vector.broadcast %cst_76 : f32 to vector<176x32xf32>
    %91 = arith.maximumf %89, %90 : vector<176x32xf32>
    %92 = tpu.iota {dimensions = array<i32: 0>} : vector<2x128xi32>
    %93 = tpu.iota {dimensions = array<i32: 1>} : vector<2x128xi32>
    %cst_77 = arith.constant 0.000000e+00 : f32
    %94 = vector.broadcast %cst_77 : f32 to vector<2x128xf32>
    %95 = vector.extract_strided_slice %91 {offsets = [0, 0], sizes = [88, 32], strides = [1, 1]} : vector<176x32xf32> to vector<88x32xf32>
    %c0_78 = arith.constant 0 : index
    %c0_79 = arith.constant 0 : index
    %c0_80 = arith.constant 0 : index
    %96 = vector.load %arg3[%c0_78, %c0_79, %c0_80] : memref<2x88x32xf32, #tpu.memory_space<vmem>>, vector<1x88x32xf32>
    %97 = vector.shape_cast %96 : vector<1x88x32xf32> to vector<88x32xf32>
    %98 = arith.mulf %95, %97 : vector<88x32xf32>
    %cst_81 = arith.constant dense<0.000000e+00> : vector<88xf32>
    %99 = vector.multi_reduction <add>, %98, %cst_81 [1] : vector<88x32xf32> to vector<88xf32>
    %100 = vector.shape_cast %99 : vector<88xf32> to vector<88x1xf32>
    %cst_82 = arith.constant dense<0.000000e+00> : vector<1xf32>
    %101 = vector.multi_reduction <add>, %100, %cst_82 [0] : vector<88x1xf32> to vector<1xf32>
    %102 = vector.shape_cast %101 : vector<1xf32> to vector<1x1xf32>
    %c0_83 = arith.constant 0 : index
    %103 = memref.load %arg4[%c0_83] : memref<2xf32, #tpu.memory_space<smem>>
    %104 = vector.broadcast %103 : f32 to vector<1x1xf32>
    %105 = arith.addf %102, %104 : vector<1x1xf32>
    %c0_i32 = arith.constant 0 : i32
    %106 = vector.broadcast %c0_i32 : i32 to vector<2x128xi32>
    %107 = arith.cmpi eq, %92, %106 : vector<2x128xi32>
    %c0_i32_84 = arith.constant 0 : i32
    %108 = vector.broadcast %c0_i32_84 : i32 to vector<2x128xi32>
    %109 = arith.cmpi eq, %93, %108 : vector<2x128xi32>
    %110 = arith.andi %107, %109 : vector<2x128xi1>
    %111 = vector.shape_cast %105 : vector<1x1xf32> to vector<1x1xf32>
    %112 = vector.broadcast %111 : vector<1x1xf32> to vector<2x128xf32>
    %113 = arith.select %110, %112, %94 : vector<2x128xi1>, vector<2x128xf32>
    %c1_85 = arith.constant 1 : index
    %c0_86 = arith.constant 0 : index
    %c0_87 = arith.constant 0 : index
    %114 = vector.load %arg3[%c1_85, %c0_86, %c0_87] : memref<2x88x32xf32, #tpu.memory_space<vmem>>, vector<1x88x32xf32>
    %115 = vector.shape_cast %114 : vector<1x88x32xf32> to vector<88x32xf32>
    %116 = arith.mulf %95, %115 : vector<88x32xf32>
    %cst_88 = arith.constant dense<0.000000e+00> : vector<88xf32>
    %117 = vector.multi_reduction <add>, %116, %cst_88 [1] : vector<88x32xf32> to vector<88xf32>
    %118 = vector.shape_cast %117 : vector<88xf32> to vector<88x1xf32>
    %cst_89 = arith.constant dense<0.000000e+00> : vector<1xf32>
    %119 = vector.multi_reduction <add>, %118, %cst_89 [0] : vector<88x1xf32> to vector<1xf32>
    %120 = vector.shape_cast %119 : vector<1xf32> to vector<1x1xf32>
    %c1_90 = arith.constant 1 : index
    %121 = memref.load %arg4[%c1_90] : memref<2xf32, #tpu.memory_space<smem>>
    %122 = vector.broadcast %121 : f32 to vector<1x1xf32>
    %123 = arith.addf %120, %122 : vector<1x1xf32>
    %c0_i32_91 = arith.constant 0 : i32
    %124 = vector.broadcast %c0_i32_91 : i32 to vector<2x128xi32>
    %125 = arith.cmpi eq, %92, %124 : vector<2x128xi32>
    %c1_i32 = arith.constant 1 : i32
    %126 = vector.broadcast %c1_i32 : i32 to vector<2x128xi32>
    %127 = arith.cmpi eq, %93, %126 : vector<2x128xi32>
    %128 = arith.andi %125, %127 : vector<2x128xi1>
    %129 = vector.shape_cast %123 : vector<1x1xf32> to vector<1x1xf32>
    %130 = vector.broadcast %129 : vector<1x1xf32> to vector<2x128xf32>
    %131 = arith.select %128, %130, %113 : vector<2x128xi1>, vector<2x128xf32>
    %132 = vector.extract_strided_slice %91 {offsets = [88, 0], sizes = [88, 32], strides = [1, 1]} : vector<176x32xf32> to vector<88x32xf32>
    %c0_92 = arith.constant 0 : index
    %c0_93 = arith.constant 0 : index
    %c0_94 = arith.constant 0 : index
    %133 = vector.load %arg3[%c0_92, %c0_93, %c0_94] : memref<2x88x32xf32, #tpu.memory_space<vmem>>, vector<1x88x32xf32>
    %134 = vector.shape_cast %133 : vector<1x88x32xf32> to vector<88x32xf32>
    %135 = arith.mulf %132, %134 : vector<88x32xf32>
    %cst_95 = arith.constant dense<0.000000e+00> : vector<88xf32>
    %136 = vector.multi_reduction <add>, %135, %cst_95 [1] : vector<88x32xf32> to vector<88xf32>
    %137 = vector.shape_cast %136 : vector<88xf32> to vector<88x1xf32>
    %cst_96 = arith.constant dense<0.000000e+00> : vector<1xf32>
    %138 = vector.multi_reduction <add>, %137, %cst_96 [0] : vector<88x1xf32> to vector<1xf32>
    %139 = vector.shape_cast %138 : vector<1xf32> to vector<1x1xf32>
    %c0_97 = arith.constant 0 : index
    %140 = memref.load %arg4[%c0_97] : memref<2xf32, #tpu.memory_space<smem>>
    %141 = vector.broadcast %140 : f32 to vector<1x1xf32>
    %142 = arith.addf %139, %141 : vector<1x1xf32>
    %c1_i32_98 = arith.constant 1 : i32
    %143 = vector.broadcast %c1_i32_98 : i32 to vector<2x128xi32>
    %144 = arith.cmpi eq, %92, %143 : vector<2x128xi32>
    %c0_i32_99 = arith.constant 0 : i32
    %145 = vector.broadcast %c0_i32_99 : i32 to vector<2x128xi32>
    %146 = arith.cmpi eq, %93, %145 : vector<2x128xi32>
    %147 = arith.andi %144, %146 : vector<2x128xi1>
    %148 = vector.shape_cast %142 : vector<1x1xf32> to vector<1x1xf32>
    %149 = vector.broadcast %148 : vector<1x1xf32> to vector<2x128xf32>
    %150 = arith.select %147, %149, %131 : vector<2x128xi1>, vector<2x128xf32>
    %c1_100 = arith.constant 1 : index
    %c0_101 = arith.constant 0 : index
    %c0_102 = arith.constant 0 : index
    %151 = vector.load %arg3[%c1_100, %c0_101, %c0_102] : memref<2x88x32xf32, #tpu.memory_space<vmem>>, vector<1x88x32xf32>
    %152 = vector.shape_cast %151 : vector<1x88x32xf32> to vector<88x32xf32>
    %153 = arith.mulf %132, %152 : vector<88x32xf32>
    %cst_103 = arith.constant dense<0.000000e+00> : vector<88xf32>
    %154 = vector.multi_reduction <add>, %153, %cst_103 [1] : vector<88x32xf32> to vector<88xf32>
    %155 = vector.shape_cast %154 : vector<88xf32> to vector<88x1xf32>
    %cst_104 = arith.constant dense<0.000000e+00> : vector<1xf32>
    %156 = vector.multi_reduction <add>, %155, %cst_104 [0] : vector<88x1xf32> to vector<1xf32>
    %157 = vector.shape_cast %156 : vector<1xf32> to vector<1x1xf32>
    %c1_105 = arith.constant 1 : index
    %158 = memref.load %arg4[%c1_105] : memref<2xf32, #tpu.memory_space<smem>>
    %159 = vector.broadcast %158 : f32 to vector<1x1xf32>
    %160 = arith.addf %157, %159 : vector<1x1xf32>
    %c1_i32_106 = arith.constant 1 : i32
    %161 = vector.broadcast %c1_i32_106 : i32 to vector<2x128xi32>
    %162 = arith.cmpi eq, %92, %161 : vector<2x128xi32>
    %c1_i32_107 = arith.constant 1 : i32
    %163 = vector.broadcast %c1_i32_107 : i32 to vector<2x128xi32>
    %164 = arith.cmpi eq, %93, %163 : vector<2x128xi32>
    %165 = arith.andi %162, %164 : vector<2x128xi1>
    %166 = vector.shape_cast %160 : vector<1x1xf32> to vector<1x1xf32>
    %167 = vector.broadcast %166 : vector<1x1xf32> to vector<2x128xf32>
    %168 = arith.select %165, %167, %150 : vector<2x128xi1>, vector<2x128xf32>
    %c0_108 = arith.constant 0 : index
    %c0_109 = arith.constant 0 : index
    %169 = vector.load %arg5[%c0_108, %c0_109] : memref<2x128xf32, #tpu.memory_space<vmem>>, vector<2x128xf32>
    tpu.vector_store %arg5[%c0_108, %c0_109], %168 {strides = array<i32>} : memref<2x128xf32, #tpu.memory_space<vmem>>, vector<2x128xf32>,
    return
  }
}

</mosaic_0001>

<llo_original>
// kernel: simple_convnet_forward.1
$region0: #{simple_convnet_forward.1}
  #allocation0 [shape = 'u32[]', space=smem, size = 0x4, offset = 0x4, fixed_abs, tag = 'smem constant byte address 0x4 - core index']
  #allocation1 [shape = 'u32[144,128]{1,0:T(1,128)}', space=vmem, size = 0x12000, scoped, tag = 'internal scratch']
  #allocation2 [shape = 'f32[176,128]{1,0:T(8,128)}', space=vmem, size = 0x16000, scoped, tag = 'scratch operand']
  %s0 = inlined_call_operand.vmem [shape: f32[720,8], index: 0, kind: input, shape index: {}]
  %s1 = inlined_call_operand.vmem [shape: f32[16,8,128], index: 1, kind: input, shape index: {}]
  %s2 = inlined_call_operand.vmem [shape: f32[1,32], index: 2, kind: input, shape index: {}]
  %s3 = inlined_call_operand.vmem [shape: f32[2,88,32], index: 3, kind: input, shape index: {}]
  %s4 = inlined_call_operand.vmem [shape: f32[2], index: 4, kind: input, shape index: {}]
  %s5 = inlined_call_operand.hbm [shape: f32[2,128], index: 5, kind: output, shape index: {}]
  %s6 = sld [smem:[#allocation0]]
  $region34: #{simple_convnet_forward.1} parent=0
    _
  %s8 = ssub.s32 1, %s6
  %s9 = scalar_select 0, %s8, %s6
  $region1: #{simple_convnet_forward.1} parent=0
    #allocation3 [shape = 'u8[512]{0}', space=smem, size = 0x200, scoped, tag = 'input window, operand 4, single buffered']
    #allocation4 [shape = 's32[1]{0}', space=sflag, size = 0x4, scoped, tag = 'scoped memory for simple_convnet_forward.1']
    #allocation5 [shape = 's32[1]{0}', space=sflag, size = 0x4, scoped, tag = 'scoped memory for simple_convnet_forward.1']
    #allocation6 [shape = 'u8[1024]{0}', space=vmem, size = 0x400, scoped, tag = 'output window, operand 0, single buffered']
    %10 = vsyncpa [#allocation5], 0
    %11 = vsyncpa [#allocation4], 0
    // Predicated region
    $region2: #{simple_convnet_forward.1} parent=1 // pred_check
      _
    $region3: #{simple_convnet_forward.1} parent=1 // pred_check_branch
      %13 = sbr.rel (0) target = $region5
    $region4: #{simple_convnet_forward.1} parent=1 // pred_region
      _
    $region5: #{simple_convnet_forward.1} parent=1 // pred_fallthru
      _
    // Predicated region
    $region6: #{simple_convnet_forward.1} parent=1 // pred_check
      _
    $region7: #{simple_convnet_forward.1} parent=1 // pred_check_branch
      %15 = sbr.rel (0) target = $region9
    $region8: #{simple_convnet_forward.1} parent=1 // pred_region
      _
    $region9: #{simple_convnet_forward.1} parent=1 // pred_fallthru
      _
    // Predicated region
    $region10: #{simple_convnet_forward.1} parent=1 // pred_check
      _
    $region11: #{simple_convnet_forward.1} parent=1 // pred_check_branch
      %17 = sbr.rel (0) target = $region13
    $region12: #{simple_convnet_forward.1} parent=1 // pred_region
      _
    $region13: #{simple_convnet_forward.1} parent=1 // pred_fallthru
      _
    // Predicated region
    $region14: #{simple_convnet_forward.1} parent=1 // pred_check
      _
    $region15: #{simple_convnet_forward.1} parent=1 // pred_check_branch
      %19 = sbr.rel (0) target = $region17
    $region16: #{simple_convnet_forward.1} parent=1 // pred_region
      _
    $region17: #{simple_convnet_forward.1} parent=1 // pred_fallthru
      _
    // Predicated region
    $region18: #{simple_convnet_forward.1} parent=1 // pred_check
      _
    $region19: #{simple_convnet_forward.1} parent=1 // pred_check_branch
      %21 = sbr.rel (0) target = $region21
    $region20: #{simple_convnet_forward.1} parent=1 // pred_region
      %s23 = ssub.s32 16, 16
      %24 = vsyncadd [#allocation5], %s23
      %s26 = sshll.u32 %s4, 4
      %s27 = int_to_ptr.vmem [resolvable:$true] %s26
      %29 = dma.vmem_to_smem %s27, 16, [#allocation3], [#allocation5]
    $region21: #{simple_convnet_forward.1} parent=1 // pred_fallthru
      _
    // Predicated region
    $region22: #{simple_convnet_forward.1} parent=1 // pred_check
      _
    $region23: #{simple_convnet_forward.1} parent=1 // pred_check_branch
      %31 = sbr.rel (0) target = $region25
    $region24: #{simple_convnet_forward.1} parent=1 // pred_region
      %32 = dma.done [#allocation5], 16
    $region25: #{simple_convnet_forward.1} parent=1 // pred_fallthru
      _
    %33 = sfence
    %v34 = vld [vmem:[%s0] sm:$0xff]
    %v35 = vld [vmem:[%s0 + $0x8] sm:$0xff]
    %v36 = vld [vmem:[%s0 + $0x10] sm:$0xff]
    %v37 = vld [vmem:[%s0 + $0x18] sm:$0xff]
    %v38 = vld [vmem:[%s0 + $0x20] sm:$0xff]
    %v39 = vld [vmem:[%s0 + $0x28] sm:$0xff]
    %v40 = vld [vmem:[%s0 + $0x30] sm:$0xff]
    %v41 = vld [vmem:[%s0 + $0x38] sm:$0xff]
    %v42 = vld [vmem:[%s0 + $0x40] sm:$0xff]
    %v43 = vld [vmem:[%s0 + $0x48] sm:$0xff]
    %v44 = vld [vmem:[%s0 + $0x50] sm:$0xff]
    %v45 = vld [vmem:[%s0 + $0x58] sm:$0xff]
    %v46 = vld [vmem:[%s0 + $0x60] sm:$0xff]
    %v47 = vld [vmem:[%s0 + $0x68] sm:$0xff]
    %v48 = vld [vmem:[%s0 + $0x70] sm:$0xff]
    %v49 = vld [vmem:[%s0 + $0x78] sm:$0xff]
    %v50 = vld [vmem:[%s0 + $0x80] sm:$0xff]
    %v51 = vld [vmem:[%s0 + $0x88] sm:$0xff]
    %v52 = vld [vmem:[%s0 + $0x90] sm:$0xff]
    %v53 = vld [vmem:[%s0 + $0x98] sm:$0xff]
    %v54 = vld [vmem:[%s0 + $0xa0] sm:$0xff]
    %v55 = vld [vmem:[%s0 + $0xa8] sm:$0xff]
    %v56 = vld [vmem:[%s1] sm:$0xff]
    %v57 = vld [vmem:[%s0 + $0x1] sm:$0xff]
    %v58 = vld [vmem:[%s0 + $0x9] sm:$0xff]
    %v59 = vld [vmem:[%s0 + $0x11] sm:$0xff]
    %v60 = vld [vmem:[%s0 + $0x19] sm:$0xff]
    %v61 = vld [vmem:[%s0 + $0x21] sm:$0xff]
    %v62 = vld [vmem:[%s0 + $0x29] sm:$0xff]
    %v63 = vld [vmem:[%s0 + $0x31] sm:$0xff]
    %v64 = vld [vmem:[%s0 + $0x39] sm:$0xff]
    %v65 = vld [vmem:[%s0 + $0x41] sm:$0xff]
    %v66 = vld [vmem:[%s0 + $0x49] sm:$0xff]
    %v67 = vld [vmem:[%s0 + $0x51] sm:$0xff]
    %v68 = vld [vmem:[%s0 + $0x59] sm:$0xff]
    %v69 = vld [vmem:[%s0 + $0x61] sm:$0xff]
    %v70 = vld [vmem:[%s0 + $0x69] sm:$0xff]
    %v71 = vld [vmem:[%s0 + $0x71] sm:$0xff]
    %v72 = vld [vmem:[%s0 + $0x79] sm:$0xff]
    %v73 = vld [vmem:[%s0 + $0x81] sm:$0xff]
    %v74 = vld [vmem:[%s0 + $0x89] sm:$0xff]
    %v75 = vld [vmem:[%s0 + $0x91] sm:$0xff]
    %v76 = vld [vmem:[%s0 + $0x99] sm:$0xff]
    %v77 = vld [vmem:[%s0 + $0xa1] sm:$0xff]
    %v78 = vld [vmem:[%s0 + $0xa9] sm:$0xff]
    %s79 = scalar_lea.vmem %s1, 8
    %v80 = vld [vmem:[%s79] sm:$0xff]
    %vm81 = vcmask 64512
    %v83 = vsel %vm81, %v57, 0
    %v86 = vsel %vm81, %v58, 0
    %v89 = vsel %vm81, %v59, 0
    %v92 = vsel %vm81, %v60, 0
    %v95 = vsel %vm81, %v61, 0
    %v98 = vsel %vm81, %v62, 0
    %v101 = vsel %vm81, %v63, 0
    %v104 = vsel %vm81, %v64, 0
    %v107 = vsel %vm81, %v65, 0
    %v110 = vsel %vm81, %v66, 0
    %v113 = vsel %vm81, %v67, 0
    %v116 = vsel %vm81, %v68, 0
    %v119 = vsel %vm81, %v69, 0
    %v122 = vsel %vm81, %v70, 0
    %v125 = vsel %vm81, %v71, 0
    %v128 = vsel %vm81, %v72, 0
    %v131 = vsel %vm81, %v73, 0
    %v134 = vsel %vm81, %v74, 0
    %v137 = vsel %vm81, %v75, 0
    %v140 = vsel %vm81, %v76, 0
    %v143 = vsel %vm81, %v77, 0
    %v146 = vsel %vm81, %v78, 0
    %148 = vmatprep.subr.mxu0 0.0
    %149 = vmatpush1.msra.mxu0 %v80
    %150 = vmatprep.subr.mxu0 0.0
    %151 = vmatpush1.msra.mxu0 0.0
    %152 = vmatprep.subr.mxu0 0.0
    %153 = vmatpush1.msra.mxu0 0.0
    %154 = vmatprep.subr.mxu0 0.0
    %155 = vmatpush1.msra.mxu0 0.0
    %156 = vmatprep.subr.mxu0 0.0
    %157 = vmatpush1.msra.mxu0 0.0
    %158 = vmatprep.subr.mxu0 0.0
    %159 = vmatpush1.msra.mxu0 0.0
    %160 = vmatprep.subr.mxu0 0.0
    %161 = vmatpush1.msra.mxu0 0.0
    %162 = vmatprep.subr.mxu0 0.0
    %163 = vmatpush1.msra.mxu0 0.0
    %164 = vmatprep.subr.mxu0 0.0
    %165 = vmatpush1.msra.mxu0 0.0
    %166 = vmatprep.subr.mxu0 0.0
    %167 = vmatpush1.msra.mxu0 0.0
    %168 = vmatprep.subr.mxu0 0.0
    %169 = vmatpush1.msra.mxu0 0.0
    %170 = vmatprep.subr.mxu0 0.0
    %171 = vmatpush1.msra.mxu0 0.0
    %172 = vmatprep.subr.mxu0 0.0
    %173 = vmatpush1.msra.mxu0 0.0
    %174 = vmatprep.subr.mxu0 0.0
    %175 = vmatpush1.msra.mxu0 0.0
    %176 = vmatprep.subr.mxu0 0.0
    %177 = vmatpush1.msra.mxu0 0.0
    %178 = vmatprep.subr.mxu0 0.0
    %179 = vmatpush1.msra.mxu0 0.0
    %180 = vmatprep.subr.mxu0 0.0
    %181 = vmatpush1.msra.mxu0 0.0
    %182 = vmatprep.subr.mxu0 0.0
    %183 = vmatpush1.msra.mxu0 0.0
    %184 = vmatprep.subr.mxu0 0.0
    %185 = vmatpush1.msra.mxu0 0.0
    %186 = vmatprep.subr.mxu0 0.0
    %187 = vmatpush1.msra.mxu0 0.0
    %188 = vmatprep.subr.mxu0 0.0
    %189 = vmatpush1.msra.mxu0 0.0
    %190 = vmatprep.subr.mxu0 0.0
    %191 = vmatpush1.msra.mxu0 0.0
    %192 = vmatprep.subr.mxu0 0.0
    %193 = vmatpush1.msra.mxu0 0.0
    %194 = vmatprep.subr.mxu0 0.0
    %195 = vmatpush1.msra.mxu0 0.0
    %196 = vmatprep.subr.mxu0 0.0
    %197 = vmatpush1.msra.mxu0 0.0
    %198 = vmatprep.subr.mxu0 0.0
    %199 = vmatpush1.msra.mxu0 0.0
    %200 = vmatprep.subr.mxu0 0.0
    %201 = vmatpush1.msra.mxu0 0.0
    %202 = vmatprep.subr.mxu0 0.0
    %203 = vmatpush1.msra.mxu0 0.0
    %204 = vmatprep.subr.mxu0 0.0
    %205 = vmatpush1.msra.mxu0 0.0
    %206 = vmatprep.subr.mxu0 0.0
    %207 = vmatpush1.msra.mxu0 0.0
    %208 = vmatprep.subr.mxu0 0.0
    %209 = vmatpush1.msra.mxu0 0.0
    %210 = vmatprep.subr.mxu0 0.0
    %211 = vmatpush1.msra.mxu0 0.0
    %212 = vmatprep.mubr.f32.mxu0 0.0
    %213 = vmatmul.mubr.f32.gmra.mrb[0].mxu0 %v83
    %v214 = vpop.f32.mrb[0].mxu0
    %v215 = vadd.f32 0.0, %v214
    %v216 = vpop.f32.mrb[0].mxu0
    %217 = vmatprep.mubr.f32.mxu0 0.0
    %218 = vmatmul.mubr.f32.gmra.mrb[0].mxu0 %v86
    %v219 = vpop.f32.mrb[0].mxu0
    %v220 = vadd.f32 0.0, %v219
    %v221 = vpop.f32.mrb[0].mxu0
    %222 = vmatprep.mubr.f32.mxu0 0.0
    %223 = vmatmul.mubr.f32.gmra.mrb[0].mxu0 %v89
    %v224 = vpop.f32.mrb[0].mxu0
    %v225 = vadd.f32 0.0, %v224
    %v226 = vpop.f32.mrb[0].mxu0
    %227 = vmatprep.mubr.f32.mxu0 0.0
    %228 = vmatmul.mubr.f32.gmra.mrb[0].mxu0 %v92
    %v229 = vpop.f32.mrb[0].mxu0
    %v230 = vadd.f32 0.0, %v229
    %v231 = vpop.f32.mrb[0].mxu0
    %232 = vmatprep.mubr.f32.mxu0 0.0
    %233 = vmatmul.mubr.f32.gmra.mrb[0].mxu0 %v95
    %v234 = vpop.f32.mrb[0].mxu0
    %v235 = vadd.f32 0.0, %v234
    %v236 = vpop.f32.mrb[0].mxu0
    %237 = vmatprep.mubr.f32.mxu0 0.0
    %238 = vmatmul.mubr.f32.gmra.mrb[0].mxu0 %v98
    %v239 = vpop.f32.mrb[0].mxu0
    %v240 = vadd.f32 0.0, %v239
    %v241 = vpop.f32.mrb[0].mxu0
    %242 = vmatprep.mubr.f32.mxu0 0.0
    %243 = vmatmul.mubr.f32.gmra.mrb[0].mxu0 %v101
    %v244 = vpop.f32.mrb[0].mxu0
    %v245 = vadd.f32 0.0, %v244
    %v246 = vpop.f32.mrb[0].mxu0
    %247 = vmatprep.mubr.f32.mxu0 0.0
    %248 = vmatmul.mubr.f32.gmra.mrb[0].mxu0 %v104
    %v249 = vpop.f32.mrb[0].mxu0
    %v250 = vadd.f32 0.0, %v249
    %v251 = vpop.f32.mrb[0].mxu0
    %252 = vmatprep.mubr.f32.mxu0 0.0
    %253 = vmatmul.mubr.f32.gmra.mrb[0].mxu0 %v107
    %v254 = vpop.f32.mrb[0].mxu0
    %v255 = vadd.f32 0.0, %v254
    %v256 = vpop.f32.mrb[0].mxu0
    %257 = vmatprep.mubr.f32.mxu0 0.0
    %258 = vmatmul.mubr.f32.gmra.mrb[0].mxu0 %v110
    %v259 = vpop.f32.mrb[0].mxu0
    %v260 = vadd.f32 0.0, %v259
    %v261 = vpop.f32.mrb[0].mxu0
    %262 = vmatprep.mubr.f32.mxu0 0.0
    %263 = vmatmul.mubr.f32.gmra.mrb[0].mxu0 %v113
    %v264 = vpop.f32.mrb[0].mxu0
    %v265 = vadd.f32 0.0, %v264
    %v266 = vpop.f32.mrb[0].mxu0
    %267 = vmatprep.mubr.f32.mxu0 0.0
    %268 = vmatmul.mubr.f32.gmra.mrb[0].mxu0 %v116
    %v269 = vpop.f32.mrb[0].mxu0
    %v270 = vadd.f32 0.0, %v269
    %v271 = vpop.f32.mrb[0].mxu0
    %272 = vmatprep.mubr.f32.mxu0 0.0
    %273 = vmatmul.mubr.f32.gmra.mrb[0].mxu0 %v119
    %v274 = vpop.f32.mrb[0].mxu0
    %v275 = vadd.f32 0.0, %v274
    %v276 = vpop.f32.mrb[0].mxu0
    %277 = vmatprep.mubr.f32.mxu0 0.0
    %278 = vmatmul.mubr.f32.gmra.mrb[0].mxu0 %v122
    %v279 = vpop.f32.mrb[0].mxu0
    %v280 = vadd.f32 0.0, %v279
    %v281 = vpop.f32.mrb[0].mxu0
    %282 = vmatprep.mubr.f32.mxu0 0.0
    %283 = vmatmul.mubr.f32.gmra.mrb[0].mxu0 %v125
    %v284 = vpop.f32.mrb[0].mxu0
    %v285 = vadd.f32 0.0, %v284
    %v286 = vpop.f32.mrb[0].mxu0
    %287 = vmatprep.mubr.f32.mxu0 0.0
    %288 = vmatmul.mubr.f32.gmra.mrb[0].mxu0 %v128
    %v289 = vpop.f32.mrb[0].mxu0
    %v290 = vadd.f32 0.0, %v289
    %v291 = vpop.f32.mrb[0].mxu0
    %292 = vmatprep.mubr.f32.mxu0 0.0
    %293 = vmatmul.mubr.f32.gmra.mrb[0].mxu0 %v131
    %v294 = vpop.f32.mrb[0].mxu0
    %v295 = vadd.f32 0.0, %v294
    %v296 = vpop.f32.mrb[0].mxu0
    %297 = vmatprep.mubr.f32.mxu0 0.0
    %298 = vmatmul.mubr.f32.gmra.mrb[0].mxu0 %v134
    %v299 = vpop.f32.mrb[0].mxu0
    %v300 = vadd.f32 0.0, %v299
    %v301 = vpop.f32.mrb[0].mxu0
    %302 = vmatprep.mubr.f32.mxu0 0.0
    %303 = vmatmul.mubr.f32.gmra.mrb[0].mxu0 %v137
    %v304 = vpop.f32.mrb[0].mxu0
    %v305 = vadd.f32 0.0, %v304
    %v306 = vpop.f32.mrb[0].mxu0
    %307 = vmatprep.mubr.f32.mxu0 0.0
    %308 = vmatmul.mubr.f32.gmra.mrb[0].mxu0 %v140
    %v309 = vpop.f32.mrb[0].mxu0
    %v310 = vadd.f32 0.0, %v309
    %v311 = vpop.f32.mrb[0].mxu0
    %312 = vmatprep.mubr.f32.mxu0 0.0
    %313 = vmatmul.mubr.f32.gmra.mrb[0].mxu0 %v143
    %v314 = vpop.f32.mrb[0].mxu0
    %v315 = vadd.f32 0.0, %v314
    %v316 = vpop.f32.mrb[0].mxu0
    %317 = vmatprep.mubr.f32.mxu0 0.0
    %318 = vmatmul.mubr.f32.gmra.mrb[0].mxu0 %v146
    %v319 = vpop.f32.mrb[0].mxu0
    %v320 = vadd.f32 0.0, %v319
    %v321 = vpop.f32.mrb[0].mxu0
    %322 = vdwg.mxu0
    %v324 = vsel %vm81, %v34, 0
    %v327 = vsel %vm81, %v35, 0
    %v330 = vsel %vm81, %v36, 0
    %v333 = vsel %vm81, %v37, 0
    %v336 = vsel %vm81, %v38, 0
    %v339 = vsel %vm81, %v39, 0
    %v342 = vsel %vm81, %v40, 0
    %v345 = vsel %vm81, %v41, 0
    %v348 = vsel %vm81, %v42, 0
    %v351 = vsel %vm81, %v43, 0
    %v354 = vsel %vm81, %v44, 0
    %v357 = vsel %vm81, %v45, 0
    %v360 = vsel %vm81, %v46, 0
    %v363 = vsel %vm81, %v47, 0
    %v366 = vsel %vm81, %v48, 0
    %v369 = vsel %vm81, %v49, 0
    %v372 = vsel %vm81, %v50, 0
    %v375 = vsel %vm81, %v51, 0
    %v378 = vsel %vm81, %v52, 0
    %v381 = vsel %vm81, %v53, 0
    %v384 = vsel %vm81, %v54, 0
    %v387 = vsel %vm81, %v55, 0
    %389 = vmatprep.subr.mxu0 0.0
    %390 = vmatpush1.msra.mxu0 %v56
    %391 = vmatprep.subr.mxu0 0.0
    %392 = vmatpush1.msra.mxu0 0.0
    %393 = vmatprep.subr.mxu0 0.0
    %394 = vmatpush1.msra.mxu0 0.0
    %395 = vmatprep.subr.mxu0 0.0
    %396 = vmatpush1.msra.mxu0 0.0
    %397 = vmatprep.subr.mxu0 0.0
    %398 = vmatpush1.msra.mxu0 0.0
    %399 = vmatprep.subr.mxu0 0.0
    %400 = vmatpush1.msra.mxu0 0.0
    %401 = vmatprep.subr.mxu0 0.0
    %402 = vmatpush1.msra.mxu0 0.0
    %403 = vmatprep.subr.mxu0 0.0
    %404 = vmatpush1.msra.mxu0 0.0
    %405 = vmatprep.subr.mxu0 0.0
    %406 = vmatpush1.msra.mxu0 0.0
    %407 = vmatprep.subr.mxu0 0.0
    %408 = vmatpush1.msra.mxu0 0.0
    %409 = vmatprep.subr.mxu0 0.0
    %410 = vmatpush1.msra.mxu0 0.0
    %411 = vmatprep.subr.mxu0 0.0
    %412 = vmatpush1.msra.mxu0 0.0
    %413 = vmatprep.subr.mxu0 0.0
    %414 = vmatpush1.msra.mxu0 0.0
    %415 = vmatprep.subr.mxu0 0.0
    %416 = vmatpush1.msra.mxu0 0.0
    %417 = vmatprep.subr.mxu0 0.0
    %418 = vmatpush1.msra.mxu0 0.0
    %419 = vmatprep.subr.mxu0 0.0
    %420 = vmatpush1.msra.mxu0 0.0
    %421 = vmatprep.subr.mxu0 0.0
    %422 = vmatpush1.msra.mxu0 0.0
    %423 = vmatprep.subr.mxu0 0.0
    %424 = vmatpush1.msra.mxu0 0.0
    %425 = vmatprep.subr.mxu0 0.0
    %426 = vmatpush1.msra.mxu0 0.0
    %427 = vmatprep.subr.mxu0 0.0
    %428 = vmatpush1.msra.mxu0 0.0
    %429 = vmatprep.subr.mxu0 0.0
    %430 = vmatpush1.msra.mxu0 0.0
    %431 = vmatprep.subr.mxu0 0.0
    %432 = vmatpush1.msra.mxu0 0.0
    %433 = vmatprep.subr.mxu0 0.0
    %434 = vmatpush1.msra.mxu0 0.0
    %435 = vmatprep.subr.mxu0 0.0
    %436 = vmatpush1.msra.mxu0 0.0
    %437 = vmatprep.subr.mxu0 0.0
    %438 = vmatpush1.msra.mxu0 0.0
    %439 = vmatprep.subr.mxu0 0.0
    %440 = vmatpush1.msra.mxu0 0.0
    %441 = vmatprep.subr.mxu0 0.0
    %442 = vmatpush1.msra.mxu0 0.0
    %443 = vmatprep.subr.mxu0 0.0
    %444 = vmatpush1.msra.mxu0 0.0
    %445 = vmatprep.subr.mxu0 0.0
    %446 = vmatpush1.msra.mxu0 0.0
    %447 = vmatprep.subr.mxu0 0.0
    %448 = vmatpush1.msra.mxu0 0.0
    %449 = vmatprep.subr.mxu0 0.0
    %450 = vmatpush1.msra.mxu0 0.0
    %451 = vmatprep.subr.mxu0 0.0
    %452 = vmatpush1.msra.mxu0 0.0
    %453 = vmatprep.mubr.f32.mxu0 0.0
    %454 = vmatmul.mubr.f32.gmra.mrb[0].mxu0 %v324
    %v455 = vpop.f32.mrb[0].mxu0
    %v456 = vadd.f32 %v215, %v455
    %v457 = vpop.f32.mrb[0].mxu0
    %458 = vmatprep.mubr.f32.mxu0 0.0
    %459 = vmatmul.mubr.f32.gmra.mrb[0].mxu0 %v327
    %v460 = vpop.f32.mrb[0].mxu0
    %v461 = vadd.f32 %v220, %v460
    %v462 = vpop.f32.mrb[0].mxu0
    %463 = vmatprep.mubr.f32.mxu0 0.0
    %464 = vmatmul.mubr.f32.gmra.mrb[0].mxu0 %v330
    %v465 = vpop.f32.mrb[0].mxu0
    %v466 = vadd.f32 %v225, %v465
    %v467 = vpop.f32.mrb[0].mxu0
    %468 = vmatprep.mubr.f32.mxu0 0.0
    %469 = vmatmul.mubr.f32.gmra.mrb[0].mxu0 %v333
    %v470 = vpop.f32.mrb[0].mxu0
    %v471 = vadd.f32 %v230, %v470
    %v472 = vpop.f32.mrb[0].mxu0
    %473 = vmatprep.mubr.f32.mxu0 0.0
    %474 = vmatmul.mubr.f32.gmra.mrb[0].mxu0 %v336
    %v475 = vpop.f32.mrb[0].mxu0
    %v476 = vadd.f32 %v235, %v475
    %v477 = vpop.f32.mrb[0].mxu0
    %478 = vmatprep.mubr.f32.mxu0 0.0
    %479 = vmatmul.mubr.f32.gmra.mrb[0].mxu0 %v339
    %v480 = vpop.f32.mrb[0].mxu0
    %v481 = vadd.f32 %v240, %v480
    %v482 = vpop.f32.mrb[0].mxu0
    %483 = vmatprep.mubr.f32.mxu0 0.0
    %484 = vmatmul.mubr.f32.gmra.mrb[0].mxu0 %v342
    %v485 = vpop.f32.mrb[0].mxu0
    %v486 = vadd.f32 %v245, %v485
    %v487 = vpop.f32.mrb[0].mxu0
    %488 = vmatprep.mubr.f32.mxu0 0.0
    %489 = vmatmul.mubr.f32.gmra.mrb[0].mxu0 %v345
    %v490 = vpop.f32.mrb[0].mxu0
    %v491 = vadd.f32 %v250, %v490
    %v492 = vpop.f32.mrb[0].mxu0
    %493 = vmatprep.mubr.f32.mxu0 0.0
    %494 = vmatmul.mubr.f32.gmra.mrb[0].mxu0 %v348
    %v495 = vpop.f32.mrb[0].mxu0
    %v496 = vadd.f32 %v255, %v495
    %v497 = vpop.f32.mrb[0].mxu0
    %498 = vmatprep.mubr.f32.mxu0 0.0
    %499 = vmatmul.mubr.f32.gmra.mrb[0].mxu0 %v351
    %v500 = vpop.f32.mrb[0].mxu0
    %v501 = vadd.f32 %v260, %v500
    %v502 = vpop.f32.mrb[0].mxu0
    %503 = vmatprep.mubr.f32.mxu0 0.0
    %504 = vmatmul.mubr.f32.gmra.mrb[0].mxu0 %v354
    %v505 = vpop.f32.mrb[0].mxu0
    %v506 = vadd.f32 %v265, %v505
    %v507 = vpop.f32.mrb[0].mxu0
    %508 = vmatprep.mubr.f32.mxu0 0.0
    %509 = vmatmul.mubr.f32.gmra.mrb[0].mxu0 %v357
    %v510 = vpop.f32.mrb[0].mxu0
    %v511 = vadd.f32 %v270, %v510
    %v512 = vpop.f32.mrb[0].mxu0
    %513 = vmatprep.mubr.f32.mxu0 0.0
    %514 = vmatmul.mubr.f32.gmra.mrb[0].mxu0 %v360
    %v515 = vpop.f32.mrb[0].mxu0
    %v516 = vadd.f32 %v275, %v515
    %v517 = vpop.f32.mrb[0].mxu0
    %518 = vmatprep.mubr.f32.mxu0 0.0
    %519 = vmatmul.mubr.f32.gmra.mrb[0].mxu0 %v363
    %v520 = vpop.f32.mrb[0].mxu0
    %v521 = vadd.f32 %v280, %v520
    %v522 = vpop.f32.mrb[0].mxu0
    %523 = vmatprep.mubr.f32.mxu0 0.0
    %524 = vmatmul.mubr.f32.gmra.mrb[0].mxu0 %v366
    %v525 = vpop.f32.mrb[0].mxu0
    %v526 = vadd.f32 %v285, %v525
    %v527 = vpop.f32.mrb[0].mxu0
    %528 = vmatprep.mubr.f32.mxu0 0.0
    %529 = vmatmul.mubr.f32.gmra.mrb[0].mxu0 %v369
    %v530 = vpop.f32.mrb[0].mxu0
    %v531 = vadd.f32 %v290, %v530
    %v532 = vpop.f32.mrb[0].mxu0
    %533 = vmatprep.mubr.f32.mxu0 0.0
    %534 = vmatmul.mubr.f32.gmra.mrb[0].mxu0 %v372
    %v535 = vpop.f32.mrb[0].mxu0
    %v536 = vadd.f32 %v295, %v535
    %v537 = vpop.f32.mrb[0].mxu0
    %538 = vmatprep.mubr.f32.mxu0 0.0
    %539 = vmatmul.mubr.f32.gmra.mrb[0].mxu0 %v375
    %v540 = vpop.f32.mrb[0].mxu0
    %v541 = vadd.f32 %v300, %v540
    %v542 = vpop.f32.mrb[0].mxu0
    %543 = vmatprep.mubr.f32.mxu0 0.0
    %544 = vmatmul.mubr.f32.gmra.mrb[0].mxu0 %v378
    %v545 = vpop.f32.mrb[0].mxu0
    %v546 = vadd.f32 %v305, %v545
    %v547 = vpop.f32.mrb[0].mxu0
    %548 = vmatprep.mubr.f32.mxu0 0.0
    %549 = vmatmul.mubr.f32.gmra.mrb[0].mxu0 %v381
    %v550 = vpop.f32.mrb[0].mxu0
    %v551 = vadd.f32 %v310, %v550
    %v552 = vpop.f32.mrb[0].mxu0
    %553 = vmatprep.mubr.f32.mxu0 0.0
    %554 = vmatmul.mubr.f32.gmra.mrb[0].mxu0 %v384
    %v555 = vpop.f32.mrb[0].mxu0
    %v556 = vadd.f32 %v315, %v555
    %v557 = vpop.f32.mrb[0].mxu0
    %558 = vmatprep.mubr.f32.mxu0 0.0
    %559 = vmatmul.mubr.f32.gmra.mrb[0].mxu0 %v387
    %v560 = vpop.f32.mrb[0].mxu0
    %v561 = vadd.f32 %v320, %v560
    %v562 = vpop.f32.mrb[0].mxu0
    %563 = vdwg.mxu0
    %v564 = vld [vmem:[%s0 + $0x9] sm:$0xff]
    %v565 = vld [vmem:[%s0 + $0x11] sm:$0xff]
    %v566 = vld [vmem:[%s0 + $0x19] sm:$0xff]
    %v567 = vld [vmem:[%s0 + $0x21] sm:$0xff]
    %v568 = vld [vmem:[%s0 + $0x29] sm:$0xff]
    %v569 = vld [vmem:[%s0 + $0x31] sm:$0xff]
    %v570 = vld [vmem:[%s0 + $0x39] sm:$0xff]
    %v571 = vld [vmem:[%s0 + $0x41] sm:$0xff]
    %v572 = vld [vmem:[%s0 + $0x49] sm:$0xff]
    %v573 = vld [vmem:[%s0 + $0x51] sm:$0xff]
    %v574 = vld [vmem:[%s0 + $0x59] sm:$0xff]
    %v575 = vld [vmem:[%s0 + $0x61] sm:$0xff]
    %v576 = vld [vmem:[%s0 + $0x69] sm:$0xff]
    %v577 = vld [vmem:[%s0 + $0x71] sm:$0xff]
    %v578 = vld [vmem:[%s0 + $0x79] sm:$0xff]
    %v579 = vld [vmem:[%s0 + $0x81] sm:$0xff]
    %v580 = vld [vmem:[%s0 + $0x89] sm:$0xff]
    %v581 = vld [vmem:[%s0 + $0x91] sm:$0xff]
    %v582 = vld [vmem:[%s0 + $0x99] sm:$0xff]
    %v583 = vld [vmem:[%s0 + $0xa1] sm:$0xff]
    %v584 = vld [vmem:[%s0 + $0xa9] sm:$0xff]
    %v585 = vld [vmem:[%s0 + $0xb1] sm:$0xff]
    %s586 = scalar_lea.vmem %s1, 16
    %v587 = vld [vmem:[%s586] sm:$0xff]
    %v589 = vsel %vm81, %v564, 0
    %v592 = vsel %vm81, %v565, 0
    %v595 = vsel %vm81, %v566, 0
    %v598 = vsel %vm81, %v567, 0
    %v601 = vsel %vm81, %v568, 0
    %v604 = vsel %vm81, %v569, 0
    %v607 = vsel %vm81, %v570, 0
    %v610 = vsel %vm81, %v571, 0
    %v613 = vsel %vm81, %v572, 0
    %v616 = vsel %vm81, %v573, 0
    %v619 = vsel %vm81, %v574, 0
    %v622 = vsel %vm81, %v575, 0
    %v625 = vsel %vm81, %v576, 0
    %v628 = vsel %vm81, %v577, 0
    %v631 = vsel %vm81, %v578, 0
    %v634 = vsel %vm81, %v579, 0
    %v637 = vsel %vm81, %v580, 0
    %v640 = vsel %vm81, %v581, 0
    %v643 = vsel %vm81, %v582, 0
    %v646 = vsel %vm81, %v583, 0
    %v649 = vsel %vm81, %v584, 0
    %v652 = vsel %vm81, %v585, 0
    %654 = vmatprep.subr.mxu0 0.0
    %655 = vmatpush1.msra.mxu0 %v587
    %656 = vmatprep.subr.mxu0 0.0
    %657 = vmatpush1.msra.mxu0 0.0
    %658 = vmatprep.subr.mxu0 0.0
    %659 = vmatpush1.msra.mxu0 0.0
    %660 = vmatprep.subr.mxu0 0.0
    %661 = vmatpush1.msra.mxu0 0.0
    %662 = vmatprep.subr.mxu0 0.0
    %663 = vmatpush1.msra.mxu0 0.0
    %664 = vmatprep.subr.mxu0 0.0
    %665 = vmatpush1.msra.mxu0 0.0
    %666 = vmatprep.subr.mxu0 0.0
    %667 = vmatpush1.msra.mxu0 0.0
    %668 = vmatprep.subr.mxu0 0.0
    %669 = vmatpush1.msra.mxu0 0.0
    %670 = vmatprep.subr.mxu0 0.0
    %671 = vmatpush1.msra.mxu0 0.0
    %672 = vmatprep.subr.mxu0 0.0
    %673 = vmatpush1.msra.mxu0 0.0
    %674 = vmatprep.subr.mxu0 0.0
    %675 = vmatpush1.msra.mxu0 0.0
    %676 = vmatprep.subr.mxu0 0.0
    %677 = vmatpush1.msra.mxu0 0.0
    %678 = vmatprep.subr.mxu0 0.0
    %679 = vmatpush1.msra.mxu0 0.0
    %680 = vmatprep.subr.mxu0 0.0
    %681 = vmatpush1.msra.mxu0 0.0
    %682 = vmatprep.subr.mxu0 0.0
    %683 = vmatpush1.msra.mxu0 0.0
    %684 = vmatprep.subr.mxu0 0.0
    %685 = vmatpush1.msra.mxu0 0.0
    %686 = vmatprep.subr.mxu0 0.0
    %687 = vmatpush1.msra.mxu0 0.0
    %688 = vmatprep.subr.mxu0 0.0
    %689 = vmatpush1.msra.mxu0 0.0
    %690 = vmatprep.subr.mxu0 0.0
    %691 = vmatpush1.msra.mxu0 0.0
    %692 = vmatprep.subr.mxu0 0.0
    %693 = vmatpush1.msra.mxu0 0.0
    %694 = vmatprep.subr.mxu0 0.0
    %695 = vmatpush1.msra.mxu0 0.0
    %696 = vmatprep.subr.mxu0 0.0
    %697 = vmatpush1.msra.mxu0 0.0
    %698 = vmatprep.subr.mxu0 0.0
    %699 = vmatpush1.msra.mxu0 0.0
    %700 = vmatprep.subr.mxu0 0.0
    %701 = vmatpush1.msra.mxu0 0.0
    %702 = vmatprep.subr.mxu0 0.0
    %703 = vmatpush1.msra.mxu0 0.0
    %704 = vmatprep.subr.mxu0 0.0
    %705 = vmatpush1.msra.mxu0 0.0
    %706 = vmatprep.subr.mxu0 0.0
    %707 = vmatpush1.msra.mxu0 0.0
    %708 = vmatprep.subr.mxu0 0.0
    %709 = vmatpush1.msra.mxu0 0.0
    %710 = vmatprep.subr.mxu0 0.0
    %711 = vmatpush1.msra.mxu0 0.0
    %712 = vmatprep.subr.mxu0 0.0
    %713 = vmatpush1.msra.mxu0 0.0
    %714 = vmatprep.subr.mxu0 0.0
    %715 = vmatpush1.msra.mxu0 0.0
    %716 = vmatprep.subr.mxu0 0.0
    %717 = vmatpush1.msra.mxu0 0.0
    %718 = vmatprep.mubr.f32.mxu0 0.0
    %719 = vmatmul.mubr.f32.gmra.mrb[0].mxu0 %v589
    %v720 = vpop.f32.mrb[0].mxu0
    %v721 = vadd.f32 0.0, %v720
    %v722 = vpop.f32.mrb[0].mxu0
    %723 = vmatprep.mubr.f32.mxu0 0.0
    %724 = vmatmul.mubr.f32.gmra.mrb[0].mxu0 %v592
    %v725 = vpop.f32.mrb[0].mxu0
    %v726 = vadd.f32 0.0, %v725
    %v727 = vpop.f32.mrb[0].mxu0
    %728 = vmatprep.mubr.f32.mxu0 0.0
    %729 = vmatmul.mubr.f32.gmra.mrb[0].mxu0 %v595
    %v730 = vpop.f32.mrb[0].mxu0
    %v731 = vadd.f32 0.0, %v730
    %v732 = vpop.f32.mrb[0].mxu0
    %733 = vmatprep.mubr.f32.mxu0 0.0
    %734 = vmatmul.mubr.f32.gmra.mrb[0].mxu0 %v598
    %v735 = vpop.f32.mrb[0].mxu0
    %v736 = vadd.f32 0.0, %v735
    %v737 = vpop.f32.mrb[0].mxu0
    %738 = vmatprep.mubr.f32.mxu0 0.0
    %739 = vmatmul.mubr.f32.gmra.mrb[0].mxu0 %v601
    %v740 = vpop.f32.mrb[0].mxu0
    %v741 = vadd.f32 0.0, %v740
    %v742 = vpop.f32.mrb[0].mxu0
    %743 = vmatprep.mubr.f32.mxu0 0.0
    %744 = vmatmul.mubr.f32.gmra.mrb[0].mxu0 %v604
    %v745 = vpop.f32.mrb[0].mxu0
    %v746 = vadd.f32 0.0, %v745
    %v747 = vpop.f32.mrb[0].mxu0
    %748 = vmatprep.mubr.f32.mxu0 0.0
    %749 = vmatmul.mubr.f32.gmra.mrb[0].mxu0 %v607
    %v750 = vpop.f32.mrb[0].mxu0
    %v751 = vadd.f32 0.0, %v750
    %v752 = vpop.f32.mrb[0].mxu0
    %753 = vmatprep.mubr.f32.mxu0 0.0
    %754 = vmatmul.mubr.f32.gmra.mrb[0].mxu0 %v610
    %v755 = vpop.f32.mrb[0].mxu0
    %v756 = vadd.f32 0.0, %v755
    %v757 = vpop.f32.mrb[0].mxu0
    %758 = vmatprep.mubr.f32.mxu0 0.0
    %759 = vmatmul.mubr.f32.gmra.mrb[0].mxu0 %v613
    %v760 = vpop.f32.mrb[0].mxu0
    %v761 = vadd.f32 0.0, %v760
    %v762 = vpop.f32.mrb[0].mxu0
    %763 = vmatprep.mubr.f32.mxu0 0.0
    %764 = vmatmul.mubr.f32.gmra.mrb[0].mxu0 %v616
    %v765 = vpop.f32.mrb[0].mxu0
    %v766 = vadd.f32 0.0, %v765
    %v767 = vpop.f32.mrb[0].mxu0
    %768 = vmatprep.mubr.f32.mxu0 0.0
    %769 = vmatmul.mubr.f32.gmra.mrb[0].mxu0 %v619
    %v770 = vpop.f32.mrb[0].mxu0
    %v771 = vadd.f32 0.0, %v770
    %v772 = vpop.f32.mrb[0].mxu0
    %773 = vmatprep.mubr.f32.mxu0 0.0
    %774 = vmatmul.mubr.f32.gmra.mrb[0].mxu0 %v622
    %v775 = vpop.f32.mrb[0].mxu0
    %v776 = vadd.f32 0.0, %v775
    %v777 = vpop.f32.mrb[0].mxu0
    %778 = vmatprep.mubr.f32.mxu0 0.0
    %779 = vmatmul.mubr.f32.gmra.mrb[0].mxu0 %v625
    %v780 = vpop.f32.mrb[0].mxu0
    %v781 = vadd.f32 0.0, %v780
    %v782 = vpop.f32.mrb[0].mxu0
    %783 = vmatprep.mubr.f32.mxu0 0.0
    %784 = vmatmul.mubr.f32.gmra.mrb[0].mxu0 %v628
    %v785 = vpop.f32.mrb[0].mxu0
    %v786 = vadd.f32 0.0, %v785
    %v787 = vpop.f32.mrb[0].mxu0
    %788 = vmatprep.mubr.f32.mxu0 0.0
    %789 = vmatmul.mubr.f32.gmra.mrb[0].mxu0 %v631
    %v790 = vpop.f32.mrb[0].mxu0
    %v791 = vadd.f32 0.0, %v790
    %v792 = vpop.f32.mrb[0].mxu0
    %793 = vmatprep.mubr.f32.mxu0 0.0
    %794 = vmatmul.mubr.f32.gmra.mrb[0].mxu0 %v634
    %v795 = vpop.f32.mrb[0].mxu0
    %v796 = vadd.f32 0.0, %v795
    %v797 = vpop.f32.mrb[0].mxu0
    %798 = vmatprep.mubr.f32.mxu0 0.0
    %799 = vmatmul.mubr.f32.gmra.mrb[0].mxu0 %v637
    %v800 = vpop.f32.mrb[0].mxu0
    %v801 = vadd.f32 0.0, %v800
    %v802 = vpop.f32.mrb[0].mxu0
    %803 = vmatprep.mubr.f32.mxu0 0.0
    %804 = vmatmul.mubr.f32.gmra.mrb[0].mxu0 %v640
    %v805 = vpop.f32.mrb[0].mxu0
    %v806 = vadd.f32 0.0, %v805
    %v807 = vpop.f32.mrb[0].mxu0
    %808 = vmatprep.mubr.f32.mxu0 0.0
    %809 = vmatmul.mubr.f32.gmra.mrb[0].mxu0 %v643
    %v810 = vpop.f32.mrb[0].mxu0
    %v811 = vadd.f32 0.0, %v810
    %v812 = vpop.f32.mrb[0].mxu0
    %813 = vmatprep.mubr.f32.mxu0 0.0
    %814 = vmatmul.mubr.f32.gmra.mrb[0].mxu0 %v646
    %v815 = vpop.f32.mrb[0].mxu0
    %v816 = vadd.f32 0.0, %v815
    %v817 = vpop.f32.mrb[0].mxu0
    %818 = vmatprep.mubr.f32.mxu0 0.0
    %819 = vmatmul.mubr.f32.gmra.mrb[0].mxu0 %v649
    %v820 = vpop.f32.mrb[0].mxu0
    %v821 = vadd.f32 0.0, %v820
    %v822 = vpop.f32.mrb[0].mxu0
    %823 = vmatprep.mubr.f32.mxu0 0.0
    %824 = vmatmul.mubr.f32.gmra.mrb[0].mxu0 %v652
    %v825 = vpop.f32.mrb[0].mxu0
    %v826 = vadd.f32 0.0, %v825
    %v827 = vpop.f32.mrb[0].mxu0
    %828 = vdwg.mxu0
    %v829 = vadd.f32 %v456, %v721
    %v830 = vadd.f32 %v461, %v726
    %v831 = vadd.f32 %v466, %v731
    %v832 = vadd.f32 %v471, %v736
    %v833 = vadd.f32 %v476, %v741
    %v834 = vadd.f32 %v481, %v746
    %v835 = vadd.f32 %v486, %v751
    %v836 = vadd.f32 %v491, %v756
    %v837 = vadd.f32 %v496, %v761
    %v838 = vadd.f32 %v501, %v766
    %v839 = vadd.f32 %v506, %v771
    %v840 = vadd.f32 %v511, %v776
    %v841 = vadd.f32 %v516, %v781
    %v842 = vadd.f32 %v521, %v786
    %v843 = vadd.f32 %v526, %v791
    %v844 = vadd.f32 %v531, %v796
    %v845 = vadd.f32 %v536, %v801
    %v846 = vadd.f32 %v541, %v806
    %v847 = vadd.f32 %v546, %v811
    %v848 = vadd.f32 %v551, %v816
    %v849 = vadd.f32 %v556, %v821
    %v850 = vadd.f32 %v561, %v826
    %v851 = vld [vmem:[%s0 + $0xa] sm:$0xff]
    %v852 = vld [vmem:[%s0 + $0x12] sm:$0xff]
    %v853 = vld [vmem:[%s0 + $0x1a] sm:$0xff]
    %v854 = vld [vmem:[%s0 + $0x22] sm:$0xff]
    %v855 = vld [vmem:[%s0 + $0x2a] sm:$0xff]
    %v856 = vld [vmem:[%s0 + $0x32] sm:$0xff]
    %v857 = vld [vmem:[%s0 + $0x3a] sm:$0xff]
    %v858 = vld [vmem:[%s0 + $0x42] sm:$0xff]
    %v859 = vld [vmem:[%s0 + $0x4a] sm:$0xff]
    %v860 = vld [vmem:[%s0 + $0x52] sm:$0xff]
    %v861 = vld [vmem:[%s0 + $0x5a] sm:$0xff]
    %v862 = vld [vmem:[%s0 + $0x62] sm:$0xff]
    %v863 = vld [vmem:[%s0 + $0x6a] sm:$0xff]
    %v864 = vld [vmem:[%s0 + $0x72] sm:$0xff]
    %v865 = vld [vmem:[%s0 + $0x7a] sm:$0xff]
    %v866 = vld [vmem:[%s0 + $0x82] sm:$0xff]
    %v867 = vld [vmem:[%s0 + $0x8a] sm:$0xff]
    %v868 = vld [vmem:[%s0 + $0x92] sm:$0xff]
    %v869 = vld [vmem:[%s0 + $0x9a] sm:$0xff]
    %v870 = vld [vmem:[%s0 + $0xa2] sm:$0xff]
    %v871 = vld [vmem:[%s0 + $0xaa] sm:$0xff]
    %v872 = vld [vmem:[%s0 + $0xb2] sm:$0xff]
    %s873 = scalar_lea.vmem %s1, 24
    %v874 = vld [vmem:[%s873] sm:$0xff]
    %v876 = vsel %vm81, %v851, 0
    %v879 = vsel %vm81, %v852, 0
    %v882 = vsel %vm81, %v853, 0
    %v885 = vsel %vm81, %v854, 0
    %v888 = vsel %vm81, %v855, 0
    %v891 = vsel %vm81, %v856, 0
    %v894 = vsel %vm81, %v857, 0
    %v897 = vsel %vm81, %v858, 0
    %v900 = vsel %vm81, %v859, 0
    %v903 = vsel %vm81, %v860, 0
    %v906 = vsel %vm81, %v861, 0
    %v909 = vsel %vm81, %v862, 0
    %v912 = vsel %vm81, %v863, 0
    %v915 = vsel %vm81, %v864, 0
    %v918 = vsel %vm81, %v865, 0
    %v921 = vsel %vm81, %v866, 0
    %v924 = vsel %vm81, %v867, 0
    %v927 = vsel %vm81, %v868, 0
    %v930 = vsel %vm81, %v869, 0
    %v933 = vsel %vm81, %v870, 0
    %v936 = vsel %vm81, %v871, 0
    %v939 = vsel %vm81, %v872, 0
    %941 = vmatprep.subr.mxu0 0.0
    %942 = vmatpush1.msra.mxu0 %v874
    %943 = vmatprep.subr.mxu0 0.0
    %944 = vmatpush1.msra.mxu0 0.0
    %945 = vmatprep.subr.mxu0 0.0
    %946 = vmatpush1.msra.mxu0 0.0
    %947 = vmatprep.subr.mxu0 0.0
    %948 = vmatpush1.msra.mxu0 0.0
    %949 = vmatprep.subr.mxu0 0.0
    %950 = vmatpush1.msra.mxu0 0.0
    %951 = vmatprep.subr.mxu0 0.0
    %952 = vmatpush1.msra.mxu0 0.0
    %953 = vmatprep.subr.mxu0 0.0
    %954 = vmatpush1.msra.mxu0 0.0
    %955 = vmatprep.subr.mxu0 0.0
    %956 = vmatpush1.msra.mxu0 0.0
    %957 = vmatprep.subr.mxu0 0.0
    %958 = vmatpush1.msra.mxu0 0.0
    %959 = vmatprep.subr.mxu0 0.0
    %960 = vmatpush1.msra.mxu0 0.0
    %961 = vmatprep.subr.mxu0 0.0
    %962 = vmatpush1.msra.mxu0 0.0
    %963 = vmatprep.subr.mxu0 0.0
    %964 = vmatpush1.msra.mxu0 0.0
    %965 = vmatprep.subr.mxu0 0.0
    %966 = vmatpush1.msra.mxu0 0.0
    %967 = vmatprep.subr.mxu0 0.0
    %968 = vmatpush1.msra.mxu0 0.0
    %969 = vmatprep.subr.mxu0 0.0
    %970 = vmatpush1.msra.mxu0 0.0
    %971 = vmatprep.subr.mxu0 0.0
    %972 = vmatpush1.msra.mxu0 0.0
    %973 = vmatprep.subr.mxu0 0.0
    %974 = vmatpush1.msra.mxu0 0.0
    %975 = vmatprep.subr.mxu0 0.0
    %976 = vmatpush1.msra.mxu0 0.0
    %977 = vmatprep.subr.mxu0 0.0
    %978 = vmatpush1.msra.mxu0 0.0
    %979 = vmatprep.subr.mxu0 0.0
    %980 = vmatpush1.msra.mxu0 0.0
    %981 = vmatprep.subr.mxu0 0.0
    %982 = vmatpush1.msra.mxu0 0.0
    %983 = vmatprep.subr.mxu0 0.0
    %984 = vmatpush1.msra.mxu0 0.0
    %985 = vmatprep.subr.mxu0 0.0
    %986 = vmatpush1.msra.mxu0 0.0
    %987 = vmatprep.subr.mxu0 0.0
    %988 = vmatpush1.msra.mxu0 0.0
    %989 = vmatprep.subr.mxu0 0.0
    %990 = vmatpush1.msra.mxu0 0.0
    %991 = vmatprep.subr.mxu0 0.0
    %992 = vmatpush1.msra.mxu0 0.0
    %993 = vmatprep.subr.mxu0 0.0
    %994 = vmatpush1.msra.mxu0 0.0
    %995 = vmatprep.subr.mxu0 0.0
    %996 = vmatpush1.msra.mxu0 0.0
    %997 = vmatprep.subr.mxu0 0.0
    %998 = vmatpush1.msra.mxu0 0.0
    %999 = vmatprep.subr.mxu0 0.0
    %1000 = vmatpush1.msra.mxu0 0.0
    %1001 = vmatprep.subr.mxu0 0.0
    %1002 = vmatpush1.msra.mxu0 0.0
    %1003 = vmatprep.subr.mxu0 0.0
    %1004 = vmatpush1.msra.mxu0 0.0
    %1005 = vmatprep.mubr.f32.mxu0 0.0
    %1006 = vmatmul.mubr.f32.gmra.mrb[0].mxu0 %v876
    %v1007 = vpop.f32.mrb[0].mxu0
    %v1008 = vadd.f32 0.0, %v1007
    %v1009 = vpop.f32.mrb[0].mxu0
    %1010 = vmatprep.mubr.f32.mxu0 0.0
    %1011 = vmatmul.mubr.f32.gmra.mrb[0].mxu0 %v879
    %v1012 = vpop.f32.mrb[0].mxu0
    %v1013 = vadd.f32 0.0, %v1012
    %v1014 = vpop.f32.mrb[0].mxu0
    %1015 = vmatprep.mubr.f32.mxu0 0.0
    %1016 = vmatmul.mubr.f32.gmra.mrb[0].mxu0 %v882
    %v1017 = vpop.f32.mrb[0].mxu0
    %v1018 = vadd.f32 0.0, %v1017
    %v1019 = vpop.f32.mrb[0].mxu0
    %1020 = vmatprep.mubr.f32.mxu0 0.0
    %1021 = vmatmul.mubr.f32.gmra.mrb[0].mxu0 %v885
    %v1022 = vpop.f32.mrb[0].mxu0
    %v1023 = vadd.f32 0.0, %v1022
    %v1024 = vpop.f32.mrb[0].mxu0
    %1025 = vmatprep.mubr.f32.mxu0 0.0
    %1026 = vmatmul.mubr.f32.gmra.mrb[0].mxu0 %v888
    %v1027 = vpop.f32.mrb[0].mxu0
    %v1028 = vadd.f32 0.0, %v1027
    %v1029 = vpop.f32.mrb[0].mxu0
    %1030 = vmatprep.mubr.f32.mxu0 0.0
    %1031 = vmatmul.mubr.f32.gmra.mrb[0].mxu0 %v891
    %v1032 = vpop.f32.mrb[0].mxu0
    %v1033 = vadd.f32 0.0, %v1032
    %v1034 = vpop.f32.mrb[0].mxu0
    %1035 = vmatprep.mubr.f32.mxu0 0.0
    %1036 = vmatmul.mubr.f32.gmra.mrb[0].mxu0 %v894
    %v1037 = vpop.f32.mrb[0].mxu0
    %v1038 = vadd.f32 0.0, %v1037
    %v1039 = vpop.f32.mrb[0].mxu0
    %1040 = vmatprep.mubr.f32.mxu0 0.0
    %1041 = vmatmul.mubr.f32.gmra.mrb[0].mxu0 %v897
    %v1042 = vpop.f32.mrb[0].mxu0
    %v1043 = vadd.f32 0.0, %v1042
    %v1044 = vpop.f32.mrb[0].mxu0
    %1045 = vmatprep.mubr.f32.mxu0 0.0
    %1046 = vmatmul.mubr.f32.gmra.mrb[0].mxu0 %v900
    %v1047 = vpop.f32.mrb[0].mxu0
    %v1048 = vadd.f32 0.0, %v1047
    %v1049 = vpop.f32.mrb[0].mxu0
    %1050 = vmatprep.mubr.f32.mxu0 0.0
    %1051 = vmatmul.mubr.f32.gmra.mrb[0].mxu0 %v903
    %v1052 = vpop.f32.mrb[0].mxu0
    %v1053 = vadd.f32 0.0, %v1052
    %v1054 = vpop.f32.mrb[0].mxu0
    %1055 = vmatprep.mubr.f32.mxu0 0.0
    %1056 = vmatmul.mubr.f32.gmra.mrb[0].mxu0 %v906
    %v1057 = vpop.f32.mrb[0].mxu0
    %v1058 = vadd.f32 0.0, %v1057
    %v1059 = vpop.f32.mrb[0].mxu0
    %1060 = vmatprep.mubr.f32.mxu0 0.0
    %1061 = vmatmul.mubr.f32.gmra.mrb[0].mxu0 %v909
    %v1062 = vpop.f32.mrb[0].mxu0
    %v1063 = vadd.f32 0.0, %v1062
    %v1064 = vpop.f32.mrb[0].mxu0
    %1065 = vmatprep.mubr.f32.mxu0 0.0
    %1066 = vmatmul.mubr.f32.gmra.mrb[0].mxu0 %v912
    %v1067 = vpop.f32.mrb[0].mxu0
    %v1068 = vadd.f32 0.0, %v1067
    %v1069 = vpop.f32.mrb[0].mxu0
    %1070 = vmatprep.mubr.f32.mxu0 0.0
    %1071 = vmatmul.mubr.f32.gmra.mrb[0].mxu0 %v915
    %v1072 = vpop.f32.mrb[0].mxu0
    %v1073 = vadd.f32 0.0, %v1072
    %v1074 = vpop.f32.mrb[0].mxu0
    %1075 = vmatprep.mubr.f32.mxu0 0.0
    %1076 = vmatmul.mubr.f32.gmra.mrb[0].mxu0 %v918
    %v1077 = vpop.f32.mrb[0].mxu0
    %v1078 = vadd.f32 0.0, %v1077
    %v1079 = vpop.f32.mrb[0].mxu0
    %1080 = vmatprep.mubr.f32.mxu0 0.0
    %1081 = vmatmul.mubr.f32.gmra.mrb[0].mxu0 %v921
    %v1082 = vpop.f32.mrb[0].mxu0
    %v1083 = vadd.f32 0.0, %v1082
    %v1084 = vpop.f32.mrb[0].mxu0
    %1085 = vmatprep.mubr.f32.mxu0 0.0
    %1086 = vmatmul.mubr.f32.gmra.mrb[0].mxu0 %v924
    %v1087 = vpop.f32.mrb[0].mxu0
    %v1088 = vadd.f32 0.0, %v1087
    %v1089 = vpop.f32.mrb[0].mxu0
    %1090 = vmatprep.mubr.f32.mxu0 0.0
    %1091 = vmatmul.mubr.f32.gmra.mrb[0].mxu0 %v927
    %v1092 = vpop.f32.mrb[0].mxu0
    %v1093 = vadd.f32 0.0, %v1092
    %v1094 = vpop.f32.mrb[0].mxu0
    %1095 = vmatprep.mubr.f32.mxu0 0.0
    %1096 = vmatmul.mubr.f32.gmra.mrb[0].mxu0 %v930
    %v1097 = vpop.f32.mrb[0].mxu0
    %v1098 = vadd.f32 0.0, %v1097
    %v1099 = vpop.f32.mrb[0].mxu0
    %1100 = vmatprep.mubr.f32.mxu0 0.0
    %1101 = vmatmul.mubr.f32.gmra.mrb[0].mxu0 %v933
    %v1102 = vpop.f32.mrb[0].mxu0
    %v1103 = vadd.f32 0.0, %v1102
    %v1104 = vpop.f32.mrb[0].mxu0
    %1105 = vmatprep.mubr.f32.mxu0 0.0
    %1106 = vmatmul.mubr.f32.gmra.mrb[0].mxu0 %v936
    %v1107 = vpop.f32.mrb[0].mxu0
    %v1108 = vadd.f32 0.0, %v1107
    %v1109 = vpop.f32.mrb[0].mxu0
    %1110 = vmatprep.mubr.f32.mxu0 0.0
    %1111 = vmatmul.mubr.f32.gmra.mrb[0].mxu0 %v939
    %v1112 = vpop.f32.mrb[0].mxu0
    %v1113 = vadd.f32 0.0, %v1112
    %v1114 = vpop.f32.mrb[0].mxu0
    %1115 = vdwg.mxu0
    %v1116 = vadd.f32 %v829, %v1008
    %v1117 = vadd.f32 %v830, %v1013
    %v1118 = vadd.f32 %v831, %v1018
    %v1119 = vadd.f32 %v832, %v1023
    %v1120 = vadd.f32 %v833, %v1028
    %v1121 = vadd.f32 %v834, %v1033
    %v1122 = vadd.f32 %v835, %v1038
    %v1123 = vadd.f32 %v836, %v1043
    %v1124 = vadd.f32 %v837, %v1048
    %v1125 = vadd.f32 %v838, %v1053
    %v1126 = vadd.f32 %v839, %v1058
    %v1127 = vadd.f32 %v840, %v1063
    %v1128 = vadd.f32 %v841, %v1068
    %v1129 = vadd.f32 %v842, %v1073
    %v1130 = vadd.f32 %v843, %v1078
    %v1131 = vadd.f32 %v844, %v1083
    %v1132 = vadd.f32 %v845, %v1088
    %v1133 = vadd.f32 %v846, %v1093
    %v1134 = vadd.f32 %v847, %v1098
    %v1135 = vadd.f32 %v848, %v1103
    %v1136 = vadd.f32 %v849, %v1108
    %v1137 = vadd.f32 %v850, %v1113
    %v1138 = vld [vmem:[%s0 + $0xb0] sm:$0xff]
    %v1139 = vld [vmem:[%s0 + $0xb8] sm:$0xff]
    %v1140 = vld [vmem:[%s0 + $0xc0] sm:$0xff]
    %v1141 = vld [vmem:[%s0 + $0xc8] sm:$0xff]
    %v1142 = vld [vmem:[%s0 + $0xd0] sm:$0xff]
    %v1143 = vld [vmem:[%s0 + $0xd8] sm:$0xff]
    %v1144 = vld [vmem:[%s0 + $0xe0] sm:$0xff]
    %v1145 = vld [vmem:[%s0 + $0xe8] sm:$0xff]
    %v1146 = vld [vmem:[%s0 + $0xf0] sm:$0xff]
    %v1147 = vld [vmem:[%s0 + $0xf8] sm:$0xff]
    %v1148 = vld [vmem:[%s0 + $0x100] sm:$0xff]
    %v1149 = vld [vmem:[%s0 + $0x108] sm:$0xff]
    %v1150 = vld [vmem:[%s0 + $0x110] sm:$0xff]
    %v1151 = vld [vmem:[%s0 + $0x118] sm:$0xff]
    %v1152 = vld [vmem:[%s0 + $0x120] sm:$0xff]
    %v1153 = vld [vmem:[%s0 + $0x128] sm:$0xff]
    %v1154 = vld [vmem:[%s0 + $0x130] sm:$0xff]
    %v1155 = vld [vmem:[%s0 + $0x138] sm:$0xff]
    %v1156 = vld [vmem:[%s0 + $0x140] sm:$0xff]
    %v1157 = vld [vmem:[%s0 + $0x148] sm:$0xff]
    %v1158 = vld [vmem:[%s0 + $0x150] sm:$0xff]
    %v1159 = vld [vmem:[%s0 + $0x158] sm:$0xff]
    %s1160 = scalar_lea.vmem %s1, 32
    %v1161 = vld [vmem:[%s1160] sm:$0xff]
    %v1163 = vsel %vm81, %v1138, 0
    %v1166 = vsel %vm81, %v1139, 0
    %v1169 = vsel %vm81, %v1140, 0
    %v1172 = vsel %vm81, %v1141, 0
    %v1175 = vsel %vm81, %v1142, 0
    %v1178 = vsel %vm81, %v1143, 0
    %v1181 = vsel %vm81, %v1144, 0
    %v1184 = vsel %vm81, %v1145, 0
    %v1187 = vsel %vm81, %v1146, 0
    %v1190 = vsel %vm81, %v1147, 0
    %v1193 = vsel %vm81, %v1148, 0
    %v1196 = vsel %vm81, %v1149, 0
    %v1199 = vsel %vm81, %v1150, 0
    %v1202 = vsel %vm81, %v1151, 0
    %v1205 = vsel %vm81, %v1152, 0
    %v1208 = vsel %vm81, %v1153, 0
    %v1211 = vsel %vm81, %v1154, 0
    %v1214 = vsel %vm81, %v1155, 0
    %v1217 = vsel %vm81, %v1156, 0
    %v1220 = vsel %vm81, %v1157, 0
    %v1223 = vsel %vm81, %v1158, 0
    %v1226 = vsel %vm81, %v1159, 0
    %1228 = vmatprep.subr.mxu0 0.0
    %1229 = vmatpush1.msra.mxu0 %v1161
    %1230 = vmatprep.subr.mxu0 0.0
    %1231 = vmatpush1.msra.mxu0 0.0
    %1232 = vmatprep.subr.mxu0 0.0
    %1233 = vmatpush1.msra.mxu0 0.0
    %1234 = vmatprep.subr.mxu0 0.0
    %1235 = vmatpush1.msra.mxu0 0.0
    %1236 = vmatprep.subr.mxu0 0.0
    %1237 = vmatpush1.msra.mxu0 0.0
    %1238 = vmatprep.subr.mxu0 0.0
    %1239 = vmatpush1.msra.mxu0 0.0
    %1240 = vmatprep.subr.mxu0 0.0
    %1241 = vmatpush1.msra.mxu0 0.0
    %1242 = vmatprep.subr.mxu0 0.0
    %1243 = vmatpush1.msra.mxu0 0.0
    %1244 = vmatprep.subr.mxu0 0.0
    %1245 = vmatpush1.msra.mxu0 0.0
    %1246 = vmatprep.subr.mxu0 0.0
    %1247 = vmatpush1.msra.mxu0 0.0
    %1248 = vmatprep.subr.mxu0 0.0
    %1249 = vmatpush1.msra.mxu0 0.0
    %1250 = vmatprep.subr.mxu0 0.0
    %1251 = vmatpush1.msra.mxu0 0.0
    %1252 = vmatprep.subr.mxu0 0.0
    %1253 = vmatpush1.msra.mxu0 0.0
    %1254 = vmatprep.subr.mxu0 0.0
    %1255 = vmatpush1.msra.mxu0 0.0
    %1256 = vmatprep.subr.mxu0 0.0
    %1257 = vmatpush1.msra.mxu0 0.0
    %1258 = vmatprep.subr.mxu0 0.0
    %1259 = vmatpush1.msra.mxu0 0.0
    %1260 = vmatprep.subr.mxu0 0.0
    %1261 = vmatpush1.msra.mxu0 0.0
    %1262 = vmatprep.subr.mxu0 0.0
    %1263 = vmatpush1.msra.mxu0 0.0
    %1264 = vmatprep.subr.mxu0 0.0
    %1265 = vmatpush1.msra.mxu0 0.0
    %1266 = vmatprep.subr.mxu0 0.0
    %1267 = vmatpush1.msra.mxu0 0.0
    %1268 = vmatprep.subr.mxu0 0.0
    %1269 = vmatpush1.msra.mxu0 0.0
    %1270 = vmatprep.subr.mxu0 0.0
    %1271 = vmatpush1.msra.mxu0 0.0
    %1272 = vmatprep.subr.mxu0 0.0
    %1273 = vmatpush1.msra.mxu0 0.0
    %1274 = vmatprep.subr.mxu0 0.0
    %1275 = vmatpush1.msra.mxu0 0.0
    %1276 = vmatprep.subr.mxu0 0.0
    %1277 = vmatpush1.msra.mxu0 0.0
    %1278 = vmatprep.subr.mxu0 0.0
    %1279 = vmatpush1.msra.mxu0 0.0
    %1280 = vmatprep.subr.mxu0 0.0
    %1281 = vmatpush1.msra.mxu0 0.0
    %1282 = vmatprep.subr.mxu0 0.0
    %1283 = vmatpush1.msra.mxu0 0.0
    %1284 = vmatprep.subr.mxu0 0.0
    %1285 = vmatpush1.msra.mxu0 0.0
    %1286 = vmatprep.subr.mxu0 0.0
    %1287 = vmatpush1.msra.mxu0 0.0
    %1288 = vmatprep.subr.mxu0 0.0
    %1289 = vmatpush1.msra.mxu0 0.0
    %1290 = vmatprep.subr.mxu0 0.0
    %1291 = vmatpush1.msra.mxu0 0.0
    %1292 = vmatprep.mubr.f32.mxu0 0.0
    %1293 = vmatmul.mubr.f32.gmra.mrb[0].mxu0 %v1163
    %v1294 = vpop.f32.mrb[0].mxu0
    %v1295 = vadd.f32 0.0, %v1294
    %v1296 = vpop.f32.mrb[0].mxu0
    %1297 = vmatprep.mubr.f32.mxu0 0.0
    %1298 = vmatmul.mubr.f32.gmra.mrb[0].mxu0 %v1166
    %v1299 = vpop.f32.mrb[0].mxu0
    %v1300 = vadd.f32 0.0, %v1299
    %v1301 = vpop.f32.mrb[0].mxu0
    %1302 = vmatprep.mubr.f32.mxu0 0.0
    %1303 = vmatmul.mubr.f32.gmra.mrb[0].mxu0 %v1169
    %v1304 = vpop.f32.mrb[0].mxu0
    %v1305 = vadd.f32 0.0, %v1304
    %v1306 = vpop.f32.mrb[0].mxu0
    %1307 = vmatprep.mubr.f32.mxu0 0.0
    %1308 = vmatmul.mubr.f32.gmra.mrb[0].mxu0 %v1172
    %v1309 = vpop.f32.mrb[0].mxu0
    %v1310 = vadd.f32 0.0, %v1309
    %v1311 = vpop.f32.mrb[0].mxu0
    %1312 = vmatprep.mubr.f32.mxu0 0.0
    %1313 = vmatmul.mubr.f32.gmra.mrb[0].mxu0 %v1175
    %v1314 = vpop.f32.mrb[0].mxu0
    %v1315 = vadd.f32 0.0, %v1314
    %v1316 = vpop.f32.mrb[0].mxu0
    %1317 = vmatprep.mubr.f32.mxu0 0.0
    %1318 = vmatmul.mubr.f32.gmra.mrb[0].mxu0 %v1178
    %v1319 = vpop.f32.mrb[0].mxu0
    %v1320 = vadd.f32 0.0, %v1319
    %v1321 = vpop.f32.mrb[0].mxu0
    %1322 = vmatprep.mubr.f32.mxu0 0.0
    %1323 = vmatmul.mubr.f32.gmra.mrb[0].mxu0 %v1181
    %v1324 = vpop.f32.mrb[0].mxu0
    %v1325 = vadd.f32 0.0, %v1324
    %v1326 = vpop.f32.mrb[0].mxu0
    %1327 = vmatprep.mubr.f32.mxu0 0.0
    %1328 = vmatmul.mubr.f32.gmra.mrb[0].mxu0 %v1184
    %v1329 = vpop.f32.mrb[0].mxu0
    %v1330 = vadd.f32 0.0, %v1329
    %v1331 = vpop.f32.mrb[0].mxu0
    %1332 = vmatprep.mubr.f32.mxu0 0.0
    %1333 = vmatmul.mubr.f32.gmra.mrb[0].mxu0 %v1187
    %v1334 = vpop.f32.mrb[0].mxu0
    %v1335 = vadd.f32 0.0, %v1334
    %v1336 = vpop.f32.mrb[0].mxu0
    %1337 = vmatprep.mubr.f32.mxu0 0.0
    %1338 = vmatmul.mubr.f32.gmra.mrb[0].mxu0 %v1190
    %v1339 = vpop.f32.mrb[0].mxu0
    %v1340 = vadd.f32 0.0, %v1339
    %v1341 = vpop.f32.mrb[0].mxu0
    %1342 = vmatprep.mubr.f32.mxu0 0.0
    %1343 = vmatmul.mubr.f32.gmra.mrb[0].mxu0 %v1193
    %v1344 = vpop.f32.mrb[0].mxu0
    %v1345 = vadd.f32 0.0, %v1344
    %v1346 = vpop.f32.mrb[0].mxu0
    %1347 = vmatprep.mubr.f32.mxu0 0.0
    %1348 = vmatmul.mubr.f32.gmra.mrb[0].mxu0 %v1196
    %v1349 = vpop.f32.mrb[0].mxu0
    %v1350 = vadd.f32 0.0, %v1349
    %v1351 = vpop.f32.mrb[0].mxu0
    %1352 = vmatprep.mubr.f32.mxu0 0.0
    %1353 = vmatmul.mubr.f32.gmra.mrb[0].mxu0 %v1199
    %v1354 = vpop.f32.mrb[0].mxu0
    %v1355 = vadd.f32 0.0, %v1354
    %v1356 = vpop.f32.mrb[0].mxu0
    %1357 = vmatprep.mubr.f32.mxu0 0.0
    %1358 = vmatmul.mubr.f32.gmra.mrb[0].mxu0 %v1202
    %v1359 = vpop.f32.mrb[0].mxu0
    %v1360 = vadd.f32 0.0, %v1359
    %v1361 = vpop.f32.mrb[0].mxu0
    %1362 = vmatprep.mubr.f32.mxu0 0.0
    %1363 = vmatmul.mubr.f32.gmra.mrb[0].mxu0 %v1205
    %v1364 = vpop.f32.mrb[0].mxu0
    %v1365 = vadd.f32 0.0, %v1364
    %v1366 = vpop.f32.mrb[0].mxu0
    %1367 = vmatprep.mubr.f32.mxu0 0.0
    %1368 = vmatmul.mubr.f32.gmra.mrb[0].mxu0 %v1208
    %v1369 = vpop.f32.mrb[0].mxu0
    %v1370 = vadd.f32 0.0, %v1369
    %v1371 = vpop.f32.mrb[0].mxu0
    %1372 = vmatprep.mubr.f32.mxu0 0.0
    %1373 = vmatmul.mubr.f32.gmra.mrb[0].mxu0 %v1211
    %v1374 = vpop.f32.mrb[0].mxu0
    %v1375 = vadd.f32 0.0, %v1374
    %v1376 = vpop.f32.mrb[0].mxu0
    %1377 = vmatprep.mubr.f32.mxu0 0.0
    %1378 = vmatmul.mubr.f32.gmra.mrb[0].mxu0 %v1214
    %v1379 = vpop.f32.mrb[0].mxu0
    %v1380 = vadd.f32 0.0, %v1379
    %v1381 = vpop.f32.mrb[0].mxu0
    %1382 = vmatprep.mubr.f32.mxu0 0.0
    %1383 = vmatmul.mubr.f32.gmra.mrb[0].mxu0 %v1217
    %v1384 = vpop.f32.mrb[0].mxu0
    %v1385 = vadd.f32 0.0, %v1384
    %v1386 = vpop.f32.mrb[0].mxu0
    %1387 = vmatprep.mubr.f32.mxu0 0.0
    %1388 = vmatmul.mubr.f32.gmra.mrb[0].mxu0 %v1220
    %v1389 = vpop.f32.mrb[0].mxu0
    %v1390 = vadd.f32 0.0, %v1389
    %v1391 = vpop.f32.mrb[0].mxu0
    %1392 = vmatprep.mubr.f32.mxu0 0.0
    %1393 = vmatmul.mubr.f32.gmra.mrb[0].mxu0 %v1223
    %v1394 = vpop.f32.mrb[0].mxu0
    %v1395 = vadd.f32 0.0, %v1394
    %v1396 = vpop.f32.mrb[0].mxu0
    %1397 = vmatprep.mubr.f32.mxu0 0.0
    %1398 = vmatmul.mubr.f32.gmra.mrb[0].mxu0 %v1226
    %v1399 = vpop.f32.mrb[0].mxu0
    %v1400 = vadd.f32 0.0, %v1399
    %v1401 = vpop.f32.mrb[0].mxu0
    %1402 = vdwg.mxu0
    %v1403 = vadd.f32 %v1116, %v1295
    %v1404 = vadd.f32 %v1117, %v1300
    %v1405 = vadd.f32 %v1118, %v1305
    %v1406 = vadd.f32 %v1119, %v1310
    %v1407 = vadd.f32 %v1120, %v1315
    %v1408 = vadd.f32 %v1121, %v1320
    %v1409 = vadd.f32 %v1122, %v1325
    %v1410 = vadd.f32 %v1123, %v1330
    %v1411 = vadd.f32 %v1124, %v1335
    %v1412 = vadd.f32 %v1125, %v1340
    %v1413 = vadd.f32 %v1126, %v1345
    %v1414 = vadd.f32 %v1127, %v1350
    %v1415 = vadd.f32 %v1128, %v1355
    %v1416 = vadd.f32 %v1129, %v1360
    %v1417 = vadd.f32 %v1130, %v1365
    %v1418 = vadd.f32 %v1131, %v1370
    %v1419 = vadd.f32 %v1132, %v1375
    %v1420 = vadd.f32 %v1133, %v1380
    %v1421 = vadd.f32 %v1134, %v1385
    %v1422 = vadd.f32 %v1135, %v1390
    %v1423 = vadd.f32 %v1136, %v1395
    %v1424 = vadd.f32 %v1137, %v1400
    %v1425 = vld [vmem:[%s0 + $0xb1] sm:$0xff]
    %v1426 = vld [vmem:[%s0 + $0xb9] sm:$0xff]
    %v1427 = vld [vmem:[%s0 + $0xc1] sm:$0xff]
    %v1428 = vld [vmem:[%s0 + $0xc9] sm:$0xff]
    %v1429 = vld [vmem:[%s0 + $0xd1] sm:$0xff]
    %v1430 = vld [vmem:[%s0 + $0xd9] sm:$0xff]
    %v1431 = vld [vmem:[%s0 + $0xe1] sm:$0xff]
    %v1432 = vld [vmem:[%s0 + $0xe9] sm:$0xff]
    %v1433 = vld [vmem:[%s0 + $0xf1] sm:$0xff]
    %v1434 = vld [vmem:[%s0 + $0xf9] sm:$0xff]
    %v1435 = vld [vmem:[%s0 + $0x101] sm:$0xff]
    %v1436 = vld [vmem:[%s0 + $0x109] sm:$0xff]
    %v1437 = vld [vmem:[%s0 + $0x111] sm:$0xff]
    %v1438 = vld [vmem:[%s0 + $0x119] sm:$0xff]
    %v1439 = vld [vmem:[%s0 + $0x121] sm:$0xff]
    %v1440 = vld [vmem:[%s0 + $0x129] sm:$0xff]
    %v1441 = vld [vmem:[%s0 + $0x131] sm:$0xff]
    %v1442 = vld [vmem:[%s0 + $0x139] sm:$0xff]
    %v1443 = vld [vmem:[%s0 + $0x141] sm:$0xff]
    %v1444 = vld [vmem:[%s0 + $0x149] sm:$0xff]
    %v1445 = vld [vmem:[%s0 + $0x151] sm:$0xff]
    %v1446 = vld [vmem:[%s0 + $0x159] sm:$0xff]
    %s1447 = scalar_lea.vmem %s1, 40
    %v1448 = vld [vmem:[%s1447] sm:$0xff]
    %v1450 = vsel %vm81, %v1425, 0
    %v1453 = vsel %vm81, %v1426, 0
    %v1456 = vsel %vm81, %v1427, 0
    %v1459 = vsel %vm81, %v1428, 0
    %v1462 = vsel %vm81, %v1429, 0
    %v1465 = vsel %vm81, %v1430, 0
    %v1468 = vsel %vm81, %v1431, 0
    %v1471 = vsel %vm81, %v1432, 0
    %v1474 = vsel %vm81, %v1433, 0
    %v1477 = vsel %vm81, %v1434, 0
    %v1480 = vsel %vm81, %v1435, 0
    %v1483 = vsel %vm81, %v1436, 0
    %v1486 = vsel %vm81, %v1437, 0
    %v1489 = vsel %vm81, %v1438, 0
    %v1492 = vsel %vm81, %v1439, 0
    %v1495 = vsel %vm81, %v1440, 0
    %v1498 = vsel %vm81, %v1441, 0
    %v1501 = vsel %vm81, %v1442, 0
    %v1504 = vsel %vm81, %v1443, 0
    %v1507 = vsel %vm81, %v1444, 0
    %v1510 = vsel %vm81, %v1445, 0
    %v1513 = vsel %vm81, %v1446, 0
    %1515 = vmatprep.subr.mxu0 0.0
    %1516 = vmatpush1.msra.mxu0 %v1448
    %1517 = vmatprep.subr.mxu0 0.0
    %1518 = vmatpush1.msra.mxu0 0.0
    %1519 = vmatprep.subr.mxu0 0.0
    %1520 = vmatpush1.msra.mxu0 0.0
    %1521 = vmatprep.subr.mxu0 0.0
    %1522 = vmatpush1.msra.mxu0 0.0
    %1523 = vmatprep.subr.mxu0 0.0
    %1524 = vmatpush1.msra.mxu0 0.0
    %1525 = vmatprep.subr.mxu0 0.0
    %1526 = vmatpush1.msra.mxu0 0.0
    %1527 = vmatprep.subr.mxu0 0.0
    %1528 = vmatpush1.msra.mxu0 0.0
    %1529 = vmatprep.subr.mxu0 0.0
    %1530 = vmatpush1.msra.mxu0 0.0
    %1531 = vmatprep.subr.mxu0 0.0
    %1532 = vmatpush1.msra.mxu0 0.0
    %1533 = vmatprep.subr.mxu0 0.0
    %1534 = vmatpush1.msra.mxu0 0.0
    %1535 = vmatprep.subr.mxu0 0.0
    %1536 = vmatpush1.msra.mxu0 0.0
    %1537 = vmatprep.subr.mxu0 0.0
    %1538 = vmatpush1.msra.mxu0 0.0
    %1539 = vmatprep.subr.mxu0 0.0
    %1540 = vmatpush1.msra.mxu0 0.0
    %1541 = vmatprep.subr.mxu0 0.0
    %1542 = vmatpush1.msra.mxu0 0.0
    %1543 = vmatprep.subr.mxu0 0.0
    %1544 = vmatpush1.msra.mxu0 0.0
    %1545 = vmatprep.subr.mxu0 0.0
    %1546 = vmatpush1.msra.mxu0 0.0
    %1547 = vmatprep.subr.mxu0 0.0
    %1548 = vmatpush1.msra.mxu0 0.0
    %1549 = vmatprep.subr.mxu0 0.0
    %1550 = vmatpush1.msra.mxu0 0.0
    %1551 = vmatprep.subr.mxu0 0.0
    %1552 = vmatpush1.msra.mxu0 0.0
    %1553 = vmatprep.subr.mxu0 0.0
    %1554 = vmatpush1.msra.mxu0 0.0
    %1555 = vmatprep.subr.mxu0 0.0
    %1556 = vmatpush1.msra.mxu0 0.0
    %1557 = vmatprep.subr.mxu0 0.0
    %1558 = vmatpush1.msra.mxu0 0.0
    %1559 = vmatprep.subr.mxu0 0.0
    %1560 = vmatpush1.msra.mxu0 0.0
    %1561 = vmatprep.subr.mxu0 0.0
    %1562 = vmatpush1.msra.mxu0 0.0
    %1563 = vmatprep.subr.mxu0 0.0
    %1564 = vmatpush1.msra.mxu0 0.0
    %1565 = vmatprep.subr.mxu0 0.0
    %1566 = vmatpush1.msra.mxu0 0.0
    %1567 = vmatprep.subr.mxu0 0.0
    %1568 = vmatpush1.msra.mxu0 0.0
    %1569 = vmatprep.subr.mxu0 0.0
    %1570 = vmatpush1.msra.mxu0 0.0
    %1571 = vmatprep.subr.mxu0 0.0
    %1572 = vmatpush1.msra.mxu0 0.0
    %1573 = vmatprep.subr.mxu0 0.0
    %1574 = vmatpush1.msra.mxu0 0.0
    %1575 = vmatprep.subr.mxu0 0.0
    %1576 = vmatpush1.msra.mxu0 0.0
    %1577 = vmatprep.subr.mxu0 0.0
    %1578 = vmatpush1.msra.mxu0 0.0
    %1579 = vmatprep.mubr.f32.mxu0 0.0
    %1580 = vmatmul.mubr.f32.gmra.mrb[0].mxu0 %v1450
    %v1581 = vpop.f32.mrb[0].mxu0
    %v1582 = vadd.f32 0.0, %v1581
    %v1583 = vpop.f32.mrb[0].mxu0
    %1584 = vmatprep.mubr.f32.mxu0 0.0
    %1585 = vmatmul.mubr.f32.gmra.mrb[0].mxu0 %v1453
    %v1586 = vpop.f32.mrb[0].mxu0
    %v1587 = vadd.f32 0.0, %v1586
    %v1588 = vpop.f32.mrb[0].mxu0
    %1589 = vmatprep.mubr.f32.mxu0 0.0
    %1590 = vmatmul.mubr.f32.gmra.mrb[0].mxu0 %v1456
    %v1591 = vpop.f32.mrb[0].mxu0
    %v1592 = vadd.f32 0.0, %v1591
    %v1593 = vpop.f32.mrb[0].mxu0
    %1594 = vmatprep.mubr.f32.mxu0 0.0
    %1595 = vmatmul.mubr.f32.gmra.mrb[0].mxu0 %v1459
    %v1596 = vpop.f32.mrb[0].mxu0
    %v1597 = vadd.f32 0.0, %v1596
    %v1598 = vpop.f32.mrb[0].mxu0
    %1599 = vmatprep.mubr.f32.mxu0 0.0
    %1600 = vmatmul.mubr.f32.gmra.mrb[0].mxu0 %v1462
    %v1601 = vpop.f32.mrb[0].mxu0
    %v1602 = vadd.f32 0.0, %v1601
    %v1603 = vpop.f32.mrb[0].mxu0
    %1604 = vmatprep.mubr.f32.mxu0 0.0
    %1605 = vmatmul.mubr.f32.gmra.mrb[0].mxu0 %v1465
    %v1606 = vpop.f32.mrb[0].mxu0
    %v1607 = vadd.f32 0.0, %v1606
    %v1608 = vpop.f32.mrb[0].mxu0
    %1609 = vmatprep.mubr.f32.mxu0 0.0
    %1610 = vmatmul.mubr.f32.gmra.mrb[0].mxu0 %v1468
    %v1611 = vpop.f32.mrb[0].mxu0
    %v1612 = vadd.f32 0.0, %v1611
    %v1613 = vpop.f32.mrb[0].mxu0
    %1614 = vmatprep.mubr.f32.mxu0 0.0
    %1615 = vmatmul.mubr.f32.gmra.mrb[0].mxu0 %v1471
    %v1616 = vpop.f32.mrb[0].mxu0
    %v1617 = vadd.f32 0.0, %v1616
    %v1618 = vpop.f32.mrb[0].mxu0
    %1619 = vmatprep.mubr.f32.mxu0 0.0
    %1620 = vmatmul.mubr.f32.gmra.mrb[0].mxu0 %v1474
    %v1621 = vpop.f32.mrb[0].mxu0
    %v1622 = vadd.f32 0.0, %v1621
    %v1623 = vpop.f32.mrb[0].mxu0
    %1624 = vmatprep.mubr.f32.mxu0 0.0
    %1625 = vmatmul.mubr.f32.gmra.mrb[0].mxu0 %v1477
    %v1626 = vpop.f32.mrb[0].mxu0
    %v1627 = vadd.f32 0.0, %v1626
    %v1628 = vpop.f32.mrb[0].mxu0
    %1629 = vmatprep.mubr.f32.mxu0 0.0
    %1630 = vmatmul.mubr.f32.gmra.mrb[0].mxu0 %v1480
    %v1631 = vpop.f32.mrb[0].mxu0
    %v1632 = vadd.f32 0.0, %v1631
    %v1633 = vpop.f32.mrb[0].mxu0
    %1634 = vmatprep.mubr.f32.mxu0 0.0
    %1635 = vmatmul.mubr.f32.gmra.mrb[0].mxu0 %v1483
    %v1636 = vpop.f32.mrb[0].mxu0
    %v1637 = vadd.f32 0.0, %v1636
    %v1638 = vpop.f32.mrb[0].mxu0
    %1639 = vmatprep.mubr.f32.mxu0 0.0
    %1640 = vmatmul.mubr.f32.gmra.mrb[0].mxu0 %v1486
    %v1641 = vpop.f32.mrb[0].mxu0
    %v1642 = vadd.f32 0.0, %v1641
    %v1643 = vpop.f32.mrb[0].mxu0
    %1644 = vmatprep.mubr.f32.mxu0 0.0
    %1645 = vmatmul.mubr.f32.gmra.mrb[0].mxu0 %v1489
    %v1646 = vpop.f32.mrb[0].mxu0
    %v1647 = vadd.f32 0.0, %v1646
    %v1648 = vpop.f32.mrb[0].mxu0
    %1649 = vmatprep.mubr.f32.mxu0 0.0
    %1650 = vmatmul.mubr.f32.gmra.mrb[0].mxu0 %v1492
    %v1651 = vpop.f32.mrb[0].mxu0
    %v1652 = vadd.f32 0.0, %v1651
    %v1653 = vpop.f32.mrb[0].mxu0
    %1654 = vmatprep.mubr.f32.mxu0 0.0
    %1655 = vmatmul.mubr.f32.gmra.mrb[0].mxu0 %v1495
    %v1656 = vpop.f32.mrb[0].mxu0
    %v1657 = vadd.f32 0.0, %v1656
    %v1658 = vpop.f32.mrb[0].mxu0
    %1659 = vmatprep.mubr.f32.mxu0 0.0
    %1660 = vmatmul.mubr.f32.gmra.mrb[0].mxu0 %v1498
    %v1661 = vpop.f32.mrb[0].mxu0
    %v1662 = vadd.f32 0.0, %v1661
    %v1663 = vpop.f32.mrb[0].mxu0
    %1664 = vmatprep.mubr.f32.mxu0 0.0
    %1665 = vmatmul.mubr.f32.gmra.mrb[0].mxu0 %v1501
    %v1666 = vpop.f32.mrb[0].mxu0
    %v1667 = vadd.f32 0.0, %v1666
    %v1668 = vpop.f32.mrb[0].mxu0
    %1669 = vmatprep.mubr.f32.mxu0 0.0
    %1670 = vmatmul.mubr.f32.gmra.mrb[0].mxu0 %v1504
    %v1671 = vpop.f32.mrb[0].mxu0
    %v1672 = vadd.f32 0.0, %v1671
    %v1673 = vpop.f32.mrb[0].mxu0
    %1674 = vmatprep.mubr.f32.mxu0 0.0
    %1675 = vmatmul.mubr.f32.gmra.mrb[0].mxu0 %v1507
    %v1676 = vpop.f32.mrb[0].mxu0
    %v1677 = vadd.f32 0.0, %v1676
    %v1678 = vpop.f32.mrb[0].mxu0
    %1679 = vmatprep.mubr.f32.mxu0 0.0
    %1680 = vmatmul.mubr.f32.gmra.mrb[0].mxu0 %v1510
    %v1681 = vpop.f32.mrb[0].mxu0
    %v1682 = vadd.f32 0.0, %v1681
    %v1683 = vpop.f32.mrb[0].mxu0
    %1684 = vmatprep.mubr.f32.mxu0 0.0
    %1685 = vmatmul.mubr.f32.gmra.mrb[0].mxu0 %v1513
    %v1686 = vpop.f32.mrb[0].mxu0
    %v1687 = vadd.f32 0.0, %v1686
    %v1688 = vpop.f32.mrb[0].mxu0
    %1689 = vdwg.mxu0
    %v1690 = vadd.f32 %v1403, %v1582
    %v1691 = vadd.f32 %v1404, %v1587
    %v1692 = vadd.f32 %v1405, %v1592
    %v1693 = vadd.f32 %v1406, %v1597
    %v1694 = vadd.f32 %v1407, %v1602
    %v1695 = vadd.f32 %v1408, %v1607
    %v1696 = vadd.f32 %v1409, %v1612
    %v1697 = vadd.f32 %v1410, %v1617
    %v1698 = vadd.f32 %v1411, %v1622
    %v1699 = vadd.f32 %v1412, %v1627
    %v1700 = vadd.f32 %v1413, %v1632
    %v1701 = vadd.f32 %v1414, %v1637
    %v1702 = vadd.f32 %v1415, %v1642
    %v1703 = vadd.f32 %v1416, %v1647
    %v1704 = vadd.f32 %v1417, %v1652
    %v1705 = vadd.f32 %v1418, %v1657
    %v1706 = vadd.f32 %v1419, %v1662
    %v1707 = vadd.f32 %v1420, %v1667
    %v1708 = vadd.f32 %v1421, %v1672
    %v1709 = vadd.f32 %v1422, %v1677
    %v1710 = vadd.f32 %v1423, %v1682
    %v1711 = vadd.f32 %v1424, %v1687
    %v1712 = vld [vmem:[%s0 + $0xb9] sm:$0xff]
    %v1713 = vld [vmem:[%s0 + $0xc1] sm:$0xff]
    %v1714 = vld [vmem:[%s0 + $0xc9] sm:$0xff]
    %v1715 = vld [vmem:[%s0 + $0xd1] sm:$0xff]
    %v1716 = vld [vmem:[%s0 + $0xd9] sm:$0xff]
    %v1717 = vld [vmem:[%s0 + $0xe1] sm:$0xff]
    %v1718 = vld [vmem:[%s0 + $0xe9] sm:$0xff]
    %v1719 = vld [vmem:[%s0 + $0xf1] sm:$0xff]
    %v1720 = vld [vmem:[%s0 + $0xf9] sm:$0xff]
    %v1721 = vld [vmem:[%s0 + $0x101] sm:$0xff]
    %v1722 = vld [vmem:[%s0 + $0x109] sm:$0xff]
    %v1723 = vld [vmem:[%s0 + $0x111] sm:$0xff]
    %v1724 = vld [vmem:[%s0 + $0x119] sm:$0xff]
    %v1725 = vld [vmem:[%s0 + $0x121] sm:$0xff]
    %v1726 = vld [vmem:[%s0 + $0x129] sm:$0xff]
    %v1727 = vld [vmem:[%s0 + $0x131] sm:$0xff]
    %v1728 = vld [vmem:[%s0 + $0x139] sm:$0xff]
    %v1729 = vld [vmem:[%s0 + $0x141] sm:$0xff]
    %v1730 = vld [vmem:[%s0 + $0x149] sm:$0xff]
    %v1731 = vld [vmem:[%s0 + $0x151] sm:$0xff]
    %v1732 = vld [vmem:[%s0 + $0x159] sm:$0xff]
    %v1733 = vld [vmem:[%s0 + $0x161] sm:$0xff]
    %s1734 = scalar_lea.vmem %s1, 48
    %v1735 = vld [vmem:[%s1734] sm:$0xff]
    %v1737 = vsel %vm81, %v1712, 0
    %v1740 = vsel %vm81, %v1713, 0
    %v1743 = vsel %vm81, %v1714, 0
    %v1746 = vsel %vm81, %v1715, 0
    %v1749 = vsel %vm81, %v1716, 0
    %v1752 = vsel %vm81, %v1717, 0
    %v1755 = vsel %vm81, %v1718, 0
    %v1758 = vsel %vm81, %v1719, 0
    %v1761 = vsel %vm81, %v1720, 0
    %v1764 = vsel %vm81, %v1721, 0
    %v1767 = vsel %vm81, %v1722, 0
    %v1770 = vsel %vm81, %v1723, 0
    %v1773 = vsel %vm81, %v1724, 0
    %v1776 = vsel %vm81, %v1725, 0
    %v1779 = vsel %vm81, %v1726, 0
    %v1782 = vsel %vm81, %v1727, 0
    %v1785 = vsel %vm81, %v1728, 0
    %v1788 = vsel %vm81, %v1729, 0
    %v1791 = vsel %vm81, %v1730, 0
    %v1794 = vsel %vm81, %v1731, 0
    %v1797 = vsel %vm81, %v1732, 0
    %v1800 = vsel %vm81, %v1733, 0
    %1802 = vmatprep.subr.mxu0 0.0
    %1803 = vmatpush1.msra.mxu0 %v1735
    %1804 = vmatprep.subr.mxu0 0.0
    %1805 = vmatpush1.msra.mxu0 0.0
    %1806 = vmatprep.subr.mxu0 0.0
    %1807 = vmatpush1.msra.mxu0 0.0
    %1808 = vmatprep.subr.mxu0 0.0
    %1809 = vmatpush1.msra.mxu0 0.0
    %1810 = vmatprep.subr.mxu0 0.0
    %1811 = vmatpush1.msra.mxu0 0.0
    %1812 = vmatprep.subr.mxu0 0.0
    %1813 = vmatpush1.msra.mxu0 0.0
    %1814 = vmatprep.subr.mxu0 0.0
    %1815 = vmatpush1.msra.mxu0 0.0
    %1816 = vmatprep.subr.mxu0 0.0
    %1817 = vmatpush1.msra.mxu0 0.0
    %1818 = vmatprep.subr.mxu0 0.0
    %1819 = vmatpush1.msra.mxu0 0.0
    %1820 = vmatprep.subr.mxu0 0.0
    %1821 = vmatpush1.msra.mxu0 0.0
    %1822 = vmatprep.subr.mxu0 0.0
    %1823 = vmatpush1.msra.mxu0 0.0
    %1824 = vmatprep.subr.mxu0 0.0
    %1825 = vmatpush1.msra.mxu0 0.0
    %1826 = vmatprep.subr.mxu0 0.0
    %1827 = vmatpush1.msra.mxu0 0.0
    %1828 = vmatprep.subr.mxu0 0.0
    %1829 = vmatpush1.msra.mxu0 0.0
    %1830 = vmatprep.subr.mxu0 0.0
    %1831 = vmatpush1.msra.mxu0 0.0
    %1832 = vmatprep.subr.mxu0 0.0
    %1833 = vmatpush1.msra.mxu0 0.0
    %1834 = vmatprep.subr.mxu0 0.0
    %1835 = vmatpush1.msra.mxu0 0.0
    %1836 = vmatprep.subr.mxu0 0.0
    %1837 = vmatpush1.msra.mxu0 0.0
    %1838 = vmatprep.subr.mxu0 0.0
    %1839 = vmatpush1.msra.mxu0 0.0
    %1840 = vmatprep.subr.mxu0 0.0
    %1841 = vmatpush1.msra.mxu0 0.0
    %1842 = vmatprep.subr.mxu0 0.0
    %1843 = vmatpush1.msra.mxu0 0.0
    %1844 = vmatprep.subr.mxu0 0.0
    %1845 = vmatpush1.msra.mxu0 0.0
    %1846 = vmatprep.subr.mxu0 0.0
    %1847 = vmatpush1.msra.mxu0 0.0
    %1848 = vmatprep.subr.mxu0 0.0
    %1849 = vmatpush1.msra.mxu0 0.0
    %1850 = vmatprep.subr.mxu0 0.0
    %1851 = vmatpush1.msra.mxu0 0.0
    %1852 = vmatprep.subr.mxu0 0.0
    %1853 = vmatpush1.msra.mxu0 0.0
    %1854 = vmatprep.subr.mxu0 0.0
    %1855 = vmatpush1.msra.mxu0 0.0
    %1856 = vmatprep.subr.mxu0 0.0
    %1857 = vmatpush1.msra.mxu0 0.0
    %1858 = vmatprep.subr.mxu0 0.0
    %1859 = vmatpush1.msra.mxu0 0.0
    %1860 = vmatprep.subr.mxu0 0.0
    %1861 = vmatpush1.msra.mxu0 0.0
    %1862 = vmatprep.subr.mxu0 0.0
    %1863 = vmatpush1.msra.mxu0 0.0
    %1864 = vmatprep.subr.mxu0 0.0
    %1865 = vmatpush1.msra.mxu0 0.0
    %1866 = vmatprep.mubr.f32.mxu0 0.0
    %1867 = vmatmul.mubr.f32.gmra.mrb[0].mxu0 %v1737
    %v1868 = vpop.f32.mrb[0].mxu0
    %v1869 = vadd.f32 0.0, %v1868
    %v1870 = vpop.f32.mrb[0].mxu0
    %1871 = vmatprep.mubr.f32.mxu0 0.0
    %1872 = vmatmul.mubr.f32.gmra.mrb[0].mxu0 %v1740
    %v1873 = vpop.f32.mrb[0].mxu0
    %v1874 = vadd.f32 0.0, %v1873
    %v1875 = vpop.f32.mrb[0].mxu0
    %1876 = vmatprep.mubr.f32.mxu0 0.0
    %1877 = vmatmul.mubr.f32.gmra.mrb[0].mxu0 %v1743
    %v1878 = vpop.f32.mrb[0].mxu0
    %v1879 = vadd.f32 0.0, %v1878
    %v1880 = vpop.f32.mrb[0].mxu0
    %1881 = vmatprep.mubr.f32.mxu0 0.0
    %1882 = vmatmul.mubr.f32.gmra.mrb[0].mxu0 %v1746
    %v1883 = vpop.f32.mrb[0].mxu0
    %v1884 = vadd.f32 0.0, %v1883
    %v1885 = vpop.f32.mrb[0].mxu0
    %1886 = vmatprep.mubr.f32.mxu0 0.0
    %1887 = vmatmul.mubr.f32.gmra.mrb[0].mxu0 %v1749
    %v1888 = vpop.f32.mrb[0].mxu0
    %v1889 = vadd.f32 0.0, %v1888
    %v1890 = vpop.f32.mrb[0].mxu0
    %1891 = vmatprep.mubr.f32.mxu0 0.0
    %1892 = vmatmul.mubr.f32.gmra.mrb[0].mxu0 %v1752
    %v1893 = vpop.f32.mrb[0].mxu0
    %v1894 = vadd.f32 0.0, %v1893
    %v1895 = vpop.f32.mrb[0].mxu0
    %1896 = vmatprep.mubr.f32.mxu0 0.0
    %1897 = vmatmul.mubr.f32.gmra.mrb[0].mxu0 %v1755
    %v1898 = vpop.f32.mrb[0].mxu0
    %v1899 = vadd.f32 0.0, %v1898
    %v1900 = vpop.f32.mrb[0].mxu0
    %1901 = vmatprep.mubr.f32.mxu0 0.0
    %1902 = vmatmul.mubr.f32.gmra.mrb[0].mxu0 %v1758
    %v1903 = vpop.f32.mrb[0].mxu0
    %v1904 = vadd.f32 0.0, %v1903
    %v1905 = vpop.f32.mrb[0].mxu0
    %1906 = vmatprep.mubr.f32.mxu0 0.0
    %1907 = vmatmul.mubr.f32.gmra.mrb[0].mxu0 %v1761
    %v1908 = vpop.f32.mrb[0].mxu0
    %v1909 = vadd.f32 0.0, %v1908
    %v1910 = vpop.f32.mrb[0].mxu0
    %1911 = vmatprep.mubr.f32.mxu0 0.0
    %1912 = vmatmul.mubr.f32.gmra.mrb[0].mxu0 %v1764
    %v1913 = vpop.f32.mrb[0].mxu0
    %v1914 = vadd.f32 0.0, %v1913
    %v1915 = vpop.f32.mrb[0].mxu0
    %1916 = vmatprep.mubr.f32.mxu0 0.0
    %1917 = vmatmul.mubr.f32.gmra.mrb[0].mxu0 %v1767
    %v1918 = vpop.f32.mrb[0].mxu0
    %v1919 = vadd.f32 0.0, %v1918
    %v1920 = vpop.f32.mrb[0].mxu0
    %1921 = vmatprep.mubr.f32.mxu0 0.0
    %1922 = vmatmul.mubr.f32.gmra.mrb[0].mxu0 %v1770
    %v1923 = vpop.f32.mrb[0].mxu0
    %v1924 = vadd.f32 0.0, %v1923
    %v1925 = vpop.f32.mrb[0].mxu0
    %1926 = vmatprep.mubr.f32.mxu0 0.0
    %1927 = vmatmul.mubr.f32.gmra.mrb[0].mxu0 %v1773
    %v1928 = vpop.f32.mrb[0].mxu0
    %v1929 = vadd.f32 0.0, %v1928
    %v1930 = vpop.f32.mrb[0].mxu0
    %1931 = vmatprep.mubr.f32.mxu0 0.0
    %1932 = vmatmul.mubr.f32.gmra.mrb[0].mxu0 %v1776
    %v1933 = vpop.f32.mrb[0].mxu0
    %v1934 = vadd.f32 0.0, %v1933
    %v1935 = vpop.f32.mrb[0].mxu0
    %1936 = vmatprep.mubr.f32.mxu0 0.0
    %1937 = vmatmul.mubr.f32.gmra.mrb[0].mxu0 %v1779
    %v1938 = vpop.f32.mrb[0].mxu0
    %v1939 = vadd.f32 0.0, %v1938
    %v1940 = vpop.f32.mrb[0].mxu0
    %1941 = vmatprep.mubr.f32.mxu0 0.0
    %1942 = vmatmul.mubr.f32.gmra.mrb[0].mxu0 %v1782
    %v1943 = vpop.f32.mrb[0].mxu0
    %v1944 = vadd.f32 0.0, %v1943
    %v1945 = vpop.f32.mrb[0].mxu0
    %1946 = vmatprep.mubr.f32.mxu0 0.0
    %1947 = vmatmul.mubr.f32.gmra.mrb[0].mxu0 %v1785
    %v1948 = vpop.f32.mrb[0].mxu0
    %v1949 = vadd.f32 0.0, %v1948
    %v1950 = vpop.f32.mrb[0].mxu0
    %1951 = vmatprep.mubr.f32.mxu0 0.0
    %1952 = vmatmul.mubr.f32.gmra.mrb[0].mxu0 %v1788
    %v1953 = vpop.f32.mrb[0].mxu0
    %v1954 = vadd.f32 0.0, %v1953
    %v1955 = vpop.f32.mrb[0].mxu0
    %1956 = vmatprep.mubr.f32.mxu0 0.0
    %1957 = vmatmul.mubr.f32.gmra.mrb[0].mxu0 %v1791
    %v1958 = vpop.f32.mrb[0].mxu0
    %v1959 = vadd.f32 0.0, %v1958
    %v1960 = vpop.f32.mrb[0].mxu0
    %1961 = vmatprep.mubr.f32.mxu0 0.0
    %1962 = vmatmul.mubr.f32.gmra.mrb[0].mxu0 %v1794
    %v1963 = vpop.f32.mrb[0].mxu0
    %v1964 = vadd.f32 0.0, %v1963
    %v1965 = vpop.f32.mrb[0].mxu0
    %1966 = vmatprep.mubr.f32.mxu0 0.0
    %1967 = vmatmul.mubr.f32.gmra.mrb[0].mxu0 %v1797
    %v1968 = vpop.f32.mrb[0].mxu0
    %v1969 = vadd.f32 0.0, %v1968
    %v1970 = vpop.f32.mrb[0].mxu0
    %1971 = vmatprep.mubr.f32.mxu0 0.0
    %1972 = vmatmul.mubr.f32.gmra.mrb[0].mxu0 %v1800
    %v1973 = vpop.f32.mrb[0].mxu0
    %v1974 = vadd.f32 0.0, %v1973
    %v1975 = vpop.f32.mrb[0].mxu0
    %1976 = vdwg.mxu0
    %v1977 = vadd.f32 %v1690, %v1869
    %v1978 = vadd.f32 %v1691, %v1874
    %v1979 = vadd.f32 %v1692, %v1879
    %v1980 = vadd.f32 %v1693, %v1884
    %v1981 = vadd.f32 %v1694, %v1889
    %v1982 = vadd.f32 %v1695, %v1894
    %v1983 = vadd.f32 %v1696, %v1899
    %v1984 = vadd.f32 %v1697, %v1904
    %v1985 = vadd.f32 %v1698, %v1909
    %v1986 = vadd.f32 %v1699, %v1914
    %v1987 = vadd.f32 %v1700, %v1919
    %v1988 = vadd.f32 %v1701, %v1924
    %v1989 = vadd.f32 %v1702, %v1929
    %v1990 = vadd.f32 %v1703, %v1934
    %v1991 = vadd.f32 %v1704, %v1939
    %v1992 = vadd.f32 %v1705, %v1944
    %v1993 = vadd.f32 %v1706, %v1949
    %v1994 = vadd.f32 %v1707, %v1954
    %v1995 = vadd.f32 %v1708, %v1959
    %v1996 = vadd.f32 %v1709, %v1964
    %v1997 = vadd.f32 %v1710, %v1969
    %v1998 = vadd.f32 %v1711, %v1974
    %v1999 = vld [vmem:[%s0 + $0xba] sm:$0xff]
    %v2000 = vld [vmem:[%s0 + $0xc2] sm:$0xff]
    %v2001 = vld [vmem:[%s0 + $0xca] sm:$0xff]
    %v2002 = vld [vmem:[%s0 + $0xd2] sm:$0xff]
    %v2003 = vld [vmem:[%s0 + $0xda] sm:$0xff]
    %v2004 = vld [vmem:[%s0 + $0xe2] sm:$0xff]
    %v2005 = vld [vmem:[%s0 + $0xea] sm:$0xff]
    %v2006 = vld [vmem:[%s0 + $0xf2] sm:$0xff]
    %v2007 = vld [vmem:[%s0 + $0xfa] sm:$0xff]
    %v2008 = vld [vmem:[%s0 + $0x102] sm:$0xff]
    %v2009 = vld [vmem:[%s0 + $0x10a] sm:$0xff]
    %v2010 = vld [vmem:[%s0 + $0x112] sm:$0xff]
    %v2011 = vld [vmem:[%s0 + $0x11a] sm:$0xff]
    %v2012 = vld [vmem:[%s0 + $0x122] sm:$0xff]
    %v2013 = vld [vmem:[%s0 + $0x12a] sm:$0xff]
    %v2014 = vld [vmem:[%s0 + $0x132] sm:$0xff]
    %v2015 = vld [vmem:[%s0 + $0x13a] sm:$0xff]
    %v2016 = vld [vmem:[%s0 + $0x142] sm:$0xff]
    %v2017 = vld [vmem:[%s0 + $0x14a] sm:$0xff]
    %v2018 = vld [vmem:[%s0 + $0x152] sm:$0xff]
    %v2019 = vld [vmem:[%s0 + $0x15a] sm:$0xff]
    %v2020 = vld [vmem:[%s0 + $0x162] sm:$0xff]
    %s2021 = scalar_lea.vmem %s1, 56
    %v2022 = vld [vmem:[%s2021] sm:$0xff]
    %v2024 = vsel %vm81, %v1999, 0
    %v2027 = vsel %vm81, %v2000, 0
    %v2030 = vsel %vm81, %v2001, 0
    %v2033 = vsel %vm81, %v2002, 0
    %v2036 = vsel %vm81, %v2003, 0
    %v2039 = vsel %vm81, %v2004, 0
    %v2042 = vsel %vm81, %v2005, 0
    %v2045 = vsel %vm81, %v2006, 0
    %v2048 = vsel %vm81, %v2007, 0
    %v2051 = vsel %vm81, %v2008, 0
    %v2054 = vsel %vm81, %v2009, 0
    %v2057 = vsel %vm81, %v2010, 0
    %v2060 = vsel %vm81, %v2011, 0
    %v2063 = vsel %vm81, %v2012, 0
    %v2066 = vsel %vm81, %v2013, 0
    %v2069 = vsel %vm81, %v2014, 0
    %v2072 = vsel %vm81, %v2015, 0
    %v2075 = vsel %vm81, %v2016, 0
    %v2078 = vsel %vm81, %v2017, 0
    %v2081 = vsel %vm81, %v2018, 0
    %v2084 = vsel %vm81, %v2019, 0
    %v2087 = vsel %vm81, %v2020, 0
    %2089 = vmatprep.subr.mxu0 0.0
    %2090 = vmatpush1.msra.mxu0 %v2022
    %2091 = vmatprep.subr.mxu0 0.0
    %2092 = vmatpush1.msra.mxu0 0.0
    %2093 = vmatprep.subr.mxu0 0.0
    %2094 = vmatpush1.msra.mxu0 0.0
    %2095 = vmatprep.subr.mxu0 0.0
    %2096 = vmatpush1.msra.mxu0 0.0
    %2097 = vmatprep.subr.mxu0 0.0
    %2098 = vmatpush1.msra.mxu0 0.0
    %2099 = vmatprep.subr.mxu0 0.0
    %2100 = vmatpush1.msra.mxu0 0.0
    %2101 = vmatprep.subr.mxu0 0.0
    %2102 = vmatpush1.msra.mxu0 0.0
    %2103 = vmatprep.subr.mxu0 0.0
    %2104 = vmatpush1.msra.mxu0 0.0
    %2105 = vmatprep.subr.mxu0 0.0
    %2106 = vmatpush1.msra.mxu0 0.0
    %2107 = vmatprep.subr.mxu0 0.0
    %2108 = vmatpush1.msra.mxu0 0.0
    %2109 = vmatprep.subr.mxu0 0.0
    %2110 = vmatpush1.msra.mxu0 0.0
    %2111 = vmatprep.subr.mxu0 0.0
    %2112 = vmatpush1.msra.mxu0 0.0
    %2113 = vmatprep.subr.mxu0 0.0
    %2114 = vmatpush1.msra.mxu0 0.0
    %2115 = vmatprep.subr.mxu0 0.0
    %2116 = vmatpush1.msra.mxu0 0.0
    %2117 = vmatprep.subr.mxu0 0.0
    %2118 = vmatpush1.msra.mxu0 0.0
    %2119 = vmatprep.subr.mxu0 0.0
    %2120 = vmatpush1.msra.mxu0 0.0
    %2121 = vmatprep.subr.mxu0 0.0
    %2122 = vmatpush1.msra.mxu0 0.0
    %2123 = vmatprep.subr.mxu0 0.0
    %2124 = vmatpush1.msra.mxu0 0.0
    %2125 = vmatprep.subr.mxu0 0.0
    %2126 = vmatpush1.msra.mxu0 0.0
    %2127 = vmatprep.subr.mxu0 0.0
    %2128 = vmatpush1.msra.mxu0 0.0
    %2129 = vmatprep.subr.mxu0 0.0
    %2130 = vmatpush1.msra.mxu0 0.0
    %2131 = vmatprep.subr.mxu0 0.0
    %2132 = vmatpush1.msra.mxu0 0.0
    %2133 = vmatprep.subr.mxu0 0.0
    %2134 = vmatpush1.msra.mxu0 0.0
    %2135 = vmatprep.subr.mxu0 0.0
    %2136 = vmatpush1.msra.mxu0 0.0
    %2137 = vmatprep.subr.mxu0 0.0
    %2138 = vmatpush1.msra.mxu0 0.0
    %2139 = vmatprep.subr.mxu0 0.0
    %2140 = vmatpush1.msra.mxu0 0.0
    %2141 = vmatprep.subr.mxu0 0.0
    %2142 = vmatpush1.msra.mxu0 0.0
    %2143 = vmatprep.subr.mxu0 0.0
    %2144 = vmatpush1.msra.mxu0 0.0
    %2145 = vmatprep.subr.mxu0 0.0
    %2146 = vmatpush1.msra.mxu0 0.0
    %2147 = vmatprep.subr.mxu0 0.0
    %2148 = vmatpush1.msra.mxu0 0.0
    %2149 = vmatprep.subr.mxu0 0.0
    %2150 = vmatpush1.msra.mxu0 0.0
    %2151 = vmatprep.subr.mxu0 0.0
    %2152 = vmatpush1.msra.mxu0 0.0
    %2153 = vmatprep.mubr.f32.mxu0 0.0
    %2154 = vmatmul.mubr.f32.gmra.mrb[0].mxu0 %v2024
    %v2155 = vpop.f32.mrb[0].mxu0
    %v2156 = vadd.f32 0.0, %v2155
    %v2157 = vpop.f32.mrb[0].mxu0
    %2158 = vmatprep.mubr.f32.mxu0 0.0
    %2159 = vmatmul.mubr.f32.gmra.mrb[0].mxu0 %v2027
    %v2160 = vpop.f32.mrb[0].mxu0
    %v2161 = vadd.f32 0.0, %v2160
    %v2162 = vpop.f32.mrb[0].mxu0
    %2163 = vmatprep.mubr.f32.mxu0 0.0
    %2164 = vmatmul.mubr.f32.gmra.mrb[0].mxu0 %v2030
    %v2165 = vpop.f32.mrb[0].mxu0
    %v2166 = vadd.f32 0.0, %v2165
    %v2167 = vpop.f32.mrb[0].mxu0
    %2168 = vmatprep.mubr.f32.mxu0 0.0
    %2169 = vmatmul.mubr.f32.gmra.mrb[0].mxu0 %v2033
    %v2170 = vpop.f32.mrb[0].mxu0
    %v2171 = vadd.f32 0.0, %v2170
    %v2172 = vpop.f32.mrb[0].mxu0
    %2173 = vmatprep.mubr.f32.mxu0 0.0
    %2174 = vmatmul.mubr.f32.gmra.mrb[0].mxu0 %v2036
    %v2175 = vpop.f32.mrb[0].mxu0
    %v2176 = vadd.f32 0.0, %v2175
    %v2177 = vpop.f32.mrb[0].mxu0
    %2178 = vmatprep.mubr.f32.mxu0 0.0
    %2179 = vmatmul.mubr.f32.gmra.mrb[0].mxu0 %v2039
    %v2180 = vpop.f32.mrb[0].mxu0
    %v2181 = vadd.f32 0.0, %v2180
    %v2182 = vpop.f32.mrb[0].mxu0
    %2183 = vmatprep.mubr.f32.mxu0 0.0
    %2184 = vmatmul.mubr.f32.gmra.mrb[0].mxu0 %v2042
    %v2185 = vpop.f32.mrb[0].mxu0
    %v2186 = vadd.f32 0.0, %v2185
    %v2187 = vpop.f32.mrb[0].mxu0
    %2188 = vmatprep.mubr.f32.mxu0 0.0
    %2189 = vmatmul.mubr.f32.gmra.mrb[0].mxu0 %v2045
    %v2190 = vpop.f32.mrb[0].mxu0
    %v2191 = vadd.f32 0.0, %v2190
    %v2192 = vpop.f32.mrb[0].mxu0
    %2193 = vmatprep.mubr.f32.mxu0 0.0
    %2194 = vmatmul.mubr.f32.gmra.mrb[0].mxu0 %v2048
    %v2195 = vpop.f32.mrb[0].mxu0
    %v2196 = vadd.f32 0.0, %v2195
    %v2197 = vpop.f32.mrb[0].mxu0
    %2198 = vmatprep.mubr.f32.mxu0 0.0
    %2199 = vmatmul.mubr.f32.gmra.mrb[0].mxu0 %v2051
    %v2200 = vpop.f32.mrb[0].mxu0
    %v2201 = vadd.f32 0.0, %v2200
    %v2202 = vpop.f32.mrb[0].mxu0
    %2203 = vmatprep.mubr.f32.mxu0 0.0
    %2204 = vmatmul.mubr.f32.gmra.mrb[0].mxu0 %v2054
    %v2205 = vpop.f32.mrb[0].mxu0
    %v2206 = vadd.f32 0.0, %v2205
    %v2207 = vpop.f32.mrb[0].mxu0
    %2208 = vmatprep.mubr.f32.mxu0 0.0
    %2209 = vmatmul.mubr.f32.gmra.mrb[0].mxu0 %v2057
    %v2210 = vpop.f32.mrb[0].mxu0
    %v2211 = vadd.f32 0.0, %v2210
    %v2212 = vpop.f32.mrb[0].mxu0
    %2213 = vmatprep.mubr.f32.mxu0 0.0
    %2214 = vmatmul.mubr.f32.gmra.mrb[0].mxu0 %v2060
    %v2215 = vpop.f32.mrb[0].mxu0
    %v2216 = vadd.f32 0.0, %v2215
    %v2217 = vpop.f32.mrb[0].mxu0
    %2218 = vmatprep.mubr.f32.mxu0 0.0
    %2219 = vmatmul.mubr.f32.gmra.mrb[0].mxu0 %v2063
    %v2220 = vpop.f32.mrb[0].mxu0
    %v2221 = vadd.f32 0.0, %v2220
    %v2222 = vpop.f32.mrb[0].mxu0
    %2223 = vmatprep.mubr.f32.mxu0 0.0
    %2224 = vmatmul.mubr.f32.gmra.mrb[0].mxu0 %v2066
    %v2225 = vpop.f32.mrb[0].mxu0
    %v2226 = vadd.f32 0.0, %v2225
    %v2227 = vpop.f32.mrb[0].mxu0
    %2228 = vmatprep.mubr.f32.mxu0 0.0
    %2229 = vmatmul.mubr.f32.gmra.mrb[0].mxu0 %v2069
    %v2230 = vpop.f32.mrb[0].mxu0
    %v2231 = vadd.f32 0.0, %v2230
    %v2232 = vpop.f32.mrb[0].mxu0
    %2233 = vmatprep.mubr.f32.mxu0 0.0
    %2234 = vmatmul.mubr.f32.gmra.mrb[0].mxu0 %v2072
    %v2235 = vpop.f32.mrb[0].mxu0
    %v2236 = vadd.f32 0.0, %v2235
    %v2237 = vpop.f32.mrb[0].mxu0
    %2238 = vmatprep.mubr.f32.mxu0 0.0
    %2239 = vmatmul.mubr.f32.gmra.mrb[0].mxu0 %v2075
    %v2240 = vpop.f32.mrb[0].mxu0
    %v2241 = vadd.f32 0.0, %v2240
    %v2242 = vpop.f32.mrb[0].mxu0
    %2243 = vmatprep.mubr.f32.mxu0 0.0
    %2244 = vmatmul.mubr.f32.gmra.mrb[0].mxu0 %v2078
    %v2245 = vpop.f32.mrb[0].mxu0
    %v2246 = vadd.f32 0.0, %v2245
    %v2247 = vpop.f32.mrb[0].mxu0
    %2248 = vmatprep.mubr.f32.mxu0 0.0
    %2249 = vmatmul.mubr.f32.gmra.mrb[0].mxu0 %v2081
    %v2250 = vpop.f32.mrb[0].mxu0
    %v2251 = vadd.f32 0.0, %v2250
    %v2252 = vpop.f32.mrb[0].mxu0
    %2253 = vmatprep.mubr.f32.mxu0 0.0
    %2254 = vmatmul.mubr.f32.gmra.mrb[0].mxu0 %v2084
    %v2255 = vpop.f32.mrb[0].mxu0
    %v2256 = vadd.f32 0.0, %v2255
    %v2257 = vpop.f32.mrb[0].mxu0
    %2258 = vmatprep.mubr.f32.mxu0 0.0
    %2259 = vmatmul.mubr.f32.gmra.mrb[0].mxu0 %v2087
    %v2260 = vpop.f32.mrb[0].mxu0
    %v2261 = vadd.f32 0.0, %v2260
    %v2262 = vpop.f32.mrb[0].mxu0
    %2263 = vdwg.mxu0
    %v2264 = vadd.f32 %v1977, %v2156
    %v2265 = vadd.f32 %v1978, %v2161
    %v2266 = vadd.f32 %v1979, %v2166
    %v2267 = vadd.f32 %v1980, %v2171
    %v2268 = vadd.f32 %v1981, %v2176
    %v2269 = vadd.f32 %v1982, %v2181
    %v2270 = vadd.f32 %v1983, %v2186
    %v2271 = vadd.f32 %v1984, %v2191
    %v2272 = vadd.f32 %v1985, %v2196
    %v2273 = vadd.f32 %v1986, %v2201
    %v2274 = vadd.f32 %v1987, %v2206
    %v2275 = vadd.f32 %v1988, %v2211
    %v2276 = vadd.f32 %v1989, %v2216
    %v2277 = vadd.f32 %v1990, %v2221
    %v2278 = vadd.f32 %v1991, %v2226
    %v2279 = vadd.f32 %v1992, %v2231
    %v2280 = vadd.f32 %v1993, %v2236
    %v2281 = vadd.f32 %v1994, %v2241
    %v2282 = vadd.f32 %v1995, %v2246
    %v2283 = vadd.f32 %v1996, %v2251
    %v2284 = vadd.f32 %v1997, %v2256
    %v2285 = vadd.f32 %v1998, %v2261
    %v2286 = vld [vmem:[%s0 + $0x160] sm:$0xff]
    %v2287 = vld [vmem:[%s0 + $0x168] sm:$0xff]
    %v2288 = vld [vmem:[%s0 + $0x170] sm:$0xff]
    %v2289 = vld [vmem:[%s0 + $0x178] sm:$0xff]
    %v2290 = vld [vmem:[%s0 + $0x180] sm:$0xff]
    %v2291 = vld [vmem:[%s0 + $0x188] sm:$0xff]
    %v2292 = vld [vmem:[%s0 + $0x190] sm:$0xff]
    %v2293 = vld [vmem:[%s0 + $0x198] sm:$0xff]
    %v2294 = vld [vmem:[%s0 + $0x1a0] sm:$0xff]
    %v2295 = vld [vmem:[%s0 + $0x1a8] sm:$0xff]
    %v2296 = vld [vmem:[%s0 + $0x1b0] sm:$0xff]
    %v2297 = vld [vmem:[%s0 + $0x1b8] sm:$0xff]
    %v2298 = vld [vmem:[%s0 + $0x1c0] sm:$0xff]
    %v2299 = vld [vmem:[%s0 + $0x1c8] sm:$0xff]
    %v2300 = vld [vmem:[%s0 + $0x1d0] sm:$0xff]
    %v2301 = vld [vmem:[%s0 + $0x1d8] sm:$0xff]
    %v2302 = vld [vmem:[%s0 + $0x1e0] sm:$0xff]
    %v2303 = vld [vmem:[%s0 + $0x1e8] sm:$0xff]
    %v2304 = vld [vmem:[%s0 + $0x1f0] sm:$0xff]
    %v2305 = vld [vmem:[%s0 + $0x1f8] sm:$0xff]
    %v2306 = vld [vmem:[%s0 + $0x200] sm:$0xff]
    %v2307 = vld [vmem:[%s0 + $0x208] sm:$0xff]
    %s2308 = scalar_lea.vmem %s1, 64
    %v2309 = vld [vmem:[%s2308] sm:$0xff]
    %v2311 = vsel %vm81, %v2286, 0
    %v2314 = vsel %vm81, %v2287, 0
    %v2317 = vsel %vm81, %v2288, 0
    %v2320 = vsel %vm81, %v2289, 0
    %v2323 = vsel %vm81, %v2290, 0
    %v2326 = vsel %vm81, %v2291, 0
    %v2329 = vsel %vm81, %v2292, 0
    %v2332 = vsel %vm81, %v2293, 0
    %v2335 = vsel %vm81, %v2294, 0
    %v2338 = vsel %vm81, %v2295, 0
    %v2341 = vsel %vm81, %v2296, 0
    %v2344 = vsel %vm81, %v2297, 0
    %v2347 = vsel %vm81, %v2298, 0
    %v2350 = vsel %vm81, %v2299, 0
    %v2353 = vsel %vm81, %v2300, 0
    %v2356 = vsel %vm81, %v2301, 0
    %v2359 = vsel %vm81, %v2302, 0
    %v2362 = vsel %vm81, %v2303, 0
    %v2365 = vsel %vm81, %v2304, 0
    %v2368 = vsel %vm81, %v2305, 0
    %v2371 = vsel %vm81, %v2306, 0
    %v2374 = vsel %vm81, %v2307, 0
    %2376 = vmatprep.subr.mxu0 0.0
    %2377 = vmatpush1.msra.mxu0 %v2309
    %2378 = vmatprep.subr.mxu0 0.0
    %2379 = vmatpush1.msra.mxu0 0.0
    %2380 = vmatprep.subr.mxu0 0.0
    %2381 = vmatpush1.msra.mxu0 0.0
    %2382 = vmatprep.subr.mxu0 0.0
    %2383 = vmatpush1.msra.mxu0 0.0
    %2384 = vmatprep.subr.mxu0 0.0
    %2385 = vmatpush1.msra.mxu0 0.0
    %2386 = vmatprep.subr.mxu0 0.0
    %2387 = vmatpush1.msra.mxu0 0.0
    %2388 = vmatprep.subr.mxu0 0.0
    %2389 = vmatpush1.msra.mxu0 0.0
    %2390 = vmatprep.subr.mxu0 0.0
    %2391 = vmatpush1.msra.mxu0 0.0
    %2392 = vmatprep.subr.mxu0 0.0
    %2393 = vmatpush1.msra.mxu0 0.0
    %2394 = vmatprep.subr.mxu0 0.0
    %2395 = vmatpush1.msra.mxu0 0.0
    %2396 = vmatprep.subr.mxu0 0.0
    %2397 = vmatpush1.msra.mxu0 0.0
    %2398 = vmatprep.subr.mxu0 0.0
    %2399 = vmatpush1.msra.mxu0 0.0
    %2400 = vmatprep.subr.mxu0 0.0
    %2401 = vmatpush1.msra.mxu0 0.0
    %2402 = vmatprep.subr.mxu0 0.0
    %2403 = vmatpush1.msra.mxu0 0.0
    %2404 = vmatprep.subr.mxu0 0.0
    %2405 = vmatpush1.msra.mxu0 0.0
    %2406 = vmatprep.subr.mxu0 0.0
    %2407 = vmatpush1.msra.mxu0 0.0
    %2408 = vmatprep.subr.mxu0 0.0
    %2409 = vmatpush1.msra.mxu0 0.0
    %2410 = vmatprep.subr.mxu0 0.0
    %2411 = vmatpush1.msra.mxu0 0.0
    %2412 = vmatprep.subr.mxu0 0.0
    %2413 = vmatpush1.msra.mxu0 0.0
    %2414 = vmatprep.subr.mxu0 0.0
    %2415 = vmatpush1.msra.mxu0 0.0
    %2416 = vmatprep.subr.mxu0 0.0
    %2417 = vmatpush1.msra.mxu0 0.0
    %2418 = vmatprep.subr.mxu0 0.0
    %2419 = vmatpush1.msra.mxu0 0.0
    %2420 = vmatprep.subr.mxu0 0.0
    %2421 = vmatpush1.msra.mxu0 0.0
    %2422 = vmatprep.subr.mxu0 0.0
    %2423 = vmatpush1.msra.mxu0 0.0
    %2424 = vmatprep.subr.mxu0 0.0
    %2425 = vmatpush1.msra.mxu0 0.0
    %2426 = vmatprep.subr.mxu0 0.0
    %2427 = vmatpush1.msra.mxu0 0.0
    %2428 = vmatprep.subr.mxu0 0.0
    %2429 = vmatpush1.msra.mxu0 0.0
    %2430 = vmatprep.subr.mxu0 0.0
    %2431 = vmatpush1.msra.mxu0 0.0
    %2432 = vmatprep.subr.mxu0 0.0
    %2433 = vmatpush1.msra.mxu0 0.0
    %2434 = vmatprep.subr.mxu0 0.0
    %2435 = vmatpush1.msra.mxu0 0.0
    %2436 = vmatprep.subr.mxu0 0.0
    %2437 = vmatpush1.msra.mxu0 0.0
    %2438 = vmatprep.subr.mxu0 0.0
    %2439 = vmatpush1.msra.mxu0 0.0
    %2440 = vmatprep.mubr.f32.mxu0 0.0
    %2441 = vmatmul.mubr.f32.gmra.mrb[0].mxu0 %v2311
    %v2442 = vpop.f32.mrb[0].mxu0
    %v2443 = vadd.f32 0.0, %v2442
    %v2444 = vpop.f32.mrb[0].mxu0
    %2445 = vmatprep.mubr.f32.mxu0 0.0
    %2446 = vmatmul.mubr.f32.gmra.mrb[0].mxu0 %v2314
    %v2447 = vpop.f32.mrb[0].mxu0
    %v2448 = vadd.f32 0.0, %v2447
    %v2449 = vpop.f32.mrb[0].mxu0
    %2450 = vmatprep.mubr.f32.mxu0 0.0
    %2451 = vmatmul.mubr.f32.gmra.mrb[0].mxu0 %v2317
    %v2452 = vpop.f32.mrb[0].mxu0
    %v2453 = vadd.f32 0.0, %v2452
    %v2454 = vpop.f32.mrb[0].mxu0
    %2455 = vmatprep.mubr.f32.mxu0 0.0
    %2456 = vmatmul.mubr.f32.gmra.mrb[0].mxu0 %v2320
    %v2457 = vpop.f32.mrb[0].mxu0
    %v2458 = vadd.f32 0.0, %v2457
    %v2459 = vpop.f32.mrb[0].mxu0
    %2460 = vmatprep.mubr.f32.mxu0 0.0
    %2461 = vmatmul.mubr.f32.gmra.mrb[0].mxu0 %v2323
    %v2462 = vpop.f32.mrb[0].mxu0
    %v2463 = vadd.f32 0.0, %v2462
    %v2464 = vpop.f32.mrb[0].mxu0
    %2465 = vmatprep.mubr.f32.mxu0 0.0
    %2466 = vmatmul.mubr.f32.gmra.mrb[0].mxu0 %v2326
    %v2467 = vpop.f32.mrb[0].mxu0
    %v2468 = vadd.f32 0.0, %v2467
    %v2469 = vpop.f32.mrb[0].mxu0
    %2470 = vmatprep.mubr.f32.mxu0 0.0
    %2471 = vmatmul.mubr.f32.gmra.mrb[0].mxu0 %v2329
    %v2472 = vpop.f32.mrb[0].mxu0
    %v2473 = vadd.f32 0.0, %v2472
    %v2474 = vpop.f32.mrb[0].mxu0
    %2475 = vmatprep.mubr.f32.mxu0 0.0
    %2476 = vmatmul.mubr.f32.gmra.mrb[0].mxu0 %v2332
    %v2477 = vpop.f32.mrb[0].mxu0
    %v2478 = vadd.f32 0.0, %v2477
    %v2479 = vpop.f32.mrb[0].mxu0
    %2480 = vmatprep.mubr.f32.mxu0 0.0
    %2481 = vmatmul.mubr.f32.gmra.mrb[0].mxu0 %v2335
    %v2482 = vpop.f32.mrb[0].mxu0
    %v2483 = vadd.f32 0.0, %v2482
    %v2484 = vpop.f32.mrb[0].mxu0
    %2485 = vmatprep.mubr.f32.mxu0 0.0
    %2486 = vmatmul.mubr.f32.gmra.mrb[0].mxu0 %v2338
    %v2487 = vpop.f32.mrb[0].mxu0
    %v2488 = vadd.f32 0.0, %v2487
    %v2489 = vpop.f32.mrb[0].mxu0
    %2490 = vmatprep.mubr.f32.mxu0 0.0
    %2491 = vmatmul.mubr.f32.gmra.mrb[0].mxu0 %v2341
    %v2492 = vpop.f32.mrb[0].mxu0
    %v2493 = vadd.f32 0.0, %v2492
    %v2494 = vpop.f32.mrb[0].mxu0
    %2495 = vmatprep.mubr.f32.mxu0 0.0
    %2496 = vmatmul.mubr.f32.gmra.mrb[0].mxu0 %v2344
    %v2497 = vpop.f32.mrb[0].mxu0
    %v2498 = vadd.f32 0.0, %v2497
    %v2499 = vpop.f32.mrb[0].mxu0
    %2500 = vmatprep.mubr.f32.mxu0 0.0
    %2501 = vmatmul.mubr.f32.gmra.mrb[0].mxu0 %v2347
    %v2502 = vpop.f32.mrb[0].mxu0
    %v2503 = vadd.f32 0.0, %v2502
    %v2504 = vpop.f32.mrb[0].mxu0
    %2505 = vmatprep.mubr.f32.mxu0 0.0
    %2506 = vmatmul.mubr.f32.gmra.mrb[0].mxu0 %v2350
    %v2507 = vpop.f32.mrb[0].mxu0
    %v2508 = vadd.f32 0.0, %v2507
    %v2509 = vpop.f32.mrb[0].mxu0
    %2510 = vmatprep.mubr.f32.mxu0 0.0
    %2511 = vmatmul.mubr.f32.gmra.mrb[0].mxu0 %v2353
    %v2512 = vpop.f32.mrb[0].mxu0
    %v2513 = vadd.f32 0.0, %v2512
    %v2514 = vpop.f32.mrb[0].mxu0
    %2515 = vmatprep.mubr.f32.mxu0 0.0
    %2516 = vmatmul.mubr.f32.gmra.mrb[0].mxu0 %v2356
    %v2517 = vpop.f32.mrb[0].mxu0
    %v2518 = vadd.f32 0.0, %v2517
    %v2519 = vpop.f32.mrb[0].mxu0
    %2520 = vmatprep.mubr.f32.mxu0 0.0
    %2521 = vmatmul.mubr.f32.gmra.mrb[0].mxu0 %v2359
    %v2522 = vpop.f32.mrb[0].mxu0
    %v2523 = vadd.f32 0.0, %v2522
    %v2524 = vpop.f32.mrb[0].mxu0
    %2525 = vmatprep.mubr.f32.mxu0 0.0
    %2526 = vmatmul.mubr.f32.gmra.mrb[0].mxu0 %v2362
    %v2527 = vpop.f32.mrb[0].mxu0
    %v2528 = vadd.f32 0.0, %v2527
    %v2529 = vpop.f32.mrb[0].mxu0
    %2530 = vmatprep.mubr.f32.mxu0 0.0
    %2531 = vmatmul.mubr.f32.gmra.mrb[0].mxu0 %v2365
    %v2532 = vpop.f32.mrb[0].mxu0
    %v2533 = vadd.f32 0.0, %v2532
    %v2534 = vpop.f32.mrb[0].mxu0
    %2535 = vmatprep.mubr.f32.mxu0 0.0
    %2536 = vmatmul.mubr.f32.gmra.mrb[0].mxu0 %v2368
    %v2537 = vpop.f32.mrb[0].mxu0
    %v2538 = vadd.f32 0.0, %v2537
    %v2539 = vpop.f32.mrb[0].mxu0
    %2540 = vmatprep.mubr.f32.mxu0 0.0
    %2541 = vmatmul.mubr.f32.gmra.mrb[0].mxu0 %v2371
    %v2542 = vpop.f32.mrb[0].mxu0
    %v2543 = vadd.f32 0.0, %v2542
    %v2544 = vpop.f32.mrb[0].mxu0
    %2545 = vmatprep.mubr.f32.mxu0 0.0
    %2546 = vmatmul.mubr.f32.gmra.mrb[0].mxu0 %v2374
    %v2547 = vpop.f32.mrb[0].mxu0
    %v2548 = vadd.f32 0.0, %v2547
    %v2549 = vpop.f32.mrb[0].mxu0
    %2550 = vdwg.mxu0
    %v2551 = vadd.f32 %v2264, %v2443
    %v2552 = vadd.f32 %v2265, %v2448
    %v2553 = vadd.f32 %v2266, %v2453
    %v2554 = vadd.f32 %v2267, %v2458
    %v2555 = vadd.f32 %v2268, %v2463
    %v2556 = vadd.f32 %v2269, %v2468
    %v2557 = vadd.f32 %v2270, %v2473
    %v2558 = vadd.f32 %v2271, %v2478
    %v2559 = vadd.f32 %v2272, %v2483
    %v2560 = vadd.f32 %v2273, %v2488
    %v2561 = vadd.f32 %v2274, %v2493
    %v2562 = vadd.f32 %v2275, %v2498
    %v2563 = vadd.f32 %v2276, %v2503
    %v2564 = vadd.f32 %v2277, %v2508
    %v2565 = vadd.f32 %v2278, %v2513
    %v2566 = vadd.f32 %v2279, %v2518
    %v2567 = vadd.f32 %v2280, %v2523
    %v2568 = vadd.f32 %v2281, %v2528
    %v2569 = vadd.f32 %v2282, %v2533
    %v2570 = vadd.f32 %v2283, %v2538
    %v2571 = vadd.f32 %v2284, %v2543
    %v2572 = vadd.f32 %v2285, %v2548
    %v2573 = vld [vmem:[%s0 + $0x161] sm:$0xff]
    %v2574 = vld [vmem:[%s0 + $0x169] sm:$0xff]
    %v2575 = vld [vmem:[%s0 + $0x171] sm:$0xff]
    %v2576 = vld [vmem:[%s0 + $0x179] sm:$0xff]
    %v2577 = vld [vmem:[%s0 + $0x181] sm:$0xff]
    %v2578 = vld [vmem:[%s0 + $0x189] sm:$0xff]
    %v2579 = vld [vmem:[%s0 + $0x191] sm:$0xff]
    %v2580 = vld [vmem:[%s0 + $0x199] sm:$0xff]
    %v2581 = vld [vmem:[%s0 + $0x1a1] sm:$0xff]
    %v2582 = vld [vmem:[%s0 + $0x1a9] sm:$0xff]
    %v2583 = vld [vmem:[%s0 + $0x1b1] sm:$0xff]
    %v2584 = vld [vmem:[%s0 + $0x1b9] sm:$0xff]
    %v2585 = vld [vmem:[%s0 + $0x1c1] sm:$0xff]
    %v2586 = vld [vmem:[%s0 + $0x1c9] sm:$0xff]
    %v2587 = vld [vmem:[%s0 + $0x1d1] sm:$0xff]
    %v2588 = vld [vmem:[%s0 + $0x1d9] sm:$0xff]
    %v2589 = vld [vmem:[%s0 + $0x1e1] sm:$0xff]
    %v2590 = vld [vmem:[%s0 + $0x1e9] sm:$0xff]
    %v2591 = vld [vmem:[%s0 + $0x1f1] sm:$0xff]
    %v2592 = vld [vmem:[%s0 + $0x1f9] sm:$0xff]
    %v2593 = vld [vmem:[%s0 + $0x201] sm:$0xff]
    %v2594 = vld [vmem:[%s0 + $0x209] sm:$0xff]
    %s2595 = scalar_lea.vmem %s1, 72
    %v2596 = vld [vmem:[%s2595] sm:$0xff]
    %v2598 = vsel %vm81, %v2573, 0
    %v2601 = vsel %vm81, %v2574, 0
    %v2604 = vsel %vm81, %v2575, 0
    %v2607 = vsel %vm81, %v2576, 0
    %v2610 = vsel %vm81, %v2577, 0
    %v2613 = vsel %vm81, %v2578, 0
    %v2616 = vsel %vm81, %v2579, 0
    %v2619 = vsel %vm81, %v2580, 0
    %v2622 = vsel %vm81, %v2581, 0
    %v2625 = vsel %vm81, %v2582, 0
    %v2628 = vsel %vm81, %v2583, 0
    %v2631 = vsel %vm81, %v2584, 0
    %v2634 = vsel %vm81, %v2585, 0
    %v2637 = vsel %vm81, %v2586, 0
    %v2640 = vsel %vm81, %v2587, 0
    %v2643 = vsel %vm81, %v2588, 0
    %v2646 = vsel %vm81, %v2589, 0
    %v2649 = vsel %vm81, %v2590, 0
    %v2652 = vsel %vm81, %v2591, 0
    %v2655 = vsel %vm81, %v2592, 0
    %v2658 = vsel %vm81, %v2593, 0
    %v2661 = vsel %vm81, %v2594, 0
    %2663 = vmatprep.subr.mxu0 0.0
    %2664 = vmatpush1.msra.mxu0 %v2596
    %2665 = vmatprep.subr.mxu0 0.0
    %2666 = vmatpush1.msra.mxu0 0.0
    %2667 = vmatprep.subr.mxu0 0.0
    %2668 = vmatpush1.msra.mxu0 0.0
    %2669 = vmatprep.subr.mxu0 0.0
    %2670 = vmatpush1.msra.mxu0 0.0
    %2671 = vmatprep.subr.mxu0 0.0
    %2672 = vmatpush1.msra.mxu0 0.0
    %2673 = vmatprep.subr.mxu0 0.0
    %2674 = vmatpush1.msra.mxu0 0.0
    %2675 = vmatprep.subr.mxu0 0.0
    %2676 = vmatpush1.msra.mxu0 0.0
    %2677 = vmatprep.subr.mxu0 0.0
    %2678 = vmatpush1.msra.mxu0 0.0
    %2679 = vmatprep.subr.mxu0 0.0
    %2680 = vmatpush1.msra.mxu0 0.0
    %2681 = vmatprep.subr.mxu0 0.0
    %2682 = vmatpush1.msra.mxu0 0.0
    %2683 = vmatprep.subr.mxu0 0.0
    %2684 = vmatpush1.msra.mxu0 0.0
    %2685 = vmatprep.subr.mxu0 0.0
    %2686 = vmatpush1.msra.mxu0 0.0
    %2687 = vmatprep.subr.mxu0 0.0
    %2688 = vmatpush1.msra.mxu0 0.0
    %2689 = vmatprep.subr.mxu0 0.0
    %2690 = vmatpush1.msra.mxu0 0.0
    %2691 = vmatprep.subr.mxu0 0.0
    %2692 = vmatpush1.msra.mxu0 0.0
    %2693 = vmatprep.subr.mxu0 0.0
    %2694 = vmatpush1.msra.mxu0 0.0
    %2695 = vmatprep.subr.mxu0 0.0
    %2696 = vmatpush1.msra.mxu0 0.0
    %2697 = vmatprep.subr.mxu0 0.0
    %2698 = vmatpush1.msra.mxu0 0.0
    %2699 = vmatprep.subr.mxu0 0.0
    %2700 = vmatpush1.msra.mxu0 0.0
    %2701 = vmatprep.subr.mxu0 0.0
    %2702 = vmatpush1.msra.mxu0 0.0
    %2703 = vmatprep.subr.mxu0 0.0
    %2704 = vmatpush1.msra.mxu0 0.0
    %2705 = vmatprep.subr.mxu0 0.0
    %2706 = vmatpush1.msra.mxu0 0.0
    %2707 = vmatprep.subr.mxu0 0.0
    %2708 = vmatpush1.msra.mxu0 0.0
    %2709 = vmatprep.subr.mxu0 0.0
    %2710 = vmatpush1.msra.mxu0 0.0
    %2711 = vmatprep.subr.mxu0 0.0
    %2712 = vmatpush1.msra.mxu0 0.0
    %2713 = vmatprep.subr.mxu0 0.0
    %2714 = vmatpush1.msra.mxu0 0.0
    %2715 = vmatprep.subr.mxu0 0.0
    %2716 = vmatpush1.msra.mxu0 0.0
    %2717 = vmatprep.subr.mxu0 0.0
    %2718 = vmatpush1.msra.mxu0 0.0
    %2719 = vmatprep.subr.mxu0 0.0
    %2720 = vmatpush1.msra.mxu0 0.0
    %2721 = vmatprep.subr.mxu0 0.0
    %2722 = vmatpush1.msra.mxu0 0.0
    %2723 = vmatprep.subr.mxu0 0.0
    %2724 = vmatpush1.msra.mxu0 0.0
    %2725 = vmatprep.subr.mxu0 0.0
    %2726 = vmatpush1.msra.mxu0 0.0
    %2727 = vmatprep.mubr.f32.mxu0 0.0
    %2728 = vmatmul.mubr.f32.gmra.mrb[0].mxu0 %v2598
    %v2729 = vpop.f32.mrb[0].mxu0
    %v2730 = vadd.f32 0.0, %v2729
    %v2731 = vpop.f32.mrb[0].mxu0
    %2732 = vmatprep.mubr.f32.mxu0 0.0
    %2733 = vmatmul.mubr.f32.gmra.mrb[0].mxu0 %v2601
    %v2734 = vpop.f32.mrb[0].mxu0
    %v2735 = vadd.f32 0.0, %v2734
    %v2736 = vpop.f32.mrb[0].mxu0
    %2737 = vmatprep.mubr.f32.mxu0 0.0
    %2738 = vmatmul.mubr.f32.gmra.mrb[0].mxu0 %v2604
    %v2739 = vpop.f32.mrb[0].mxu0
    %v2740 = vadd.f32 0.0, %v2739
    %v2741 = vpop.f32.mrb[0].mxu0
    %2742 = vmatprep.mubr.f32.mxu0 0.0
    %2743 = vmatmul.mubr.f32.gmra.mrb[0].mxu0 %v2607
    %v2744 = vpop.f32.mrb[0].mxu0
    %v2745 = vadd.f32 0.0, %v2744
    %v2746 = vpop.f32.mrb[0].mxu0
    %2747 = vmatprep.mubr.f32.mxu0 0.0
    %2748 = vmatmul.mubr.f32.gmra.mrb[0].mxu0 %v2610
    %v2749 = vpop.f32.mrb[0].mxu0
    %v2750 = vadd.f32 0.0, %v2749
    %v2751 = vpop.f32.mrb[0].mxu0
    %2752 = vmatprep.mubr.f32.mxu0 0.0
    %2753 = vmatmul.mubr.f32.gmra.mrb[0].mxu0 %v2613
    %v2754 = vpop.f32.mrb[0].mxu0
    %v2755 = vadd.f32 0.0, %v2754
    %v2756 = vpop.f32.mrb[0].mxu0
    %2757 = vmatprep.mubr.f32.mxu0 0.0
    %2758 = vmatmul.mubr.f32.gmra.mrb[0].mxu0 %v2616
    %v2759 = vpop.f32.mrb[0].mxu0
    %v2760 = vadd.f32 0.0, %v2759
    %v2761 = vpop.f32.mrb[0].mxu0
    %2762 = vmatprep.mubr.f32.mxu0 0.0
    %2763 = vmatmul.mubr.f32.gmra.mrb[0].mxu0 %v2619
    %v2764 = vpop.f32.mrb[0].mxu0
    %v2765 = vadd.f32 0.0, %v2764
    %v2766 = vpop.f32.mrb[0].mxu0
    %2767 = vmatprep.mubr.f32.mxu0 0.0
    %2768 = vmatmul.mubr.f32.gmra.mrb[0].mxu0 %v2622
    %v2769 = vpop.f32.mrb[0].mxu0
    %v2770 = vadd.f32 0.0, %v2769
    %v2771 = vpop.f32.mrb[0].mxu0
    %2772 = vmatprep.mubr.f32.mxu0 0.0
    %2773 = vmatmul.mubr.f32.gmra.mrb[0].mxu0 %v2625
    %v2774 = vpop.f32.mrb[0].mxu0
    %v2775 = vadd.f32 0.0, %v2774
    %v2776 = vpop.f32.mrb[0].mxu0
    %2777 = vmatprep.mubr.f32.mxu0 0.0
    %2778 = vmatmul.mubr.f32.gmra.mrb[0].mxu0 %v2628
    %v2779 = vpop.f32.mrb[0].mxu0
    %v2780 = vadd.f32 0.0, %v2779
    %v2781 = vpop.f32.mrb[0].mxu0
    %2782 = vmatprep.mubr.f32.mxu0 0.0
    %2783 = vmatmul.mubr.f32.gmra.mrb[0].mxu0 %v2631
    %v2784 = vpop.f32.mrb[0].mxu0
    %v2785 = vadd.f32 0.0, %v2784
    %v2786 = vpop.f32.mrb[0].mxu0
    %2787 = vmatprep.mubr.f32.mxu0 0.0
    %2788 = vmatmul.mubr.f32.gmra.mrb[0].mxu0 %v2634
    %v2789 = vpop.f32.mrb[0].mxu0
    %v2790 = vadd.f32 0.0, %v2789
    %v2791 = vpop.f32.mrb[0].mxu0
    %2792 = vmatprep.mubr.f32.mxu0 0.0
    %2793 = vmatmul.mubr.f32.gmra.mrb[0].mxu0 %v2637
    %v2794 = vpop.f32.mrb[0].mxu0
    %v2795 = vadd.f32 0.0, %v2794
    %v2796 = vpop.f32.mrb[0].mxu0
    %2797 = vmatprep.mubr.f32.mxu0 0.0
    %2798 = vmatmul.mubr.f32.gmra.mrb[0].mxu0 %v2640
    %v2799 = vpop.f32.mrb[0].mxu0
    %v2800 = vadd.f32 0.0, %v2799
    %v2801 = vpop.f32.mrb[0].mxu0
    %2802 = vmatprep.mubr.f32.mxu0 0.0
    %2803 = vmatmul.mubr.f32.gmra.mrb[0].mxu0 %v2643
    %v2804 = vpop.f32.mrb[0].mxu0
    %v2805 = vadd.f32 0.0, %v2804
    %v2806 = vpop.f32.mrb[0].mxu0
    %2807 = vmatprep.mubr.f32.mxu0 0.0
    %2808 = vmatmul.mubr.f32.gmra.mrb[0].mxu0 %v2646
    %v2809 = vpop.f32.mrb[0].mxu0
    %v2810 = vadd.f32 0.0, %v2809
    %v2811 = vpop.f32.mrb[0].mxu0
    %2812 = vmatprep.mubr.f32.mxu0 0.0
    %2813 = vmatmul.mubr.f32.gmra.mrb[0].mxu0 %v2649
    %v2814 = vpop.f32.mrb[0].mxu0
    %v2815 = vadd.f32 0.0, %v2814
    %v2816 = vpop.f32.mrb[0].mxu0
    %2817 = vmatprep.mubr.f32.mxu0 0.0
    %2818 = vmatmul.mubr.f32.gmra.mrb[0].mxu0 %v2652
    %v2819 = vpop.f32.mrb[0].mxu0
    %v2820 = vadd.f32 0.0, %v2819
    %v2821 = vpop.f32.mrb[0].mxu0
    %2822 = vmatprep.mubr.f32.mxu0 0.0
    %2823 = vmatmul.mubr.f32.gmra.mrb[0].mxu0 %v2655
    %v2824 = vpop.f32.mrb[0].mxu0
    %v2825 = vadd.f32 0.0, %v2824
    %v2826 = vpop.f32.mrb[0].mxu0
    %2827 = vmatprep.mubr.f32.mxu0 0.0
    %2828 = vmatmul.mubr.f32.gmra.mrb[0].mxu0 %v2658
    %v2829 = vpop.f32.mrb[0].mxu0
    %v2830 = vadd.f32 0.0, %v2829
    %v2831 = vpop.f32.mrb[0].mxu0
    %2832 = vmatprep.mubr.f32.mxu0 0.0
    %2833 = vmatmul.mubr.f32.gmra.mrb[0].mxu0 %v2661
    %v2834 = vpop.f32.mrb[0].mxu0
    %v2835 = vadd.f32 0.0, %v2834
    %v2836 = vpop.f32.mrb[0].mxu0
    %2837 = vdwg.mxu0
    %v2838 = vadd.f32 %v2551, %v2730
    %v2839 = vadd.f32 %v2552, %v2735
    %v2840 = vadd.f32 %v2553, %v2740
    %v2841 = vadd.f32 %v2554, %v2745
    %v2842 = vadd.f32 %v2555, %v2750
    %v2843 = vadd.f32 %v2556, %v2755
    %v2844 = vadd.f32 %v2557, %v2760
    %v2845 = vadd.f32 %v2558, %v2765
    %v2846 = vadd.f32 %v2559, %v2770
    %v2847 = vadd.f32 %v2560, %v2775
    %v2848 = vadd.f32 %v2561, %v2780
    %v2849 = vadd.f32 %v2562, %v2785
    %v2850 = vadd.f32 %v2563, %v2790
    %v2851 = vadd.f32 %v2564, %v2795
    %v2852 = vadd.f32 %v2565, %v2800
    %v2853 = vadd.f32 %v2566, %v2805
    %v2854 = vadd.f32 %v2567, %v2810
    %v2855 = vadd.f32 %v2568, %v2815
    %v2856 = vadd.f32 %v2569, %v2820
    %v2857 = vadd.f32 %v2570, %v2825
    %v2858 = vadd.f32 %v2571, %v2830
    %v2859 = vadd.f32 %v2572, %v2835
    %v2860 = vld [vmem:[%s0 + $0x169] sm:$0xff]
    %v2861 = vld [vmem:[%s0 + $0x171] sm:$0xff]
    %v2862 = vld [vmem:[%s0 + $0x179] sm:$0xff]
    %v2863 = vld [vmem:[%s0 + $0x181] sm:$0xff]
    %v2864 = vld [vmem:[%s0 + $0x189] sm:$0xff]
    %v2865 = vld [vmem:[%s0 + $0x191] sm:$0xff]
    %v2866 = vld [vmem:[%s0 + $0x199] sm:$0xff]
    %v2867 = vld [vmem:[%s0 + $0x1a1] sm:$0xff]
    %v2868 = vld [vmem:[%s0 + $0x1a9] sm:$0xff]
    %v2869 = vld [vmem:[%s0 + $0x1b1] sm:$0xff]
    %v2870 = vld [vmem:[%s0 + $0x1b9] sm:$0xff]
    %v2871 = vld [vmem:[%s0 + $0x1c1] sm:$0xff]
    %v2872 = vld [vmem:[%s0 + $0x1c9] sm:$0xff]
    %v2873 = vld [vmem:[%s0 + $0x1d1] sm:$0xff]
    %v2874 = vld [vmem:[%s0 + $0x1d9] sm:$0xff]
    %v2875 = vld [vmem:[%s0 + $0x1e1] sm:$0xff]
    %v2876 = vld [vmem:[%s0 + $0x1e9] sm:$0xff]
    %v2877 = vld [vmem:[%s0 + $0x1f1] sm:$0xff]
    %v2878 = vld [vmem:[%s0 + $0x1f9] sm:$0xff]
    %v2879 = vld [vmem:[%s0 + $0x201] sm:$0xff]
    %v2880 = vld [vmem:[%s0 + $0x209] sm:$0xff]
    %v2881 = vld [vmem:[%s0 + $0x211] sm:$0xff]
    %s2882 = scalar_lea.vmem %s1, 80
    %v2883 = vld [vmem:[%s2882] sm:$0xff]
    %v2885 = vsel %vm81, %v2860, 0
    %v2888 = vsel %vm81, %v2861, 0
    %v2891 = vsel %vm81, %v2862, 0
    %v2894 = vsel %vm81, %v2863, 0
    %v2897 = vsel %vm81, %v2864, 0
    %v2900 = vsel %vm81, %v2865, 0
    %v2903 = vsel %vm81, %v2866, 0
    %v2906 = vsel %vm81, %v2867, 0
    %v2909 = vsel %vm81, %v2868, 0
    %v2912 = vsel %vm81, %v2869, 0
    %v2915 = vsel %vm81, %v2870, 0
    %v2918 = vsel %vm81, %v2871, 0
    %v2921 = vsel %vm81, %v2872, 0
    %v2924 = vsel %vm81, %v2873, 0
    %v2927 = vsel %vm81, %v2874, 0
    %v2930 = vsel %vm81, %v2875, 0
    %v2933 = vsel %vm81, %v2876, 0
    %v2936 = vsel %vm81, %v2877, 0
    %v2939 = vsel %vm81, %v2878, 0
    %v2942 = vsel %vm81, %v2879, 0
    %v2945 = vsel %vm81, %v2880, 0
    %v2948 = vsel %vm81, %v2881, 0
    %2950 = vmatprep.subr.mxu0 0.0
    %2951 = vmatpush1.msra.mxu0 %v2883
    %2952 = vmatprep.subr.mxu0 0.0
    %2953 = vmatpush1.msra.mxu0 0.0
    %2954 = vmatprep.subr.mxu0 0.0
    %2955 = vmatpush1.msra.mxu0 0.0
    %2956 = vmatprep.subr.mxu0 0.0
    %2957 = vmatpush1.msra.mxu0 0.0
    %2958 = vmatprep.subr.mxu0 0.0
    %2959 = vmatpush1.msra.mxu0 0.0
    %2960 = vmatprep.subr.mxu0 0.0
    %2961 = vmatpush1.msra.mxu0 0.0
    %2962 = vmatprep.subr.mxu0 0.0
    %2963 = vmatpush1.msra.mxu0 0.0
    %2964 = vmatprep.subr.mxu0 0.0
    %2965 = vmatpush1.msra.mxu0 0.0
    %2966 = vmatprep.subr.mxu0 0.0
    %2967 = vmatpush1.msra.mxu0 0.0
    %2968 = vmatprep.subr.mxu0 0.0
    %2969 = vmatpush1.msra.mxu0 0.0
    %2970 = vmatprep.subr.mxu0 0.0
    %2971 = vmatpush1.msra.mxu0 0.0
    %2972 = vmatprep.subr.mxu0 0.0
    %2973 = vmatpush1.msra.mxu0 0.0
    %2974 = vmatprep.subr.mxu0 0.0
    %2975 = vmatpush1.msra.mxu0 0.0
    %2976 = vmatprep.subr.mxu0 0.0
    %2977 = vmatpush1.msra.mxu0 0.0
    %2978 = vmatprep.subr.mxu0 0.0
    %2979 = vmatpush1.msra.mxu0 0.0
    %2980 = vmatprep.subr.mxu0 0.0
    %2981 = vmatpush1.msra.mxu0 0.0
    %2982 = vmatprep.subr.mxu0 0.0
    %2983 = vmatpush1.msra.mxu0 0.0
    %2984 = vmatprep.subr.mxu0 0.0
    %2985 = vmatpush1.msra.mxu0 0.0
    %2986 = vmatprep.subr.mxu0 0.0
    %2987 = vmatpush1.msra.mxu0 0.0
    %2988 = vmatprep.subr.mxu0 0.0
    %2989 = vmatpush1.msra.mxu0 0.0
    %2990 = vmatprep.subr.mxu0 0.0
    %2991 = vmatpush1.msra.mxu0 0.0
    %2992 = vmatprep.subr.mxu0 0.0
    %2993 = vmatpush1.msra.mxu0 0.0
    %2994 = vmatprep.subr.mxu0 0.0
    %2995 = vmatpush1.msra.mxu0 0.0
    %2996 = vmatprep.subr.mxu0 0.0
    %2997 = vmatpush1.msra.mxu0 0.0
    %2998 = vmatprep.subr.mxu0 0.0
    %2999 = vmatpush1.msra.mxu0 0.0
    %3000 = vmatprep.subr.mxu0 0.0
    %3001 = vmatpush1.msra.mxu0 0.0
    %3002 = vmatprep.subr.mxu0 0.0
    %3003 = vmatpush1.msra.mxu0 0.0
    %3004 = vmatprep.subr.mxu0 0.0
    %3005 = vmatpush1.msra.mxu0 0.0
    %3006 = vmatprep.subr.mxu0 0.0
    %3007 = vmatpush1.msra.mxu0 0.0
    %3008 = vmatprep.subr.mxu0 0.0
    %3009 = vmatpush1.msra.mxu0 0.0
    %3010 = vmatprep.subr.mxu0 0.0
    %3011 = vmatpush1.msra.mxu0 0.0
    %3012 = vmatprep.subr.mxu0 0.0
    %3013 = vmatpush1.msra.mxu0 0.0
    %3014 = vmatprep.mubr.f32.mxu0 0.0
    %3015 = vmatmul.mubr.f32.gmra.mrb[0].mxu0 %v2885
    %v3016 = vpop.f32.mrb[0].mxu0
    %v3017 = vadd.f32 0.0, %v3016
    %v3018 = vpop.f32.mrb[0].mxu0
    %3019 = vmatprep.mubr.f32.mxu0 0.0
    %3020 = vmatmul.mubr.f32.gmra.mrb[0].mxu0 %v2888
    %v3021 = vpop.f32.mrb[0].mxu0
    %v3022 = vadd.f32 0.0, %v3021
    %v3023 = vpop.f32.mrb[0].mxu0
    %3024 = vmatprep.mubr.f32.mxu0 0.0
    %3025 = vmatmul.mubr.f32.gmra.mrb[0].mxu0 %v2891
    %v3026 = vpop.f32.mrb[0].mxu0
    %v3027 = vadd.f32 0.0, %v3026
    %v3028 = vpop.f32.mrb[0].mxu0
    %3029 = vmatprep.mubr.f32.mxu0 0.0
    %3030 = vmatmul.mubr.f32.gmra.mrb[0].mxu0 %v2894
    %v3031 = vpop.f32.mrb[0].mxu0
    %v3032 = vadd.f32 0.0, %v3031
    %v3033 = vpop.f32.mrb[0].mxu0
    %3034 = vmatprep.mubr.f32.mxu0 0.0
    %3035 = vmatmul.mubr.f32.gmra.mrb[0].mxu0 %v2897
    %v3036 = vpop.f32.mrb[0].mxu0
    %v3037 = vadd.f32 0.0, %v3036
    %v3038 = vpop.f32.mrb[0].mxu0
    %3039 = vmatprep.mubr.f32.mxu0 0.0
    %3040 = vmatmul.mubr.f32.gmra.mrb[0].mxu0 %v2900
    %v3041 = vpop.f32.mrb[0].mxu0
    %v3042 = vadd.f32 0.0, %v3041
    %v3043 = vpop.f32.mrb[0].mxu0
    %3044 = vmatprep.mubr.f32.mxu0 0.0
    %3045 = vmatmul.mubr.f32.gmra.mrb[0].mxu0 %v2903
    %v3046 = vpop.f32.mrb[0].mxu0
    %v3047 = vadd.f32 0.0, %v3046
    %v3048 = vpop.f32.mrb[0].mxu0
    %3049 = vmatprep.mubr.f32.mxu0 0.0
    %3050 = vmatmul.mubr.f32.gmra.mrb[0].mxu0 %v2906
    %v3051 = vpop.f32.mrb[0].mxu0
    %v3052 = vadd.f32 0.0, %v3051
    %v3053 = vpop.f32.mrb[0].mxu0
    %3054 = vmatprep.mubr.f32.mxu0 0.0
    %3055 = vmatmul.mubr.f32.gmra.mrb[0].mxu0 %v2909
    %v3056 = vpop.f32.mrb[0].mxu0
    %v3057 = vadd.f32 0.0, %v3056
    %v3058 = vpop.f32.mrb[0].mxu0
    %3059 = vmatprep.mubr.f32.mxu0 0.0
    %3060 = vmatmul.mubr.f32.gmra.mrb[0].mxu0 %v2912
    %v3061 = vpop.f32.mrb[0].mxu0
    %v3062 = vadd.f32 0.0, %v3061
    %v3063 = vpop.f32.mrb[0].mxu0
    %3064 = vmatprep.mubr.f32.mxu0 0.0
    %3065 = vmatmul.mubr.f32.gmra.mrb[0].mxu0 %v2915
    %v3066 = vpop.f32.mrb[0].mxu0
    %v3067 = vadd.f32 0.0, %v3066
    %v3068 = vpop.f32.mrb[0].mxu0
    %3069 = vmatprep.mubr.f32.mxu0 0.0
    %3070 = vmatmul.mubr.f32.gmra.mrb[0].mxu0 %v2918
    %v3071 = vpop.f32.mrb[0].mxu0
    %v3072 = vadd.f32 0.0, %v3071
    %v3073 = vpop.f32.mrb[0].mxu0
    %3074 = vmatprep.mubr.f32.mxu0 0.0
    %3075 = vmatmul.mubr.f32.gmra.mrb[0].mxu0 %v2921
    %v3076 = vpop.f32.mrb[0].mxu0
    %v3077 = vadd.f32 0.0, %v3076
    %v3078 = vpop.f32.mrb[0].mxu0
    %3079 = vmatprep.mubr.f32.mxu0 0.0
    %3080 = vmatmul.mubr.f32.gmra.mrb[0].mxu0 %v2924
    %v3081 = vpop.f32.mrb[0].mxu0
    %v3082 = vadd.f32 0.0, %v3081
    %v3083 = vpop.f32.mrb[0].mxu0
    %3084 = vmatprep.mubr.f32.mxu0 0.0
    %3085 = vmatmul.mubr.f32.gmra.mrb[0].mxu0 %v2927
    %v3086 = vpop.f32.mrb[0].mxu0
    %v3087 = vadd.f32 0.0, %v3086
    %v3088 = vpop.f32.mrb[0].mxu0
    %3089 = vmatprep.mubr.f32.mxu0 0.0
    %3090 = vmatmul.mubr.f32.gmra.mrb[0].mxu0 %v2930
    %v3091 = vpop.f32.mrb[0].mxu0
    %v3092 = vadd.f32 0.0, %v3091
    %v3093 = vpop.f32.mrb[0].mxu0
    %3094 = vmatprep.mubr.f32.mxu0 0.0
    %3095 = vmatmul.mubr.f32.gmra.mrb[0].mxu0 %v2933
    %v3096 = vpop.f32.mrb[0].mxu0
    %v3097 = vadd.f32 0.0, %v3096
    %v3098 = vpop.f32.mrb[0].mxu0
    %3099 = vmatprep.mubr.f32.mxu0 0.0
    %3100 = vmatmul.mubr.f32.gmra.mrb[0].mxu0 %v2936
    %v3101 = vpop.f32.mrb[0].mxu0
    %v3102 = vadd.f32 0.0, %v3101
    %v3103 = vpop.f32.mrb[0].mxu0
    %3104 = vmatprep.mubr.f32.mxu0 0.0
    %3105 = vmatmul.mubr.f32.gmra.mrb[0].mxu0 %v2939
    %v3106 = vpop.f32.mrb[0].mxu0
    %v3107 = vadd.f32 0.0, %v3106
    %v3108 = vpop.f32.mrb[0].mxu0
    %3109 = vmatprep.mubr.f32.mxu0 0.0
    %3110 = vmatmul.mubr.f32.gmra.mrb[0].mxu0 %v2942
    %v3111 = vpop.f32.mrb[0].mxu0
    %v3112 = vadd.f32 0.0, %v3111
    %v3113 = vpop.f32.mrb[0].mxu0
    %3114 = vmatprep.mubr.f32.mxu0 0.0
    %3115 = vmatmul.mubr.f32.gmra.mrb[0].mxu0 %v2945
    %v3116 = vpop.f32.mrb[0].mxu0
    %v3117 = vadd.f32 0.0, %v3116
    %v3118 = vpop.f32.mrb[0].mxu0
    %3119 = vmatprep.mubr.f32.mxu0 0.0
    %3120 = vmatmul.mubr.f32.gmra.mrb[0].mxu0 %v2948
    %v3121 = vpop.f32.mrb[0].mxu0
    %v3122 = vadd.f32 0.0, %v3121
    %v3123 = vpop.f32.mrb[0].mxu0
    %3124 = vdwg.mxu0
    %v3125 = vadd.f32 %v2838, %v3017
    %v3126 = vadd.f32 %v2839, %v3022
    %v3127 = vadd.f32 %v2840, %v3027
    %v3128 = vadd.f32 %v2841, %v3032
    %v3129 = vadd.f32 %v2842, %v3037
    %v3130 = vadd.f32 %v2843, %v3042
    %v3131 = vadd.f32 %v2844, %v3047
    %v3132 = vadd.f32 %v2845, %v3052
    %v3133 = vadd.f32 %v2846, %v3057
    %v3134 = vadd.f32 %v2847, %v3062
    %v3135 = vadd.f32 %v2848, %v3067
    %v3136 = vadd.f32 %v2849, %v3072
    %v3137 = vadd.f32 %v2850, %v3077
    %v3138 = vadd.f32 %v2851, %v3082
    %v3139 = vadd.f32 %v2852, %v3087
    %v3140 = vadd.f32 %v2853, %v3092
    %v3141 = vadd.f32 %v2854, %v3097
    %v3142 = vadd.f32 %v2855, %v3102
    %v3143 = vadd.f32 %v2856, %v3107
    %v3144 = vadd.f32 %v2857, %v3112
    %v3145 = vadd.f32 %v2858, %v3117
    %v3146 = vadd.f32 %v2859, %v3122
    %v3147 = vld [vmem:[%s0 + $0x16a] sm:$0xff]
    %v3148 = vld [vmem:[%s0 + $0x172] sm:$0xff]
    %v3149 = vld [vmem:[%s0 + $0x17a] sm:$0xff]
    %v3150 = vld [vmem:[%s0 + $0x182] sm:$0xff]
    %v3151 = vld [vmem:[%s0 + $0x18a] sm:$0xff]
    %v3152 = vld [vmem:[%s0 + $0x192] sm:$0xff]
    %v3153 = vld [vmem:[%s0 + $0x19a] sm:$0xff]
    %v3154 = vld [vmem:[%s0 + $0x1a2] sm:$0xff]
    %v3155 = vld [vmem:[%s0 + $0x1aa] sm:$0xff]
    %v3156 = vld [vmem:[%s0 + $0x1b2] sm:$0xff]
    %v3157 = vld [vmem:[%s0 + $0x1ba] sm:$0xff]
    %v3158 = vld [vmem:[%s0 + $0x1c2] sm:$0xff]
    %v3159 = vld [vmem:[%s0 + $0x1ca] sm:$0xff]
    %v3160 = vld [vmem:[%s0 + $0x1d2] sm:$0xff]
    %v3161 = vld [vmem:[%s0 + $0x1da] sm:$0xff]
    %v3162 = vld [vmem:[%s0 + $0x1e2] sm:$0xff]
    %v3163 = vld [vmem:[%s0 + $0x1ea] sm:$0xff]
    %v3164 = vld [vmem:[%s0 + $0x1f2] sm:$0xff]
    %v3165 = vld [vmem:[%s0 + $0x1fa] sm:$0xff]
    %v3166 = vld [vmem:[%s0 + $0x202] sm:$0xff]
    %v3167 = vld [vmem:[%s0 + $0x20a] sm:$0xff]
    %v3168 = vld [vmem:[%s0 + $0x212] sm:$0xff]
    %s3169 = scalar_lea.vmem %s1, 88
    %v3170 = vld [vmem:[%s3169] sm:$0xff]
    %v3172 = vsel %vm81, %v3147, 0
    %v3175 = vsel %vm81, %v3148, 0
    %v3178 = vsel %vm81, %v3149, 0
    %v3181 = vsel %vm81, %v3150, 0
    %v3184 = vsel %vm81, %v3151, 0
    %v3187 = vsel %vm81, %v3152, 0
    %v3190 = vsel %vm81, %v3153, 0
    %v3193 = vsel %vm81, %v3154, 0
    %v3196 = vsel %vm81, %v3155, 0
    %v3199 = vsel %vm81, %v3156, 0
    %v3202 = vsel %vm81, %v3157, 0
    %v3205 = vsel %vm81, %v3158, 0
    %v3208 = vsel %vm81, %v3159, 0
    %v3211 = vsel %vm81, %v3160, 0
    %v3214 = vsel %vm81, %v3161, 0
    %v3217 = vsel %vm81, %v3162, 0
    %v3220 = vsel %vm81, %v3163, 0
    %v3223 = vsel %vm81, %v3164, 0
    %v3226 = vsel %vm81, %v3165, 0
    %v3229 = vsel %vm81, %v3166, 0
    %v3232 = vsel %vm81, %v3167, 0
    %v3235 = vsel %vm81, %v3168, 0
    %3237 = vmatprep.subr.mxu0 0.0
    %3238 = vmatpush1.msra.mxu0 %v3170
    %3239 = vmatprep.subr.mxu0 0.0
    %3240 = vmatpush1.msra.mxu0 0.0
    %3241 = vmatprep.subr.mxu0 0.0
    %3242 = vmatpush1.msra.mxu0 0.0
    %3243 = vmatprep.subr.mxu0 0.0
    %3244 = vmatpush1.msra.mxu0 0.0
    %3245 = vmatprep.subr.mxu0 0.0
    %3246 = vmatpush1.msra.mxu0 0.0
    %3247 = vmatprep.subr.mxu0 0.0
    %3248 = vmatpush1.msra.mxu0 0.0
    %3249 = vmatprep.subr.mxu0 0.0
    %3250 = vmatpush1.msra.mxu0 0.0
    %3251 = vmatprep.subr.mxu0 0.0
    %3252 = vmatpush1.msra.mxu0 0.0
    %3253 = vmatprep.subr.mxu0 0.0
    %3254 = vmatpush1.msra.mxu0 0.0
    %3255 = vmatprep.subr.mxu0 0.0
    %3256 = vmatpush1.msra.mxu0 0.0
    %3257 = vmatprep.subr.mxu0 0.0
    %3258 = vmatpush1.msra.mxu0 0.0
    %3259 = vmatprep.subr.mxu0 0.0
    %3260 = vmatpush1.msra.mxu0 0.0
    %3261 = vmatprep.subr.mxu0 0.0
    %3262 = vmatpush1.msra.mxu0 0.0
    %3263 = vmatprep.subr.mxu0 0.0
    %3264 = vmatpush1.msra.mxu0 0.0
    %3265 = vmatprep.subr.mxu0 0.0
    %3266 = vmatpush1.msra.mxu0 0.0
    %3267 = vmatprep.subr.mxu0 0.0
    %3268 = vmatpush1.msra.mxu0 0.0
    %3269 = vmatprep.subr.mxu0 0.0
    %3270 = vmatpush1.msra.mxu0 0.0
    %3271 = vmatprep.subr.mxu0 0.0
    %3272 = vmatpush1.msra.mxu0 0.0
    %3273 = vmatprep.subr.mxu0 0.0
    %3274 = vmatpush1.msra.mxu0 0.0
    %3275 = vmatprep.subr.mxu0 0.0
    %3276 = vmatpush1.msra.mxu0 0.0
    %3277 = vmatprep.subr.mxu0 0.0
    %3278 = vmatpush1.msra.mxu0 0.0
    %3279 = vmatprep.subr.mxu0 0.0
    %3280 = vmatpush1.msra.mxu0 0.0
    %3281 = vmatprep.subr.mxu0 0.0
    %3282 = vmatpush1.msra.mxu0 0.0
    %3283 = vmatprep.subr.mxu0 0.0
    %3284 = vmatpush1.msra.mxu0 0.0
    %3285 = vmatprep.subr.mxu0 0.0
    %3286 = vmatpush1.msra.mxu0 0.0
    %3287 = vmatprep.subr.mxu0 0.0
    %3288 = vmatpush1.msra.mxu0 0.0
    %3289 = vmatprep.subr.mxu0 0.0
    %3290 = vmatpush1.msra.mxu0 0.0
    %3291 = vmatprep.subr.mxu0 0.0
    %3292 = vmatpush1.msra.mxu0 0.0
    %3293 = vmatprep.subr.mxu0 0.0
    %3294 = vmatpush1.msra.mxu0 0.0
    %3295 = vmatprep.subr.mxu0 0.0
    %3296 = vmatpush1.msra.mxu0 0.0
    %3297 = vmatprep.subr.mxu0 0.0
    %3298 = vmatpush1.msra.mxu0 0.0
    %3299 = vmatprep.subr.mxu0 0.0
    %3300 = vmatpush1.msra.mxu0 0.0
    %3301 = vmatprep.mubr.f32.mxu0 0.0
    %3302 = vmatmul.mubr.f32.gmra.mrb[0].mxu0 %v3172
    %v3303 = vpop.f32.mrb[0].mxu0
    %v3304 = vadd.f32 0.0, %v3303
    %v3305 = vpop.f32.mrb[0].mxu0
    %3306 = vmatprep.mubr.f32.mxu0 0.0
    %3307 = vmatmul.mubr.f32.gmra.mrb[0].mxu0 %v3175
    %v3308 = vpop.f32.mrb[0].mxu0
    %v3309 = vadd.f32 0.0, %v3308
    %v3310 = vpop.f32.mrb[0].mxu0
    %3311 = vmatprep.mubr.f32.mxu0 0.0
    %3312 = vmatmul.mubr.f32.gmra.mrb[0].mxu0 %v3178
    %v3313 = vpop.f32.mrb[0].mxu0
    %v3314 = vadd.f32 0.0, %v3313
    %v3315 = vpop.f32.mrb[0].mxu0
    %3316 = vmatprep.mubr.f32.mxu0 0.0
    %3317 = vmatmul.mubr.f32.gmra.mrb[0].mxu0 %v3181
    %v3318 = vpop.f32.mrb[0].mxu0
    %v3319 = vadd.f32 0.0, %v3318
    %v3320 = vpop.f32.mrb[0].mxu0
    %3321 = vmatprep.mubr.f32.mxu0 0.0
    %3322 = vmatmul.mubr.f32.gmra.mrb[0].mxu0 %v3184
    %v3323 = vpop.f32.mrb[0].mxu0
    %v3324 = vadd.f32 0.0, %v3323
    %v3325 = vpop.f32.mrb[0].mxu0
    %3326 = vmatprep.mubr.f32.mxu0 0.0
    %3327 = vmatmul.mubr.f32.gmra.mrb[0].mxu0 %v3187
    %v3328 = vpop.f32.mrb[0].mxu0
    %v3329 = vadd.f32 0.0, %v3328
    %v3330 = vpop.f32.mrb[0].mxu0
    %3331 = vmatprep.mubr.f32.mxu0 0.0
    %3332 = vmatmul.mubr.f32.gmra.mrb[0].mxu0 %v3190
    %v3333 = vpop.f32.mrb[0].mxu0
    %v3334 = vadd.f32 0.0, %v3333
    %v3335 = vpop.f32.mrb[0].mxu0
    %3336 = vmatprep.mubr.f32.mxu0 0.0
    %3337 = vmatmul.mubr.f32.gmra.mrb[0].mxu0 %v3193
    %v3338 = vpop.f32.mrb[0].mxu0
    %v3339 = vadd.f32 0.0, %v3338
    %v3340 = vpop.f32.mrb[0].mxu0
    %3341 = vmatprep.mubr.f32.mxu0 0.0
    %3342 = vmatmul.mubr.f32.gmra.mrb[0].mxu0 %v3196
    %v3343 = vpop.f32.mrb[0].mxu0
    %v3344 = vadd.f32 0.0, %v3343
    %v3345 = vpop.f32.mrb[0].mxu0
    %3346 = vmatprep.mubr.f32.mxu0 0.0
    %3347 = vmatmul.mubr.f32.gmra.mrb[0].mxu0 %v3199
    %v3348 = vpop.f32.mrb[0].mxu0
    %v3349 = vadd.f32 0.0, %v3348
    %v3350 = vpop.f32.mrb[0].mxu0
    %3351 = vmatprep.mubr.f32.mxu0 0.0
    %3352 = vmatmul.mubr.f32.gmra.mrb[0].mxu0 %v3202
    %v3353 = vpop.f32.mrb[0].mxu0
    %v3354 = vadd.f32 0.0, %v3353
    %v3355 = vpop.f32.mrb[0].mxu0
    %3356 = vmatprep.mubr.f32.mxu0 0.0
    %3357 = vmatmul.mubr.f32.gmra.mrb[0].mxu0 %v3205
    %v3358 = vpop.f32.mrb[0].mxu0
    %v3359 = vadd.f32 0.0, %v3358
    %v3360 = vpop.f32.mrb[0].mxu0
    %3361 = vmatprep.mubr.f32.mxu0 0.0
    %3362 = vmatmul.mubr.f32.gmra.mrb[0].mxu0 %v3208
    %v3363 = vpop.f32.mrb[0].mxu0
    %v3364 = vadd.f32 0.0, %v3363
    %v3365 = vpop.f32.mrb[0].mxu0
    %3366 = vmatprep.mubr.f32.mxu0 0.0
    %3367 = vmatmul.mubr.f32.gmra.mrb[0].mxu0 %v3211
    %v3368 = vpop.f32.mrb[0].mxu0
    %v3369 = vadd.f32 0.0, %v3368
    %v3370 = vpop.f32.mrb[0].mxu0
    %3371 = vmatprep.mubr.f32.mxu0 0.0
    %3372 = vmatmul.mubr.f32.gmra.mrb[0].mxu0 %v3214
    %v3373 = vpop.f32.mrb[0].mxu0
    %v3374 = vadd.f32 0.0, %v3373
    %v3375 = vpop.f32.mrb[0].mxu0
    %3376 = vmatprep.mubr.f32.mxu0 0.0
    %3377 = vmatmul.mubr.f32.gmra.mrb[0].mxu0 %v3217
    %v3378 = vpop.f32.mrb[0].mxu0
    %v3379 = vadd.f32 0.0, %v3378
    %v3380 = vpop.f32.mrb[0].mxu0
    %3381 = vmatprep.mubr.f32.mxu0 0.0
    %3382 = vmatmul.mubr.f32.gmra.mrb[0].mxu0 %v3220
    %v3383 = vpop.f32.mrb[0].mxu0
    %v3384 = vadd.f32 0.0, %v3383
    %v3385 = vpop.f32.mrb[0].mxu0
    %3386 = vmatprep.mubr.f32.mxu0 0.0
    %3387 = vmatmul.mubr.f32.gmra.mrb[0].mxu0 %v3223
    %v3388 = vpop.f32.mrb[0].mxu0
    %v3389 = vadd.f32 0.0, %v3388
    %v3390 = vpop.f32.mrb[0].mxu0
    %3391 = vmatprep.mubr.f32.mxu0 0.0
    %3392 = vmatmul.mubr.f32.gmra.mrb[0].mxu0 %v3226
    %v3393 = vpop.f32.mrb[0].mxu0
    %v3394 = vadd.f32 0.0, %v3393
    %v3395 = vpop.f32.mrb[0].mxu0
    %3396 = vmatprep.mubr.f32.mxu0 0.0
    %3397 = vmatmul.mubr.f32.gmra.mrb[0].mxu0 %v3229
    %v3398 = vpop.f32.mrb[0].mxu0
    %v3399 = vadd.f32 0.0, %v3398
    %v3400 = vpop.f32.mrb[0].mxu0
    %3401 = vmatprep.mubr.f32.mxu0 0.0
    %3402 = vmatmul.mubr.f32.gmra.mrb[0].mxu0 %v3232
    %v3403 = vpop.f32.mrb[0].mxu0
    %v3404 = vadd.f32 0.0, %v3403
    %v3405 = vpop.f32.mrb[0].mxu0
    %3406 = vmatprep.mubr.f32.mxu0 0.0
    %3407 = vmatmul.mubr.f32.gmra.mrb[0].mxu0 %v3235
    %v3408 = vpop.f32.mrb[0].mxu0
    %v3409 = vadd.f32 0.0, %v3408
    %v3410 = vpop.f32.mrb[0].mxu0
    %3411 = vdwg.mxu0
    %v3412 = vadd.f32 %v3125, %v3304
    %v3413 = vadd.f32 %v3126, %v3309
    %v3414 = vadd.f32 %v3127, %v3314
    %v3415 = vadd.f32 %v3128, %v3319
    %v3416 = vadd.f32 %v3129, %v3324
    %v3417 = vadd.f32 %v3130, %v3329
    %v3418 = vadd.f32 %v3131, %v3334
    %v3419 = vadd.f32 %v3132, %v3339
    %v3420 = vadd.f32 %v3133, %v3344
    %v3421 = vadd.f32 %v3134, %v3349
    %v3422 = vadd.f32 %v3135, %v3354
    %v3423 = vadd.f32 %v3136, %v3359
    %v3424 = vadd.f32 %v3137, %v3364
    %v3425 = vadd.f32 %v3138, %v3369
    %v3426 = vadd.f32 %v3139, %v3374
    %v3427 = vadd.f32 %v3140, %v3379
    %v3428 = vadd.f32 %v3141, %v3384
    %v3429 = vadd.f32 %v3142, %v3389
    %v3430 = vadd.f32 %v3143, %v3394
    %v3431 = vadd.f32 %v3144, %v3399
    %v3432 = vadd.f32 %v3145, %v3404
    %v3433 = vadd.f32 %v3146, %v3409
    %v3434 = vld [vmem:[%s0 + $0x210] sm:$0xff]
    %v3435 = vld [vmem:[%s0 + $0x218] sm:$0xff]
    %v3436 = vld [vmem:[%s0 + $0x220] sm:$0xff]
    %v3437 = vld [vmem:[%s0 + $0x228] sm:$0xff]
    %v3438 = vld [vmem:[%s0 + $0x230] sm:$0xff]
    %v3439 = vld [vmem:[%s0 + $0x238] sm:$0xff]
    %v3440 = vld [vmem:[%s0 + $0x240] sm:$0xff]
    %v3441 = vld [vmem:[%s0 + $0x248] sm:$0xff]
    %v3442 = vld [vmem:[%s0 + $0x250] sm:$0xff]
    %v3443 = vld [vmem:[%s0 + $0x258] sm:$0xff]
    %v3444 = vld [vmem:[%s0 + $0x260] sm:$0xff]
    %v3445 = vld [vmem:[%s0 + $0x268] sm:$0xff]
    %v3446 = vld [vmem:[%s0 + $0x270] sm:$0xff]
    %v3447 = vld [vmem:[%s0 + $0x278] sm:$0xff]
    %v3448 = vld [vmem:[%s0 + $0x280] sm:$0xff]
    %v3449 = vld [vmem:[%s0 + $0x288] sm:$0xff]
    %v3450 = vld [vmem:[%s0 + $0x290] sm:$0xff]
    %v3451 = vld [vmem:[%s0 + $0x298] sm:$0xff]
    %v3452 = vld [vmem:[%s0 + $0x2a0] sm:$0xff]
    %v3453 = vld [vmem:[%s0 + $0x2a8] sm:$0xff]
    %v3454 = vld [vmem:[%s0 + $0x2b0] sm:$0xff]
    %v3455 = vld [vmem:[%s0 + $0x2b8] sm:$0xff]
    %s3456 = scalar_lea.vmem %s1, 96
    %v3457 = vld [vmem:[%s3456] sm:$0xff]
    %v3459 = vsel %vm81, %v3434, 0
    %v3462 = vsel %vm81, %v3435, 0
    %v3465 = vsel %vm81, %v3436, 0
    %v3468 = vsel %vm81, %v3437, 0
    %v3471 = vsel %vm81, %v3438, 0
    %v3474 = vsel %vm81, %v3439, 0
    %v3477 = vsel %vm81, %v3440, 0
    %v3480 = vsel %vm81, %v3441, 0
    %v3483 = vsel %vm81, %v3442, 0
    %v3486 = vsel %vm81, %v3443, 0
    %v3489 = vsel %vm81, %v3444, 0
    %v3492 = vsel %vm81, %v3445, 0
    %v3495 = vsel %vm81, %v3446, 0
    %v3498 = vsel %vm81, %v3447, 0
    %v3501 = vsel %vm81, %v3448, 0
    %v3504 = vsel %vm81, %v3449, 0
    %v3507 = vsel %vm81, %v3450, 0
    %v3510 = vsel %vm81, %v3451, 0
    %v3513 = vsel %vm81, %v3452, 0
    %v3516 = vsel %vm81, %v3453, 0
    %v3519 = vsel %vm81, %v3454, 0
    %v3522 = vsel %vm81, %v3455, 0
    %3524 = vmatprep.subr.mxu0 0.0
    %3525 = vmatpush1.msra.mxu0 %v3457
    %3526 = vmatprep.subr.mxu0 0.0
    %3527 = vmatpush1.msra.mxu0 0.0
    %3528 = vmatprep.subr.mxu0 0.0
    %3529 = vmatpush1.msra.mxu0 0.0
    %3530 = vmatprep.subr.mxu0 0.0
    %3531 = vmatpush1.msra.mxu0 0.0
    %3532 = vmatprep.subr.mxu0 0.0
    %3533 = vmatpush1.msra.mxu0 0.0
    %3534 = vmatprep.subr.mxu0 0.0
    %3535 = vmatpush1.msra.mxu0 0.0
    %3536 = vmatprep.subr.mxu0 0.0
    %3537 = vmatpush1.msra.mxu0 0.0
    %3538 = vmatprep.subr.mxu0 0.0
    %3539 = vmatpush1.msra.mxu0 0.0
    %3540 = vmatprep.subr.mxu0 0.0
    %3541 = vmatpush1.msra.mxu0 0.0
    %3542 = vmatprep.subr.mxu0 0.0
    %3543 = vmatpush1.msra.mxu0 0.0
    %3544 = vmatprep.subr.mxu0 0.0
    %3545 = vmatpush1.msra.mxu0 0.0
    %3546 = vmatprep.subr.mxu0 0.0
    %3547 = vmatpush1.msra.mxu0 0.0
    %3548 = vmatprep.subr.mxu0 0.0
    %3549 = vmatpush1.msra.mxu0 0.0
    %3550 = vmatprep.subr.mxu0 0.0
    %3551 = vmatpush1.msra.mxu0 0.0
    %3552 = vmatprep.subr.mxu0 0.0
    %3553 = vmatpush1.msra.mxu0 0.0
    %3554 = vmatprep.subr.mxu0 0.0
    %3555 = vmatpush1.msra.mxu0 0.0
    %3556 = vmatprep.subr.mxu0 0.0
    %3557 = vmatpush1.msra.mxu0 0.0
    %3558 = vmatprep.subr.mxu0 0.0
    %3559 = vmatpush1.msra.mxu0 0.0
    %3560 = vmatprep.subr.mxu0 0.0
    %3561 = vmatpush1.msra.mxu0 0.0
    %3562 = vmatprep.subr.mxu0 0.0
    %3563 = vmatpush1.msra.mxu0 0.0
    %3564 = vmatprep.subr.mxu0 0.0
    %3565 = vmatpush1.msra.mxu0 0.0
    %3566 = vmatprep.subr.mxu0 0.0
    %3567 = vmatpush1.msra.mxu0 0.0
    %3568 = vmatprep.subr.mxu0 0.0
    %3569 = vmatpush1.msra.mxu0 0.0
    %3570 = vmatprep.subr.mxu0 0.0
    %3571 = vmatpush1.msra.mxu0 0.0
    %3572 = vmatprep.subr.mxu0 0.0
    %3573 = vmatpush1.msra.mxu0 0.0
    %3574 = vmatprep.subr.mxu0 0.0
    %3575 = vmatpush1.msra.mxu0 0.0
    %3576 = vmatprep.subr.mxu0 0.0
    %3577 = vmatpush1.msra.mxu0 0.0
    %3578 = vmatprep.subr.mxu0 0.0
    %3579 = vmatpush1.msra.mxu0 0.0
    %3580 = vmatprep.subr.mxu0 0.0
    %3581 = vmatpush1.msra.mxu0 0.0
    %3582 = vmatprep.subr.mxu0 0.0
    %3583 = vmatpush1.msra.mxu0 0.0
    %3584 = vmatprep.subr.mxu0 0.0
    %3585 = vmatpush1.msra.mxu0 0.0
    %3586 = vmatprep.subr.mxu0 0.0
    %3587 = vmatpush1.msra.mxu0 0.0
    %3588 = vmatprep.mubr.f32.mxu0 0.0
    %3589 = vmatmul.mubr.f32.gmra.mrb[0].mxu0 %v3459
    %v3590 = vpop.f32.mrb[0].mxu0
    %v3591 = vadd.f32 0.0, %v3590
    %v3592 = vpop.f32.mrb[0].mxu0
    %3593 = vmatprep.mubr.f32.mxu0 0.0
    %3594 = vmatmul.mubr.f32.gmra.mrb[0].mxu0 %v3462
    %v3595 = vpop.f32.mrb[0].mxu0
    %v3596 = vadd.f32 0.0, %v3595
    %v3597 = vpop.f32.mrb[0].mxu0
    %3598 = vmatprep.mubr.f32.mxu0 0.0
    %3599 = vmatmul.mubr.f32.gmra.mrb[0].mxu0 %v3465
    %v3600 = vpop.f32.mrb[0].mxu0
    %v3601 = vadd.f32 0.0, %v3600
    %v3602 = vpop.f32.mrb[0].mxu0
    %3603 = vmatprep.mubr.f32.mxu0 0.0
    %3604 = vmatmul.mubr.f32.gmra.mrb[0].mxu0 %v3468
    %v3605 = vpop.f32.mrb[0].mxu0
    %v3606 = vadd.f32 0.0, %v3605
    %v3607 = vpop.f32.mrb[0].mxu0
    %3608 = vmatprep.mubr.f32.mxu0 0.0
    %3609 = vmatmul.mubr.f32.gmra.mrb[0].mxu0 %v3471
    %v3610 = vpop.f32.mrb[0].mxu0
    %v3611 = vadd.f32 0.0, %v3610
    %v3612 = vpop.f32.mrb[0].mxu0
    %3613 = vmatprep.mubr.f32.mxu0 0.0
    %3614 = vmatmul.mubr.f32.gmra.mrb[0].mxu0 %v3474
    %v3615 = vpop.f32.mrb[0].mxu0
    %v3616 = vadd.f32 0.0, %v3615
    %v3617 = vpop.f32.mrb[0].mxu0
    %3618 = vmatprep.mubr.f32.mxu0 0.0
    %3619 = vmatmul.mubr.f32.gmra.mrb[0].mxu0 %v3477
    %v3620 = vpop.f32.mrb[0].mxu0
    %v3621 = vadd.f32 0.0, %v3620
    %v3622 = vpop.f32.mrb[0].mxu0
    %3623 = vmatprep.mubr.f32.mxu0 0.0
    %3624 = vmatmul.mubr.f32.gmra.mrb[0].mxu0 %v3480
    %v3625 = vpop.f32.mrb[0].mxu0
    %v3626 = vadd.f32 0.0, %v3625
    %v3627 = vpop.f32.mrb[0].mxu0
    %3628 = vmatprep.mubr.f32.mxu0 0.0
    %3629 = vmatmul.mubr.f32.gmra.mrb[0].mxu0 %v3483
    %v3630 = vpop.f32.mrb[0].mxu0
    %v3631 = vadd.f32 0.0, %v3630
    %v3632 = vpop.f32.mrb[0].mxu0
    %3633 = vmatprep.mubr.f32.mxu0 0.0
    %3634 = vmatmul.mubr.f32.gmra.mrb[0].mxu0 %v3486
    %v3635 = vpop.f32.mrb[0].mxu0
    %v3636 = vadd.f32 0.0, %v3635
    %v3637 = vpop.f32.mrb[0].mxu0
    %3638 = vmatprep.mubr.f32.mxu0 0.0
    %3639 = vmatmul.mubr.f32.gmra.mrb[0].mxu0 %v3489
    %v3640 = vpop.f32.mrb[0].mxu0
    %v3641 = vadd.f32 0.0, %v3640
    %v3642 = vpop.f32.mrb[0].mxu0
    %3643 = vmatprep.mubr.f32.mxu0 0.0
    %3644 = vmatmul.mubr.f32.gmra.mrb[0].mxu0 %v3492
    %v3645 = vpop.f32.mrb[0].mxu0
    %v3646 = vadd.f32 0.0, %v3645
    %v3647 = vpop.f32.mrb[0].mxu0
    %3648 = vmatprep.mubr.f32.mxu0 0.0
    %3649 = vmatmul.mubr.f32.gmra.mrb[0].mxu0 %v3495
    %v3650 = vpop.f32.mrb[0].mxu0
    %v3651 = vadd.f32 0.0, %v3650
    %v3652 = vpop.f32.mrb[0].mxu0
    %3653 = vmatprep.mubr.f32.mxu0 0.0
    %3654 = vmatmul.mubr.f32.gmra.mrb[0].mxu0 %v3498
    %v3655 = vpop.f32.mrb[0].mxu0
    %v3656 = vadd.f32 0.0, %v3655
    %v3657 = vpop.f32.mrb[0].mxu0
    %3658 = vmatprep.mubr.f32.mxu0 0.0
    %3659 = vmatmul.mubr.f32.gmra.mrb[0].mxu0 %v3501
    %v3660 = vpop.f32.mrb[0].mxu0
    %v3661 = vadd.f32 0.0, %v3660
    %v3662 = vpop.f32.mrb[0].mxu0
    %3663 = vmatprep.mubr.f32.mxu0 0.0
    %3664 = vmatmul.mubr.f32.gmra.mrb[0].mxu0 %v3504
    %v3665 = vpop.f32.mrb[0].mxu0
    %v3666 = vadd.f32 0.0, %v3665
    %v3667 = vpop.f32.mrb[0].mxu0
    %3668 = vmatprep.mubr.f32.mxu0 0.0
    %3669 = vmatmul.mubr.f32.gmra.mrb[0].mxu0 %v3507
    %v3670 = vpop.f32.mrb[0].mxu0
    %v3671 = vadd.f32 0.0, %v3670
    %v3672 = vpop.f32.mrb[0].mxu0
    %3673 = vmatprep.mubr.f32.mxu0 0.0
    %3674 = vmatmul.mubr.f32.gmra.mrb[0].mxu0 %v3510
    %v3675 = vpop.f32.mrb[0].mxu0
    %v3676 = vadd.f32 0.0, %v3675
    %v3677 = vpop.f32.mrb[0].mxu0
    %3678 = vmatprep.mubr.f32.mxu0 0.0
    %3679 = vmatmul.mubr.f32.gmra.mrb[0].mxu0 %v3513
    %v3680 = vpop.f32.mrb[0].mxu0
    %v3681 = vadd.f32 0.0, %v3680
    %v3682 = vpop.f32.mrb[0].mxu0
    %3683 = vmatprep.mubr.f32.mxu0 0.0
    %3684 = vmatmul.mubr.f32.gmra.mrb[0].mxu0 %v3516
    %v3685 = vpop.f32.mrb[0].mxu0
    %v3686 = vadd.f32 0.0, %v3685
    %v3687 = vpop.f32.mrb[0].mxu0
    %3688 = vmatprep.mubr.f32.mxu0 0.0
    %3689 = vmatmul.mubr.f32.gmra.mrb[0].mxu0 %v3519
    %v3690 = vpop.f32.mrb[0].mxu0
    %v3691 = vadd.f32 0.0, %v3690
    %v3692 = vpop.f32.mrb[0].mxu0
    %3693 = vmatprep.mubr.f32.mxu0 0.0
    %3694 = vmatmul.mubr.f32.gmra.mrb[0].mxu0 %v3522
    %v3695 = vpop.f32.mrb[0].mxu0
    %v3696 = vadd.f32 0.0, %v3695
    %v3697 = vpop.f32.mrb[0].mxu0
    %3698 = vdwg.mxu0
    %v3699 = vadd.f32 %v3412, %v3591
    %v3700 = vadd.f32 %v3413, %v3596
    %v3701 = vadd.f32 %v3414, %v3601
    %v3702 = vadd.f32 %v3415, %v3606
    %v3703 = vadd.f32 %v3416, %v3611
    %v3704 = vadd.f32 %v3417, %v3616
    %v3705 = vadd.f32 %v3418, %v3621
    %v3706 = vadd.f32 %v3419, %v3626
    %v3707 = vadd.f32 %v3420, %v3631
    %v3708 = vadd.f32 %v3421, %v3636
    %v3709 = vadd.f32 %v3422, %v3641
    %v3710 = vadd.f32 %v3423, %v3646
    %v3711 = vadd.f32 %v3424, %v3651
    %v3712 = vadd.f32 %v3425, %v3656
    %v3713 = vadd.f32 %v3426, %v3661
    %v3714 = vadd.f32 %v3427, %v3666
    %v3715 = vadd.f32 %v3428, %v3671
    %v3716 = vadd.f32 %v3429, %v3676
    %v3717 = vadd.f32 %v3430, %v3681
    %v3718 = vadd.f32 %v3431, %v3686
    %v3719 = vadd.f32 %v3432, %v3691
    %v3720 = vadd.f32 %v3433, %v3696
    %v3721 = vld [vmem:[%s0 + $0x211] sm:$0xff]
    %v3722 = vld [vmem:[%s0 + $0x219] sm:$0xff]
    %v3723 = vld [vmem:[%s0 + $0x221] sm:$0xff]
    %v3724 = vld [vmem:[%s0 + $0x229] sm:$0xff]
    %v3725 = vld [vmem:[%s0 + $0x231] sm:$0xff]
    %v3726 = vld [vmem:[%s0 + $0x239] sm:$0xff]
    %v3727 = vld [vmem:[%s0 + $0x241] sm:$0xff]
    %v3728 = vld [vmem:[%s0 + $0x249] sm:$0xff]
    %v3729 = vld [vmem:[%s0 + $0x251] sm:$0xff]
    %v3730 = vld [vmem:[%s0 + $0x259] sm:$0xff]
    %v3731 = vld [vmem:[%s0 + $0x261] sm:$0xff]
    %v3732 = vld [vmem:[%s0 + $0x269] sm:$0xff]
    %v3733 = vld [vmem:[%s0 + $0x271] sm:$0xff]
    %v3734 = vld [vmem:[%s0 + $0x279] sm:$0xff]
    %v3735 = vld [vmem:[%s0 + $0x281] sm:$0xff]
    %v3736 = vld [vmem:[%s0 + $0x289] sm:$0xff]
    %v3737 = vld [vmem:[%s0 + $0x291] sm:$0xff]
    %v3738 = vld [vmem:[%s0 + $0x299] sm:$0xff]
    %v3739 = vld [vmem:[%s0 + $0x2a1] sm:$0xff]
    %v3740 = vld [vmem:[%s0 + $0x2a9] sm:$0xff]
    %v3741 = vld [vmem:[%s0 + $0x2b1] sm:$0xff]
    %v3742 = vld [vmem:[%s0 + $0x2b9] sm:$0xff]
    %s3743 = scalar_lea.vmem %s1, 104
    %v3744 = vld [vmem:[%s3743] sm:$0xff]
    %v3746 = vsel %vm81, %v3721, 0
    %v3749 = vsel %vm81, %v3722, 0
    %v3752 = vsel %vm81, %v3723, 0
    %v3755 = vsel %vm81, %v3724, 0
    %v3758 = vsel %vm81, %v3725, 0
    %v3761 = vsel %vm81, %v3726, 0
    %v3764 = vsel %vm81, %v3727, 0
    %v3767 = vsel %vm81, %v3728, 0
    %v3770 = vsel %vm81, %v3729, 0
    %v3773 = vsel %vm81, %v3730, 0
    %v3776 = vsel %vm81, %v3731, 0
    %v3779 = vsel %vm81, %v3732, 0
    %v3782 = vsel %vm81, %v3733, 0
    %v3785 = vsel %vm81, %v3734, 0
    %v3788 = vsel %vm81, %v3735, 0
    %v3791 = vsel %vm81, %v3736, 0
    %v3794 = vsel %vm81, %v3737, 0
    %v3797 = vsel %vm81, %v3738, 0
    %v3800 = vsel %vm81, %v3739, 0
    %v3803 = vsel %vm81, %v3740, 0
    %v3806 = vsel %vm81, %v3741, 0
    %v3809 = vsel %vm81, %v3742, 0
    %3811 = vmatprep.subr.mxu0 0.0
    %3812 = vmatpush1.msra.mxu0 %v3744
    %3813 = vmatprep.subr.mxu0 0.0
    %3814 = vmatpush1.msra.mxu0 0.0
    %3815 = vmatprep.subr.mxu0 0.0
    %3816 = vmatpush1.msra.mxu0 0.0
    %3817 = vmatprep.subr.mxu0 0.0
    %3818 = vmatpush1.msra.mxu0 0.0
    %3819 = vmatprep.subr.mxu0 0.0
    %3820 = vmatpush1.msra.mxu0 0.0
    %3821 = vmatprep.subr.mxu0 0.0
    %3822 = vmatpush1.msra.mxu0 0.0
    %3823 = vmatprep.subr.mxu0 0.0
    %3824 = vmatpush1.msra.mxu0 0.0
    %3825 = vmatprep.subr.mxu0 0.0
    %3826 = vmatpush1.msra.mxu0 0.0
    %3827 = vmatprep.subr.mxu0 0.0
    %3828 = vmatpush1.msra.mxu0 0.0
    %3829 = vmatprep.subr.mxu0 0.0
    %3830 = vmatpush1.msra.mxu0 0.0
    %3831 = vmatprep.subr.mxu0 0.0
    %3832 = vmatpush1.msra.mxu0 0.0
    %3833 = vmatprep.subr.mxu0 0.0
    %3834 = vmatpush1.msra.mxu0 0.0
    %3835 = vmatprep.subr.mxu0 0.0
    %3836 = vmatpush1.msra.mxu0 0.0
    %3837 = vmatprep.subr.mxu0 0.0
    %3838 = vmatpush1.msra.mxu0 0.0
    %3839 = vmatprep.subr.mxu0 0.0
    %3840 = vmatpush1.msra.mxu0 0.0
    %3841 = vmatprep.subr.mxu0 0.0
    %3842 = vmatpush1.msra.mxu0 0.0
    %3843 = vmatprep.subr.mxu0 0.0
    %3844 = vmatpush1.msra.mxu0 0.0
    %3845 = vmatprep.subr.mxu0 0.0
    %3846 = vmatpush1.msra.mxu0 0.0
    %3847 = vmatprep.subr.mxu0 0.0
    %3848 = vmatpush1.msra.mxu0 0.0
    %3849 = vmatprep.subr.mxu0 0.0
    %3850 = vmatpush1.msra.mxu0 0.0
    %3851 = vmatprep.subr.mxu0 0.0
    %3852 = vmatpush1.msra.mxu0 0.0
    %3853 = vmatprep.subr.mxu0 0.0
    %3854 = vmatpush1.msra.mxu0 0.0
    %3855 = vmatprep.subr.mxu0 0.0
    %3856 = vmatpush1.msra.mxu0 0.0
    %3857 = vmatprep.subr.mxu0 0.0
    %3858 = vmatpush1.msra.mxu0 0.0
    %3859 = vmatprep.subr.mxu0 0.0
    %3860 = vmatpush1.msra.mxu0 0.0
    %3861 = vmatprep.subr.mxu0 0.0
    %3862 = vmatpush1.msra.mxu0 0.0
    %3863 = vmatprep.subr.mxu0 0.0
    %3864 = vmatpush1.msra.mxu0 0.0
    %3865 = vmatprep.subr.mxu0 0.0
    %3866 = vmatpush1.msra.mxu0 0.0
    %3867 = vmatprep.subr.mxu0 0.0
    %3868 = vmatpush1.msra.mxu0 0.0
    %3869 = vmatprep.subr.mxu0 0.0
    %3870 = vmatpush1.msra.mxu0 0.0
    %3871 = vmatprep.subr.mxu0 0.0
    %3872 = vmatpush1.msra.mxu0 0.0
    %3873 = vmatprep.subr.mxu0 0.0
    %3874 = vmatpush1.msra.mxu0 0.0
    %3875 = vmatprep.mubr.f32.mxu0 0.0
    %3876 = vmatmul.mubr.f32.gmra.mrb[0].mxu0 %v3746
    %v3877 = vpop.f32.mrb[0].mxu0
    %v3878 = vadd.f32 0.0, %v3877
    %v3879 = vpop.f32.mrb[0].mxu0
    %3880 = vmatprep.mubr.f32.mxu0 0.0
    %3881 = vmatmul.mubr.f32.gmra.mrb[0].mxu0 %v3749
    %v3882 = vpop.f32.mrb[0].mxu0
    %v3883 = vadd.f32 0.0, %v3882
    %v3884 = vpop.f32.mrb[0].mxu0
    %3885 = vmatprep.mubr.f32.mxu0 0.0
    %3886 = vmatmul.mubr.f32.gmra.mrb[0].mxu0 %v3752
    %v3887 = vpop.f32.mrb[0].mxu0
    %v3888 = vadd.f32 0.0, %v3887
    %v3889 = vpop.f32.mrb[0].mxu0
    %3890 = vmatprep.mubr.f32.mxu0 0.0
    %3891 = vmatmul.mubr.f32.gmra.mrb[0].mxu0 %v3755
    %v3892 = vpop.f32.mrb[0].mxu0
    %v3893 = vadd.f32 0.0, %v3892
    %v3894 = vpop.f32.mrb[0].mxu0
    %3895 = vmatprep.mubr.f32.mxu0 0.0
    %3896 = vmatmul.mubr.f32.gmra.mrb[0].mxu0 %v3758
    %v3897 = vpop.f32.mrb[0].mxu0
    %v3898 = vadd.f32 0.0, %v3897
    %v3899 = vpop.f32.mrb[0].mxu0
    %3900 = vmatprep.mubr.f32.mxu0 0.0
    %3901 = vmatmul.mubr.f32.gmra.mrb[0].mxu0 %v3761
    %v3902 = vpop.f32.mrb[0].mxu0
    %v3903 = vadd.f32 0.0, %v3902
    %v3904 = vpop.f32.mrb[0].mxu0
    %3905 = vmatprep.mubr.f32.mxu0 0.0
    %3906 = vmatmul.mubr.f32.gmra.mrb[0].mxu0 %v3764
    %v3907 = vpop.f32.mrb[0].mxu0
    %v3908 = vadd.f32 0.0, %v3907
    %v3909 = vpop.f32.mrb[0].mxu0
    %3910 = vmatprep.mubr.f32.mxu0 0.0
    %3911 = vmatmul.mubr.f32.gmra.mrb[0].mxu0 %v3767
    %v3912 = vpop.f32.mrb[0].mxu0
    %v3913 = vadd.f32 0.0, %v3912
    %v3914 = vpop.f32.mrb[0].mxu0
    %3915 = vmatprep.mubr.f32.mxu0 0.0
    %3916 = vmatmul.mubr.f32.gmra.mrb[0].mxu0 %v3770
    %v3917 = vpop.f32.mrb[0].mxu0
    %v3918 = vadd.f32 0.0, %v3917
    %v3919 = vpop.f32.mrb[0].mxu0
    %3920 = vmatprep.mubr.f32.mxu0 0.0
    %3921 = vmatmul.mubr.f32.gmra.mrb[0].mxu0 %v3773
    %v3922 = vpop.f32.mrb[0].mxu0
    %v3923 = vadd.f32 0.0, %v3922
    %v3924 = vpop.f32.mrb[0].mxu0
    %3925 = vmatprep.mubr.f32.mxu0 0.0
    %3926 = vmatmul.mubr.f32.gmra.mrb[0].mxu0 %v3776
    %v3927 = vpop.f32.mrb[0].mxu0
    %v3928 = vadd.f32 0.0, %v3927
    %v3929 = vpop.f32.mrb[0].mxu0
    %3930 = vmatprep.mubr.f32.mxu0 0.0
    %3931 = vmatmul.mubr.f32.gmra.mrb[0].mxu0 %v3779
    %v3932 = vpop.f32.mrb[0].mxu0
    %v3933 = vadd.f32 0.0, %v3932
    %v3934 = vpop.f32.mrb[0].mxu0
    %3935 = vmatprep.mubr.f32.mxu0 0.0
    %3936 = vmatmul.mubr.f32.gmra.mrb[0].mxu0 %v3782
    %v3937 = vpop.f32.mrb[0].mxu0
    %v3938 = vadd.f32 0.0, %v3937
    %v3939 = vpop.f32.mrb[0].mxu0
    %3940 = vmatprep.mubr.f32.mxu0 0.0
    %3941 = vmatmul.mubr.f32.gmra.mrb[0].mxu0 %v3785
    %v3942 = vpop.f32.mrb[0].mxu0
    %v3943 = vadd.f32 0.0, %v3942
    %v3944 = vpop.f32.mrb[0].mxu0
    %3945 = vmatprep.mubr.f32.mxu0 0.0
    %3946 = vmatmul.mubr.f32.gmra.mrb[0].mxu0 %v3788
    %v3947 = vpop.f32.mrb[0].mxu0
    %v3948 = vadd.f32 0.0, %v3947
    %v3949 = vpop.f32.mrb[0].mxu0
    %3950 = vmatprep.mubr.f32.mxu0 0.0
    %3951 = vmatmul.mubr.f32.gmra.mrb[0].mxu0 %v3791
    %v3952 = vpop.f32.mrb[0].mxu0
    %v3953 = vadd.f32 0.0, %v3952
    %v3954 = vpop.f32.mrb[0].mxu0
    %3955 = vmatprep.mubr.f32.mxu0 0.0
    %3956 = vmatmul.mubr.f32.gmra.mrb[0].mxu0 %v3794
    %v3957 = vpop.f32.mrb[0].mxu0
    %v3958 = vadd.f32 0.0, %v3957
    %v3959 = vpop.f32.mrb[0].mxu0
    %3960 = vmatprep.mubr.f32.mxu0 0.0
    %3961 = vmatmul.mubr.f32.gmra.mrb[0].mxu0 %v3797
    %v3962 = vpop.f32.mrb[0].mxu0
    %v3963 = vadd.f32 0.0, %v3962
    %v3964 = vpop.f32.mrb[0].mxu0
    %3965 = vmatprep.mubr.f32.mxu0 0.0
    %3966 = vmatmul.mubr.f32.gmra.mrb[0].mxu0 %v3800
    %v3967 = vpop.f32.mrb[0].mxu0
    %v3968 = vadd.f32 0.0, %v3967
    %v3969 = vpop.f32.mrb[0].mxu0
    %3970 = vmatprep.mubr.f32.mxu0 0.0
    %3971 = vmatmul.mubr.f32.gmra.mrb[0].mxu0 %v3803
    %v3972 = vpop.f32.mrb[0].mxu0
    %v3973 = vadd.f32 0.0, %v3972
    %v3974 = vpop.f32.mrb[0].mxu0
    %3975 = vmatprep.mubr.f32.mxu0 0.0
    %3976 = vmatmul.mubr.f32.gmra.mrb[0].mxu0 %v3806
    %v3977 = vpop.f32.mrb[0].mxu0
    %v3978 = vadd.f32 0.0, %v3977
    %v3979 = vpop.f32.mrb[0].mxu0
    %3980 = vmatprep.mubr.f32.mxu0 0.0
    %3981 = vmatmul.mubr.f32.gmra.mrb[0].mxu0 %v3809
    %v3982 = vpop.f32.mrb[0].mxu0
    %v3983 = vadd.f32 0.0, %v3982
    %v3984 = vpop.f32.mrb[0].mxu0
    %3985 = vdwg.mxu0
    %v3986 = vadd.f32 %v3699, %v3878
    %v3987 = vadd.f32 %v3700, %v3883
    %v3988 = vadd.f32 %v3701, %v3888
    %v3989 = vadd.f32 %v3702, %v3893
    %v3990 = vadd.f32 %v3703, %v3898
    %v3991 = vadd.f32 %v3704, %v3903
    %v3992 = vadd.f32 %v3705, %v3908
    %v3993 = vadd.f32 %v3706, %v3913
    %v3994 = vadd.f32 %v3707, %v3918
    %v3995 = vadd.f32 %v3708, %v3923
    %v3996 = vadd.f32 %v3709, %v3928
    %v3997 = vadd.f32 %v3710, %v3933
    %v3998 = vadd.f32 %v3711, %v3938
    %v3999 = vadd.f32 %v3712, %v3943
    %v4000 = vadd.f32 %v3713, %v3948
    %v4001 = vadd.f32 %v3714, %v3953
    %v4002 = vadd.f32 %v3715, %v3958
    %v4003 = vadd.f32 %v3716, %v3963
    %v4004 = vadd.f32 %v3717, %v3968
    %v4005 = vadd.f32 %v3718, %v3973
    %v4006 = vadd.f32 %v3719, %v3978
    %v4007 = vadd.f32 %v3720, %v3983
    %v4008 = vld [vmem:[%s0 + $0x219] sm:$0xff]
    %v4009 = vld [vmem:[%s0 + $0x221] sm:$0xff]
    %v4010 = vld [vmem:[%s0 + $0x229] sm:$0xff]
    %v4011 = vld [vmem:[%s0 + $0x231] sm:$0xff]
    %v4012 = vld [vmem:[%s0 + $0x239] sm:$0xff]
    %v4013 = vld [vmem:[%s0 + $0x241] sm:$0xff]
    %v4014 = vld [vmem:[%s0 + $0x249] sm:$0xff]
    %v4015 = vld [vmem:[%s0 + $0x251] sm:$0xff]
    %v4016 = vld [vmem:[%s0 + $0x259] sm:$0xff]
    %v4017 = vld [vmem:[%s0 + $0x261] sm:$0xff]
    %v4018 = vld [vmem:[%s0 + $0x269] sm:$0xff]
    %v4019 = vld [vmem:[%s0 + $0x271] sm:$0xff]
    %v4020 = vld [vmem:[%s0 + $0x279] sm:$0xff]
    %v4021 = vld [vmem:[%s0 + $0x281] sm:$0xff]
    %v4022 = vld [vmem:[%s0 + $0x289] sm:$0xff]
    %v4023 = vld [vmem:[%s0 + $0x291] sm:$0xff]
    %v4024 = vld [vmem:[%s0 + $0x299] sm:$0xff]
    %v4025 = vld [vmem:[%s0 + $0x2a1] sm:$0xff]
    %v4026 = vld [vmem:[%s0 + $0x2a9] sm:$0xff]
    %v4027 = vld [vmem:[%s0 + $0x2b1] sm:$0xff]
    %v4028 = vld [vmem:[%s0 + $0x2b9] sm:$0xff]
    %v4029 = vld [vmem:[%s0 + $0x2c1] sm:$0xff]
    %s4030 = scalar_lea.vmem %s1, 112
    %v4031 = vld [vmem:[%s4030] sm:$0xff]
    %v4033 = vsel %vm81, %v4008, 0
    %v4036 = vsel %vm81, %v4009, 0
    %v4039 = vsel %vm81, %v4010, 0
    %v4042 = vsel %vm81, %v4011, 0
    %v4045 = vsel %vm81, %v4012, 0
    %v4048 = vsel %vm81, %v4013, 0
    %v4051 = vsel %vm81, %v4014, 0
    %v4054 = vsel %vm81, %v4015, 0
    %v4057 = vsel %vm81, %v4016, 0
    %v4060 = vsel %vm81, %v4017, 0
    %v4063 = vsel %vm81, %v4018, 0
    %v4066 = vsel %vm81, %v4019, 0
    %v4069 = vsel %vm81, %v4020, 0
    %v4072 = vsel %vm81, %v4021, 0
    %v4075 = vsel %vm81, %v4022, 0
    %v4078 = vsel %vm81, %v4023, 0
    %v4081 = vsel %vm81, %v4024, 0
    %v4084 = vsel %vm81, %v4025, 0
    %v4087 = vsel %vm81, %v4026, 0
    %v4090 = vsel %vm81, %v4027, 0
    %v4093 = vsel %vm81, %v4028, 0
    %v4096 = vsel %vm81, %v4029, 0
    %4098 = vmatprep.subr.mxu0 0.0
    %4099 = vmatpush1.msra.mxu0 %v4031
    %4100 = vmatprep.subr.mxu0 0.0
    %4101 = vmatpush1.msra.mxu0 0.0
    %4102 = vmatprep.subr.mxu0 0.0
    %4103 = vmatpush1.msra.mxu0 0.0
    %4104 = vmatprep.subr.mxu0 0.0
    %4105 = vmatpush1.msra.mxu0 0.0
    %4106 = vmatprep.subr.mxu0 0.0
    %4107 = vmatpush1.msra.mxu0 0.0
    %4108 = vmatprep.subr.mxu0 0.0
    %4109 = vmatpush1.msra.mxu0 0.0
    %4110 = vmatprep.subr.mxu0 0.0
    %4111 = vmatpush1.msra.mxu0 0.0
    %4112 = vmatprep.subr.mxu0 0.0
    %4113 = vmatpush1.msra.mxu0 0.0
    %4114 = vmatprep.subr.mxu0 0.0
    %4115 = vmatpush1.msra.mxu0 0.0
    %4116 = vmatprep.subr.mxu0 0.0
    %4117 = vmatpush1.msra.mxu0 0.0
    %4118 = vmatprep.subr.mxu0 0.0
    %4119 = vmatpush1.msra.mxu0 0.0
    %4120 = vmatprep.subr.mxu0 0.0
    %4121 = vmatpush1.msra.mxu0 0.0
    %4122 = vmatprep.subr.mxu0 0.0
    %4123 = vmatpush1.msra.mxu0 0.0
    %4124 = vmatprep.subr.mxu0 0.0
    %4125 = vmatpush1.msra.mxu0 0.0
    %4126 = vmatprep.subr.mxu0 0.0
    %4127 = vmatpush1.msra.mxu0 0.0
    %4128 = vmatprep.subr.mxu0 0.0
    %4129 = vmatpush1.msra.mxu0 0.0
    %4130 = vmatprep.subr.mxu0 0.0
    %4131 = vmatpush1.msra.mxu0 0.0
    %4132 = vmatprep.subr.mxu0 0.0
    %4133 = vmatpush1.msra.mxu0 0.0
    %4134 = vmatprep.subr.mxu0 0.0
    %4135 = vmatpush1.msra.mxu0 0.0
    %4136 = vmatprep.subr.mxu0 0.0
    %4137 = vmatpush1.msra.mxu0 0.0
    %4138 = vmatprep.subr.mxu0 0.0
    %4139 = vmatpush1.msra.mxu0 0.0
    %4140 = vmatprep.subr.mxu0 0.0
    %4141 = vmatpush1.msra.mxu0 0.0
    %4142 = vmatprep.subr.mxu0 0.0
    %4143 = vmatpush1.msra.mxu0 0.0
    %4144 = vmatprep.subr.mxu0 0.0
    %4145 = vmatpush1.msra.mxu0 0.0
    %4146 = vmatprep.subr.mxu0 0.0
    %4147 = vmatpush1.msra.mxu0 0.0
    %4148 = vmatprep.subr.mxu0 0.0
    %4149 = vmatpush1.msra.mxu0 0.0
    %4150 = vmatprep.subr.mxu0 0.0
    %4151 = vmatpush1.msra.mxu0 0.0
    %4152 = vmatprep.subr.mxu0 0.0
    %4153 = vmatpush1.msra.mxu0 0.0
    %4154 = vmatprep.subr.mxu0 0.0
    %4155 = vmatpush1.msra.mxu0 0.0
    %4156 = vmatprep.subr.mxu0 0.0
    %4157 = vmatpush1.msra.mxu0 0.0
    %4158 = vmatprep.subr.mxu0 0.0
    %4159 = vmatpush1.msra.mxu0 0.0
    %4160 = vmatprep.subr.mxu0 0.0
    %4161 = vmatpush1.msra.mxu0 0.0
    %4162 = vmatprep.mubr.f32.mxu0 0.0
    %4163 = vmatmul.mubr.f32.gmra.mrb[0].mxu0 %v4033
    %v4164 = vpop.f32.mrb[0].mxu0
    %v4165 = vadd.f32 0.0, %v4164
    %v4166 = vpop.f32.mrb[0].mxu0
    %4167 = vmatprep.mubr.f32.mxu0 0.0
    %4168 = vmatmul.mubr.f32.gmra.mrb[0].mxu0 %v4036
    %v4169 = vpop.f32.mrb[0].mxu0
    %v4170 = vadd.f32 0.0, %v4169
    %v4171 = vpop.f32.mrb[0].mxu0
    %4172 = vmatprep.mubr.f32.mxu0 0.0
    %4173 = vmatmul.mubr.f32.gmra.mrb[0].mxu0 %v4039
    %v4174 = vpop.f32.mrb[0].mxu0
    %v4175 = vadd.f32 0.0, %v4174
    %v4176 = vpop.f32.mrb[0].mxu0
    %4177 = vmatprep.mubr.f32.mxu0 0.0
    %4178 = vmatmul.mubr.f32.gmra.mrb[0].mxu0 %v4042
    %v4179 = vpop.f32.mrb[0].mxu0
    %v4180 = vadd.f32 0.0, %v4179
    %v4181 = vpop.f32.mrb[0].mxu0
    %4182 = vmatprep.mubr.f32.mxu0 0.0
    %4183 = vmatmul.mubr.f32.gmra.mrb[0].mxu0 %v4045
    %v4184 = vpop.f32.mrb[0].mxu0
    %v4185 = vadd.f32 0.0, %v4184
    %v4186 = vpop.f32.mrb[0].mxu0
    %4187 = vmatprep.mubr.f32.mxu0 0.0
    %4188 = vmatmul.mubr.f32.gmra.mrb[0].mxu0 %v4048
    %v4189 = vpop.f32.mrb[0].mxu0
    %v4190 = vadd.f32 0.0, %v4189
    %v4191 = vpop.f32.mrb[0].mxu0
    %4192 = vmatprep.mubr.f32.mxu0 0.0
    %4193 = vmatmul.mubr.f32.gmra.mrb[0].mxu0 %v4051
    %v4194 = vpop.f32.mrb[0].mxu0
    %v4195 = vadd.f32 0.0, %v4194
    %v4196 = vpop.f32.mrb[0].mxu0
    %4197 = vmatprep.mubr.f32.mxu0 0.0
    %4198 = vmatmul.mubr.f32.gmra.mrb[0].mxu0 %v4054
    %v4199 = vpop.f32.mrb[0].mxu0
    %v4200 = vadd.f32 0.0, %v4199
    %v4201 = vpop.f32.mrb[0].mxu0
    %4202 = vmatprep.mubr.f32.mxu0 0.0
    %4203 = vmatmul.mubr.f32.gmra.mrb[0].mxu0 %v4057
    %v4204 = vpop.f32.mrb[0].mxu0
    %v4205 = vadd.f32 0.0, %v4204
    %v4206 = vpop.f32.mrb[0].mxu0
    %4207 = vmatprep.mubr.f32.mxu0 0.0
    %4208 = vmatmul.mubr.f32.gmra.mrb[0].mxu0 %v4060
    %v4209 = vpop.f32.mrb[0].mxu0
    %v4210 = vadd.f32 0.0, %v4209
    %v4211 = vpop.f32.mrb[0].mxu0
    %4212 = vmatprep.mubr.f32.mxu0 0.0
    %4213 = vmatmul.mubr.f32.gmra.mrb[0].mxu0 %v4063
    %v4214 = vpop.f32.mrb[0].mxu0
    %v4215 = vadd.f32 0.0, %v4214
    %v4216 = vpop.f32.mrb[0].mxu0
    %4217 = vmatprep.mubr.f32.mxu0 0.0
    %4218 = vmatmul.mubr.f32.gmra.mrb[0].mxu0 %v4066
    %v4219 = vpop.f32.mrb[0].mxu0
    %v4220 = vadd.f32 0.0, %v4219
    %v4221 = vpop.f32.mrb[0].mxu0
    %4222 = vmatprep.mubr.f32.mxu0 0.0
    %4223 = vmatmul.mubr.f32.gmra.mrb[0].mxu0 %v4069
    %v4224 = vpop.f32.mrb[0].mxu0
    %v4225 = vadd.f32 0.0, %v4224
    %v4226 = vpop.f32.mrb[0].mxu0
    %4227 = vmatprep.mubr.f32.mxu0 0.0
    %4228 = vmatmul.mubr.f32.gmra.mrb[0].mxu0 %v4072
    %v4229 = vpop.f32.mrb[0].mxu0
    %v4230 = vadd.f32 0.0, %v4229
    %v4231 = vpop.f32.mrb[0].mxu0
    %4232 = vmatprep.mubr.f32.mxu0 0.0
    %4233 = vmatmul.mubr.f32.gmra.mrb[0].mxu0 %v4075
    %v4234 = vpop.f32.mrb[0].mxu0
    %v4235 = vadd.f32 0.0, %v4234
    %v4236 = vpop.f32.mrb[0].mxu0
    %4237 = vmatprep.mubr.f32.mxu0 0.0
    %4238 = vmatmul.mubr.f32.gmra.mrb[0].mxu0 %v4078
    %v4239 = vpop.f32.mrb[0].mxu0
    %v4240 = vadd.f32 0.0, %v4239
    %v4241 = vpop.f32.mrb[0].mxu0
    %4242 = vmatprep.mubr.f32.mxu0 0.0
    %4243 = vmatmul.mubr.f32.gmra.mrb[0].mxu0 %v4081
    %v4244 = vpop.f32.mrb[0].mxu0
    %v4245 = vadd.f32 0.0, %v4244
    %v4246 = vpop.f32.mrb[0].mxu0
    %4247 = vmatprep.mubr.f32.mxu0 0.0
    %4248 = vmatmul.mubr.f32.gmra.mrb[0].mxu0 %v4084
    %v4249 = vpop.f32.mrb[0].mxu0
    %v4250 = vadd.f32 0.0, %v4249
    %v4251 = vpop.f32.mrb[0].mxu0
    %4252 = vmatprep.mubr.f32.mxu0 0.0
    %4253 = vmatmul.mubr.f32.gmra.mrb[0].mxu0 %v4087
    %v4254 = vpop.f32.mrb[0].mxu0
    %v4255 = vadd.f32 0.0, %v4254
    %v4256 = vpop.f32.mrb[0].mxu0
    %4257 = vmatprep.mubr.f32.mxu0 0.0
    %4258 = vmatmul.mubr.f32.gmra.mrb[0].mxu0 %v4090
    %v4259 = vpop.f32.mrb[0].mxu0
    %v4260 = vadd.f32 0.0, %v4259
    %v4261 = vpop.f32.mrb[0].mxu0
    %4262 = vmatprep.mubr.f32.mxu0 0.0
    %4263 = vmatmul.mubr.f32.gmra.mrb[0].mxu0 %v4093
    %v4264 = vpop.f32.mrb[0].mxu0
    %v4265 = vadd.f32 0.0, %v4264
    %v4266 = vpop.f32.mrb[0].mxu0
    %4267 = vmatprep.mubr.f32.mxu0 0.0
    %4268 = vmatmul.mubr.f32.gmra.mrb[0].mxu0 %v4096
    %v4269 = vpop.f32.mrb[0].mxu0
    %v4270 = vadd.f32 0.0, %v4269
    %v4271 = vpop.f32.mrb[0].mxu0
    %4272 = vdwg.mxu0
    %v4273 = vadd.f32 %v3986, %v4165
    %v4274 = vadd.f32 %v3987, %v4170
    %v4275 = vadd.f32 %v3988, %v4175
    %v4276 = vadd.f32 %v3989, %v4180
    %v4277 = vadd.f32 %v3990, %v4185
    %v4278 = vadd.f32 %v3991, %v4190
    %v4279 = vadd.f32 %v3992, %v4195
    %v4280 = vadd.f32 %v3993, %v4200
    %v4281 = vadd.f32 %v3994, %v4205
    %v4282 = vadd.f32 %v3995, %v4210
    %v4283 = vadd.f32 %v3996, %v4215
    %v4284 = vadd.f32 %v3997, %v4220
    %v4285 = vadd.f32 %v3998, %v4225
    %v4286 = vadd.f32 %v3999, %v4230
    %v4287 = vadd.f32 %v4000, %v4235
    %v4288 = vadd.f32 %v4001, %v4240
    %v4289 = vadd.f32 %v4002, %v4245
    %v4290 = vadd.f32 %v4003, %v4250
    %v4291 = vadd.f32 %v4004, %v4255
    %v4292 = vadd.f32 %v4005, %v4260
    %v4293 = vadd.f32 %v4006, %v4265
    %v4294 = vadd.f32 %v4007, %v4270
    %v4295 = vld [vmem:[%s0 + $0x21a] sm:$0xff]
    %v4296 = vld [vmem:[%s0 + $0x222] sm:$0xff]
    %v4297 = vld [vmem:[%s0 + $0x22a] sm:$0xff]
    %v4298 = vld [vmem:[%s0 + $0x232] sm:$0xff]
    %v4299 = vld [vmem:[%s0 + $0x23a] sm:$0xff]
    %v4300 = vld [vmem:[%s0 + $0x242] sm:$0xff]
    %v4301 = vld [vmem:[%s0 + $0x24a] sm:$0xff]
    %v4302 = vld [vmem:[%s0 + $0x252] sm:$0xff]
    %v4303 = vld [vmem:[%s0 + $0x25a] sm:$0xff]
    %v4304 = vld [vmem:[%s0 + $0x262] sm:$0xff]
    %v4305 = vld [vmem:[%s0 + $0x26a] sm:$0xff]
    %v4306 = vld [vmem:[%s0 + $0x272] sm:$0xff]
    %v4307 = vld [vmem:[%s0 + $0x27a] sm:$0xff]
    %v4308 = vld [vmem:[%s0 + $0x282] sm:$0xff]
    %v4309 = vld [vmem:[%s0 + $0x28a] sm:$0xff]
    %v4310 = vld [vmem:[%s0 + $0x292] sm:$0xff]
    %v4311 = vld [vmem:[%s0 + $0x29a] sm:$0xff]
    %v4312 = vld [vmem:[%s0 + $0x2a2] sm:$0xff]
    %v4313 = vld [vmem:[%s0 + $0x2aa] sm:$0xff]
    %v4314 = vld [vmem:[%s0 + $0x2b2] sm:$0xff]
    %v4315 = vld [vmem:[%s0 + $0x2ba] sm:$0xff]
    %v4316 = vld [vmem:[%s0 + $0x2c2] sm:$0xff]
    %s4317 = scalar_lea.vmem %s1, 120
    %v4318 = vld [vmem:[%s4317] sm:$0xff]
    %v4320 = vsel %vm81, %v4295, 0
    %v4323 = vsel %vm81, %v4296, 0
    %v4326 = vsel %vm81, %v4297, 0
    %v4329 = vsel %vm81, %v4298, 0
    %v4332 = vsel %vm81, %v4299, 0
    %v4335 = vsel %vm81, %v4300, 0
    %v4338 = vsel %vm81, %v4301, 0
    %v4341 = vsel %vm81, %v4302, 0
    %v4344 = vsel %vm81, %v4303, 0
    %v4347 = vsel %vm81, %v4304, 0
    %v4350 = vsel %vm81, %v4305, 0
    %v4353 = vsel %vm81, %v4306, 0
    %v4356 = vsel %vm81, %v4307, 0
    %v4359 = vsel %vm81, %v4308, 0
    %v4362 = vsel %vm81, %v4309, 0
    %v4365 = vsel %vm81, %v4310, 0
    %v4368 = vsel %vm81, %v4311, 0
    %v4371 = vsel %vm81, %v4312, 0
    %v4374 = vsel %vm81, %v4313, 0
    %v4377 = vsel %vm81, %v4314, 0
    %v4380 = vsel %vm81, %v4315, 0
    %v4383 = vsel %vm81, %v4316, 0
    %4385 = vmatprep.subr.mxu0 0.0
    %4386 = vmatpush1.msra.mxu0 %v4318
    %4387 = vmatprep.subr.mxu0 0.0
    %4388 = vmatpush1.msra.mxu0 0.0
    %4389 = vmatprep.subr.mxu0 0.0
    %4390 = vmatpush1.msra.mxu0 0.0
    %4391 = vmatprep.subr.mxu0 0.0
    %4392 = vmatpush1.msra.mxu0 0.0
    %4393 = vmatprep.subr.mxu0 0.0
    %4394 = vmatpush1.msra.mxu0 0.0
    %4395 = vmatprep.subr.mxu0 0.0
    %4396 = vmatpush1.msra.mxu0 0.0
    %4397 = vmatprep.subr.mxu0 0.0
    %4398 = vmatpush1.msra.mxu0 0.0
    %4399 = vmatprep.subr.mxu0 0.0
    %4400 = vmatpush1.msra.mxu0 0.0
    %4401 = vmatprep.subr.mxu0 0.0
    %4402 = vmatpush1.msra.mxu0 0.0
    %4403 = vmatprep.subr.mxu0 0.0
    %4404 = vmatpush1.msra.mxu0 0.0
    %4405 = vmatprep.subr.mxu0 0.0
    %4406 = vmatpush1.msra.mxu0 0.0
    %4407 = vmatprep.subr.mxu0 0.0
    %4408 = vmatpush1.msra.mxu0 0.0
    %4409 = vmatprep.subr.mxu0 0.0
    %4410 = vmatpush1.msra.mxu0 0.0
    %4411 = vmatprep.subr.mxu0 0.0
    %4412 = vmatpush1.msra.mxu0 0.0
    %4413 = vmatprep.subr.mxu0 0.0
    %4414 = vmatpush1.msra.mxu0 0.0
    %4415 = vmatprep.subr.mxu0 0.0
    %4416 = vmatpush1.msra.mxu0 0.0
    %4417 = vmatprep.subr.mxu0 0.0
    %4418 = vmatpush1.msra.mxu0 0.0
    %4419 = vmatprep.subr.mxu0 0.0
    %4420 = vmatpush1.msra.mxu0 0.0
    %4421 = vmatprep.subr.mxu0 0.0
    %4422 = vmatpush1.msra.mxu0 0.0
    %4423 = vmatprep.subr.mxu0 0.0
    %4424 = vmatpush1.msra.mxu0 0.0
    %4425 = vmatprep.subr.mxu0 0.0
    %4426 = vmatpush1.msra.mxu0 0.0
    %4427 = vmatprep.subr.mxu0 0.0
    %4428 = vmatpush1.msra.mxu0 0.0
    %4429 = vmatprep.subr.mxu0 0.0
    %4430 = vmatpush1.msra.mxu0 0.0
    %4431 = vmatprep.subr.mxu0 0.0
    %4432 = vmatpush1.msra.mxu0 0.0
    %4433 = vmatprep.subr.mxu0 0.0
    %4434 = vmatpush1.msra.mxu0 0.0
    %4435 = vmatprep.subr.mxu0 0.0
    %4436 = vmatpush1.msra.mxu0 0.0
    %4437 = vmatprep.subr.mxu0 0.0
    %4438 = vmatpush1.msra.mxu0 0.0
    %4439 = vmatprep.subr.mxu0 0.0
    %4440 = vmatpush1.msra.mxu0 0.0
    %4441 = vmatprep.subr.mxu0 0.0
    %4442 = vmatpush1.msra.mxu0 0.0
    %4443 = vmatprep.subr.mxu0 0.0
    %4444 = vmatpush1.msra.mxu0 0.0
    %4445 = vmatprep.subr.mxu0 0.0
    %4446 = vmatpush1.msra.mxu0 0.0
    %4447 = vmatprep.subr.mxu0 0.0
    %4448 = vmatpush1.msra.mxu0 0.0
    %4449 = vmatprep.mubr.f32.mxu0 0.0
    %4450 = vmatmul.mubr.f32.gmra.mrb[0].mxu0 %v4320
    %v4451 = vpop.f32.mrb[0].mxu0
    %v4452 = vadd.f32 0.0, %v4451
    %v4453 = vpop.f32.mrb[0].mxu0
    %4454 = vmatprep.mubr.f32.mxu0 0.0
    %4455 = vmatmul.mubr.f32.gmra.mrb[0].mxu0 %v4323
    %v4456 = vpop.f32.mrb[0].mxu0
    %v4457 = vadd.f32 0.0, %v4456
    %v4458 = vpop.f32.mrb[0].mxu0
    %4459 = vmatprep.mubr.f32.mxu0 0.0
    %4460 = vmatmul.mubr.f32.gmra.mrb[0].mxu0 %v4326
    %v4461 = vpop.f32.mrb[0].mxu0
    %v4462 = vadd.f32 0.0, %v4461
    %v4463 = vpop.f32.mrb[0].mxu0
    %4464 = vmatprep.mubr.f32.mxu0 0.0
    %4465 = vmatmul.mubr.f32.gmra.mrb[0].mxu0 %v4329
    %v4466 = vpop.f32.mrb[0].mxu0
    %v4467 = vadd.f32 0.0, %v4466
    %v4468 = vpop.f32.mrb[0].mxu0
    %4469 = vmatprep.mubr.f32.mxu0 0.0
    %4470 = vmatmul.mubr.f32.gmra.mrb[0].mxu0 %v4332
    %v4471 = vpop.f32.mrb[0].mxu0
    %v4472 = vadd.f32 0.0, %v4471
    %v4473 = vpop.f32.mrb[0].mxu0
    %4474 = vmatprep.mubr.f32.mxu0 0.0
    %4475 = vmatmul.mubr.f32.gmra.mrb[0].mxu0 %v4335
    %v4476 = vpop.f32.mrb[0].mxu0
    %v4477 = vadd.f32 0.0, %v4476
    %v4478 = vpop.f32.mrb[0].mxu0
    %4479 = vmatprep.mubr.f32.mxu0 0.0
    %4480 = vmatmul.mubr.f32.gmra.mrb[0].mxu0 %v4338
    %v4481 = vpop.f32.mrb[0].mxu0
    %v4482 = vadd.f32 0.0, %v4481
    %v4483 = vpop.f32.mrb[0].mxu0
    %4484 = vmatprep.mubr.f32.mxu0 0.0
    %4485 = vmatmul.mubr.f32.gmra.mrb[0].mxu0 %v4341
    %v4486 = vpop.f32.mrb[0].mxu0
    %v4487 = vadd.f32 0.0, %v4486
    %v4488 = vpop.f32.mrb[0].mxu0
    %4489 = vmatprep.mubr.f32.mxu0 0.0
    %4490 = vmatmul.mubr.f32.gmra.mrb[0].mxu0 %v4344
    %v4491 = vpop.f32.mrb[0].mxu0
    %v4492 = vadd.f32 0.0, %v4491
    %v4493 = vpop.f32.mrb[0].mxu0
    %4494 = vmatprep.mubr.f32.mxu0 0.0
    %4495 = vmatmul.mubr.f32.gmra.mrb[0].mxu0 %v4347
    %v4496 = vpop.f32.mrb[0].mxu0
    %v4497 = vadd.f32 0.0, %v4496
    %v4498 = vpop.f32.mrb[0].mxu0
    %4499 = vmatprep.mubr.f32.mxu0 0.0
    %4500 = vmatmul.mubr.f32.gmra.mrb[0].mxu0 %v4350
    %v4501 = vpop.f32.mrb[0].mxu0
    %v4502 = vadd.f32 0.0, %v4501
    %v4503 = vpop.f32.mrb[0].mxu0
    %4504 = vmatprep.mubr.f32.mxu0 0.0
    %4505 = vmatmul.mubr.f32.gmra.mrb[0].mxu0 %v4353
    %v4506 = vpop.f32.mrb[0].mxu0
    %v4507 = vadd.f32 0.0, %v4506
    %v4508 = vpop.f32.mrb[0].mxu0
    %4509 = vmatprep.mubr.f32.mxu0 0.0
    %4510 = vmatmul.mubr.f32.gmra.mrb[0].mxu0 %v4356
    %v4511 = vpop.f32.mrb[0].mxu0
    %v4512 = vadd.f32 0.0, %v4511
    %v4513 = vpop.f32.mrb[0].mxu0
    %4514 = vmatprep.mubr.f32.mxu0 0.0
    %4515 = vmatmul.mubr.f32.gmra.mrb[0].mxu0 %v4359
    %v4516 = vpop.f32.mrb[0].mxu0
    %v4517 = vadd.f32 0.0, %v4516
    %v4518 = vpop.f32.mrb[0].mxu0
    %4519 = vmatprep.mubr.f32.mxu0 0.0
    %4520 = vmatmul.mubr.f32.gmra.mrb[0].mxu0 %v4362
    %v4521 = vpop.f32.mrb[0].mxu0
    %v4522 = vadd.f32 0.0, %v4521
    %v4523 = vpop.f32.mrb[0].mxu0
    %4524 = vmatprep.mubr.f32.mxu0 0.0
    %4525 = vmatmul.mubr.f32.gmra.mrb[0].mxu0 %v4365
    %v4526 = vpop.f32.mrb[0].mxu0
    %v4527 = vadd.f32 0.0, %v4526
    %v4528 = vpop.f32.mrb[0].mxu0
    %4529 = vmatprep.mubr.f32.mxu0 0.0
    %4530 = vmatmul.mubr.f32.gmra.mrb[0].mxu0 %v4368
    %v4531 = vpop.f32.mrb[0].mxu0
    %v4532 = vadd.f32 0.0, %v4531
    %v4533 = vpop.f32.mrb[0].mxu0
    %4534 = vmatprep.mubr.f32.mxu0 0.0
    %4535 = vmatmul.mubr.f32.gmra.mrb[0].mxu0 %v4371
    %v4536 = vpop.f32.mrb[0].mxu0
    %v4537 = vadd.f32 0.0, %v4536
    %v4538 = vpop.f32.mrb[0].mxu0
    %4539 = vmatprep.mubr.f32.mxu0 0.0
    %4540 = vmatmul.mubr.f32.gmra.mrb[0].mxu0 %v4374
    %v4541 = vpop.f32.mrb[0].mxu0
    %v4542 = vadd.f32 0.0, %v4541
    %v4543 = vpop.f32.mrb[0].mxu0
    %4544 = vmatprep.mubr.f32.mxu0 0.0
    %4545 = vmatmul.mubr.f32.gmra.mrb[0].mxu0 %v4377
    %v4546 = vpop.f32.mrb[0].mxu0
    %v4547 = vadd.f32 0.0, %v4546
    %v4548 = vpop.f32.mrb[0].mxu0
    %4549 = vmatprep.mubr.f32.mxu0 0.0
    %4550 = vmatmul.mubr.f32.gmra.mrb[0].mxu0 %v4380
    %v4551 = vpop.f32.mrb[0].mxu0
    %v4552 = vadd.f32 0.0, %v4551
    %v4553 = vpop.f32.mrb[0].mxu0
    %4554 = vmatprep.mubr.f32.mxu0 0.0
    %4555 = vmatmul.mubr.f32.gmra.mrb[0].mxu0 %v4383
    %v4556 = vpop.f32.mrb[0].mxu0
    %v4557 = vadd.f32 0.0, %v4556
    %v4558 = vpop.f32.mrb[0].mxu0
    %4559 = vdwg.mxu0
    %v4560 = vadd.f32 %v4273, %v4452
    %v4561 = vadd.f32 %v4274, %v4457
    %v4562 = vadd.f32 %v4275, %v4462
    %v4563 = vadd.f32 %v4276, %v4467
    %v4564 = vadd.f32 %v4277, %v4472
    %v4565 = vadd.f32 %v4278, %v4477
    %v4566 = vadd.f32 %v4279, %v4482
    %v4567 = vadd.f32 %v4280, %v4487
    %v4568 = vadd.f32 %v4281, %v4492
    %v4569 = vadd.f32 %v4282, %v4497
    %v4570 = vadd.f32 %v4283, %v4502
    %v4571 = vadd.f32 %v4284, %v4507
    %v4572 = vadd.f32 %v4285, %v4512
    %v4573 = vadd.f32 %v4286, %v4517
    %v4574 = vadd.f32 %v4287, %v4522
    %v4575 = vadd.f32 %v4288, %v4527
    %v4576 = vadd.f32 %v4289, %v4532
    %v4577 = vadd.f32 %v4290, %v4537
    %v4578 = vadd.f32 %v4291, %v4542
    %v4579 = vadd.f32 %v4292, %v4547
    %v4580 = vadd.f32 %v4293, %v4552
    %v4581 = vadd.f32 %v4294, %v4557
    %4582 = vst [vmem:[#allocation2] sm:$0xff] %v4560
    %4583 = vst [vmem:[#allocation2 + $0x8] sm:$0xff] %v4561
    %4584 = vst [vmem:[#allocation2 + $0x10] sm:$0xff] %v4562
    %4585 = vst [vmem:[#allocation2 + $0x18] sm:$0xff] %v4563
    %4586 = vst [vmem:[#allocation2 + $0x20] sm:$0xff] %v4564
    %4587 = vst [vmem:[#allocation2 + $0x28] sm:$0xff] %v4565
    %4588 = vst [vmem:[#allocation2 + $0x30] sm:$0xff] %v4566
    %4589 = vst [vmem:[#allocation2 + $0x38] sm:$0xff] %v4567
    %4590 = vst [vmem:[#allocation2 + $0x40] sm:$0xff] %v4568
    %4591 = vst [vmem:[#allocation2 + $0x48] sm:$0xff] %v4569
    %4592 = vst [vmem:[#allocation2 + $0x50] sm:$0xff] %v4570
    %4593 = vst [vmem:[#allocation2 + $0x58] sm:$0xff] %v4571
    %4594 = vst [vmem:[#allocation2 + $0x60] sm:$0xff] %v4572
    %4595 = vst [vmem:[#allocation2 + $0x68] sm:$0xff] %v4573
    %4596 = vst [vmem:[#allocation2 + $0x70] sm:$0xff] %v4574
    %4597 = vst [vmem:[#allocation2 + $0x78] sm:$0xff] %v4575
    %4598 = vst [vmem:[#allocation2 + $0x80] sm:$0xff] %v4576
    %4599 = vst [vmem:[#allocation2 + $0x88] sm:$0xff] %v4577
    %4600 = vst [vmem:[#allocation2 + $0x90] sm:$0xff] %v4578
    %4601 = vst [vmem:[#allocation2 + $0x98] sm:$0xff] %v4579
    %4602 = vst [vmem:[#allocation2 + $0xa0] sm:$0xff] %v4580
    %4603 = vst [vmem:[#allocation2 + $0xa8] sm:$0xff] %v4581
    %v4604 = vld [vmem:[#allocation2] sm:$0xff]
    %v4605 = vld [vmem:[#allocation2 + $0x8] sm:$0xff]
    %v4606 = vld [vmem:[#allocation2 + $0x10] sm:$0xff]
    %v4607 = vld [vmem:[#allocation2 + $0x18] sm:$0xff]
    %v4608 = vld [vmem:[#allocation2 + $0x20] sm:$0xff]
    %v4609 = vld [vmem:[#allocation2 + $0x28] sm:$0xff]
    %v4610 = vld [vmem:[#allocation2 + $0x30] sm:$0xff]
    %v4611 = vld [vmem:[#allocation2 + $0x38] sm:$0xff]
    %v4612 = vld [vmem:[#allocation2 + $0x40] sm:$0xff]
    %v4613 = vld [vmem:[#allocation2 + $0x48] sm:$0xff]
    %v4614 = vld [vmem:[#allocation2 + $0x50] sm:$0xff]
    %v4615 = vld [vmem:[#allocation2 + $0x58] sm:$0xff]
    %v4616 = vld [vmem:[#allocation2 + $0x60] sm:$0xff]
    %v4617 = vld [vmem:[#allocation2 + $0x68] sm:$0xff]
    %v4618 = vld [vmem:[#allocation2 + $0x70] sm:$0xff]
    %v4619 = vld [vmem:[#allocation2 + $0x78] sm:$0xff]
    %v4620 = vld [vmem:[#allocation2 + $0x80] sm:$0xff]
    %v4621 = vld [vmem:[#allocation2 + $0x88] sm:$0xff]
    %v4622 = vld [vmem:[#allocation2 + $0x90] sm:$0xff]
    %v4623 = vld [vmem:[#allocation2 + $0x98] sm:$0xff]
    %v4624 = vld [vmem:[#allocation2 + $0xa0] sm:$0xff]
    %v4625 = vld [vmem:[#allocation2 + $0xa8] sm:$0xff]
    %4648 = vrot.lane.b32.xlu0 %v4604, 96
    %v4649 = vpop.permute.xlu0 %4648
    %4650 = vrot.lane.b32.xlu0 %v4605, 96
    %v4651 = vpop.permute.xlu0 %4650
    %4652 = vrot.lane.b32.xlu0 %v4606, 96
    %v4653 = vpop.permute.xlu0 %4652
    %4654 = vrot.lane.b32.xlu0 %v4607, 96
    %v4655 = vpop.permute.xlu0 %4654
    %4656 = vrot.lane.b32.xlu0 %v4608, 96
    %v4657 = vpop.permute.xlu0 %4656
    %4658 = vrot.lane.b32.xlu0 %v4609, 96
    %v4659 = vpop.permute.xlu0 %4658
    %4660 = vrot.lane.b32.xlu0 %v4610, 96
    %v4661 = vpop.permute.xlu0 %4660
    %4662 = vrot.lane.b32.xlu0 %v4611, 96
    %v4663 = vpop.permute.xlu0 %4662
    %4664 = vrot.lane.b32.xlu0 %v4612, 96
    %v4665 = vpop.permute.xlu0 %4664
    %4666 = vrot.lane.b32.xlu0 %v4613, 96
    %v4667 = vpop.permute.xlu0 %4666
    %4668 = vrot.lane.b32.xlu0 %v4614, 96
    %v4669 = vpop.permute.xlu0 %4668
    %4670 = vrot.lane.b32.xlu0 %v4615, 96
    %v4671 = vpop.permute.xlu0 %4670
    %4672 = vrot.lane.b32.xlu0 %v4616, 96
    %v4673 = vpop.permute.xlu0 %4672
    %4674 = vrot.lane.b32.xlu0 %v4617, 96
    %v4675 = vpop.permute.xlu0 %4674
    %4676 = vrot.lane.b32.xlu0 %v4618, 96
    %v4677 = vpop.permute.xlu0 %4676
    %4678 = vrot.lane.b32.xlu0 %v4619, 96
    %v4679 = vpop.permute.xlu0 %4678
    %4680 = vrot.lane.b32.xlu0 %v4620, 96
    %v4681 = vpop.permute.xlu0 %4680
    %4682 = vrot.lane.b32.xlu0 %v4621, 96
    %v4683 = vpop.permute.xlu0 %4682
    %4684 = vrot.lane.b32.xlu0 %v4622, 96
    %v4685 = vpop.permute.xlu0 %4684
    %4686 = vrot.lane.b32.xlu0 %v4623, 96
    %v4687 = vpop.permute.xlu0 %4686
    %4688 = vrot.lane.b32.xlu0 %v4624, 96
    %v4689 = vpop.permute.xlu0 %4688
    %4690 = vrot.lane.b32.xlu0 %v4625, 96
    %v4691 = vpop.permute.xlu0 %4690
    %v4714 = vmax.f32 %v4604, %v4649
    %v4715 = vmax.f32 %v4605, %v4651
    %v4716 = vmax.f32 %v4606, %v4653
    %v4717 = vmax.f32 %v4607, %v4655
    %v4718 = vmax.f32 %v4608, %v4657
    %v4719 = vmax.f32 %v4609, %v4659
    %v4720 = vmax.f32 %v4610, %v4661
    %v4721 = vmax.f32 %v4611, %v4663
    %v4722 = vmax.f32 %v4612, %v4665
    %v4723 = vmax.f32 %v4613, %v4667
    %v4724 = vmax.f32 %v4614, %v4669
    %v4725 = vmax.f32 %v4615, %v4671
    %v4726 = vmax.f32 %v4616, %v4673
    %v4727 = vmax.f32 %v4617, %v4675
    %v4728 = vmax.f32 %v4618, %v4677
    %v4729 = vmax.f32 %v4619, %v4679
    %v4730 = vmax.f32 %v4620, %v4681
    %v4731 = vmax.f32 %v4621, %v4683
    %v4732 = vmax.f32 %v4622, %v4685
    %v4733 = vmax.f32 %v4623, %v4687
    %v4734 = vmax.f32 %v4624, %v4689
    %v4735 = vmax.f32 %v4625, %v4691
    %4758 = vrot.lane.b32.xlu0 %v4714, 64
    %v4759 = vpop.permute.xlu0 %4758
    %4760 = vrot.lane.b32.xlu0 %v4715, 64
    %v4761 = vpop.permute.xlu0 %4760
    %4762 = vrot.lane.b32.xlu0 %v4716, 64
    %v4763 = vpop.permute.xlu0 %4762
    %4764 = vrot.lane.b32.xlu0 %v4717, 64
    %v4765 = vpop.permute.xlu0 %4764
    %4766 = vrot.lane.b32.xlu0 %v4718, 64
    %v4767 = vpop.permute.xlu0 %4766
    %4768 = vrot.lane.b32.xlu0 %v4719, 64
    %v4769 = vpop.permute.xlu0 %4768
    %4770 = vrot.lane.b32.xlu0 %v4720, 64
    %v4771 = vpop.permute.xlu0 %4770
    %4772 = vrot.lane.b32.xlu0 %v4721, 64
    %v4773 = vpop.permute.xlu0 %4772
    %4774 = vrot.lane.b32.xlu0 %v4722, 64
    %v4775 = vpop.permute.xlu0 %4774
    %4776 = vrot.lane.b32.xlu0 %v4723, 64
    %v4777 = vpop.permute.xlu0 %4776
    %4778 = vrot.lane.b32.xlu0 %v4724, 64
    %v4779 = vpop.permute.xlu0 %4778
    %4780 = vrot.lane.b32.xlu0 %v4725, 64
    %v4781 = vpop.permute.xlu0 %4780
    %4782 = vrot.lane.b32.xlu0 %v4726, 64
    %v4783 = vpop.permute.xlu0 %4782
    %4784 = vrot.lane.b32.xlu0 %v4727, 64
    %v4785 = vpop.permute.xlu0 %4784
    %4786 = vrot.lane.b32.xlu0 %v4728, 64
    %v4787 = vpop.permute.xlu0 %4786
    %4788 = vrot.lane.b32.xlu0 %v4729, 64
    %v4789 = vpop.permute.xlu0 %4788
    %4790 = vrot.lane.b32.xlu0 %v4730, 64
    %v4791 = vpop.permute.xlu0 %4790
    %4792 = vrot.lane.b32.xlu0 %v4731, 64
    %v4793 = vpop.permute.xlu0 %4792
    %4794 = vrot.lane.b32.xlu0 %v4732, 64
    %v4795 = vpop.permute.xlu0 %4794
    %4796 = vrot.lane.b32.xlu0 %v4733, 64
    %v4797 = vpop.permute.xlu0 %4796
    %4798 = vrot.lane.b32.xlu0 %v4734, 64
    %v4799 = vpop.permute.xlu0 %4798
    %4800 = vrot.lane.b32.xlu0 %v4735, 64
    %v4801 = vpop.permute.xlu0 %4800
    %v4824 = vmax.f32 %v4714, %v4759
    %v4825 = vmax.f32 %v4715, %v4761
    %v4826 = vmax.f32 %v4716, %v4763
    %v4827 = vmax.f32 %v4717, %v4765
    %v4828 = vmax.f32 %v4718, %v4767
    %v4829 = vmax.f32 %v4719, %v4769
    %v4830 = vmax.f32 %v4720, %v4771
    %v4831 = vmax.f32 %v4721, %v4773
    %v4832 = vmax.f32 %v4722, %v4775
    %v4833 = vmax.f32 %v4723, %v4777
    %v4834 = vmax.f32 %v4724, %v4779
    %v4835 = vmax.f32 %v4725, %v4781
    %v4836 = vmax.f32 %v4726, %v4783
    %v4837 = vmax.f32 %v4727, %v4785
    %v4838 = vmax.f32 %v4728, %v4787
    %v4839 = vmax.f32 %v4729, %v4789
    %v4840 = vmax.f32 %v4730, %v4791
    %v4841 = vmax.f32 %v4731, %v4793
    %v4842 = vmax.f32 %v4732, %v4795
    %v4843 = vmax.f32 %v4733, %v4797
    %v4844 = vmax.f32 %v4734, %v4799
    %v4845 = vmax.f32 %v4735, %v4801
    %v4846 = vld [vmem:[%s2] sm:$0x1]
    %v4848 = vlaneseq
    %v4849 = vshrl.u32 %v4848, 7
    %v4850 = vsub.s32 0, %v4849
    %v4851 = vrot.slane %v4846, %v4850
    %v4853 = vadd.f32 %v4824, %v4851
    %v4854 = vadd.f32 %v4825, %v4851
    %v4855 = vadd.f32 %v4826, %v4851
    %v4856 = vadd.f32 %v4827, %v4851
    %v4857 = vadd.f32 %v4828, %v4851
    %v4858 = vadd.f32 %v4829, %v4851
    %v4859 = vadd.f32 %v4830, %v4851
    %v4860 = vadd.f32 %v4831, %v4851
    %v4861 = vadd.f32 %v4832, %v4851
    %v4862 = vadd.f32 %v4833, %v4851
    %v4863 = vadd.f32 %v4834, %v4851
    %v4864 = vadd.f32 %v4835, %v4851
    %v4865 = vadd.f32 %v4836, %v4851
    %v4866 = vadd.f32 %v4837, %v4851
    %v4867 = vadd.f32 %v4838, %v4851
    %v4868 = vadd.f32 %v4839, %v4851
    %v4869 = vadd.f32 %v4840, %v4851
    %v4870 = vadd.f32 %v4841, %v4851
    %v4871 = vadd.f32 %v4842, %v4851
    %v4872 = vadd.f32 %v4843, %v4851
    %v4873 = vadd.f32 %v4844, %v4851
    %v4874 = vadd.f32 %v4845, %v4851
    %v4875 = vmax.f32 %v4853, 0.0
    %v4876 = vmax.f32 %v4854, 0.0
    %v4877 = vmax.f32 %v4855, 0.0
    %v4878 = vmax.f32 %v4856, 0.0
    %v4879 = vmax.f32 %v4857, 0.0
    %v4880 = vmax.f32 %v4858, 0.0
    %v4881 = vmax.f32 %v4859, 0.0
    %v4882 = vmax.f32 %v4860, 0.0
    %v4883 = vmax.f32 %v4861, 0.0
    %v4884 = vmax.f32 %v4862, 0.0
    %v4885 = vmax.f32 %v4863, 0.0
    %v4886 = vmax.f32 %v4864, 0.0
    %v4887 = vmax.f32 %v4865, 0.0
    %v4888 = vmax.f32 %v4866, 0.0
    %v4889 = vmax.f32 %v4867, 0.0
    %v4890 = vmax.f32 %v4868, 0.0
    %v4891 = vmax.f32 %v4869, 0.0
    %v4892 = vmax.f32 %v4870, 0.0
    %v4893 = vmax.f32 %v4871, 0.0
    %v4894 = vmax.f32 %v4872, 0.0
    %v4895 = vmax.f32 %v4873, 0.0
    %v4896 = vmax.f32 %v4874, 0.0
    %v4897 = vlaneseq
    %v4898 = vshrl.u32 %v4897, 7
    %v4899 = vlaneseq
    %v4900 = vand.u32 %v4899, 127
    %v4901 = vld [vmem:[%s3] sm:$0xff]
    %v4902 = vld [vmem:[%s3 + $0x8] sm:$0xff]
    %v4903 = vld [vmem:[%s3 + $0x10] sm:$0xff]
    %v4904 = vld [vmem:[%s3 + $0x18] sm:$0xff]
    %v4905 = vld [vmem:[%s3 + $0x20] sm:$0xff]
    %v4906 = vld [vmem:[%s3 + $0x28] sm:$0xff]
    %v4907 = vld [vmem:[%s3 + $0x30] sm:$0xff]
    %v4908 = vld [vmem:[%s3 + $0x38] sm:$0xff]
    %v4909 = vld [vmem:[%s3 + $0x40] sm:$0xff]
    %v4910 = vld [vmem:[%s3 + $0x48] sm:$0xff]
    %v4911 = vld [vmem:[%s3 + $0x50] sm:$0xff]
    %v4912 = vmul.f32 %v4875, %v4901
    %v4913 = vmul.f32 %v4876, %v4902
    %v4914 = vmul.f32 %v4877, %v4903
    %v4915 = vmul.f32 %v4878, %v4904
    %v4916 = vmul.f32 %v4879, %v4905
    %v4917 = vmul.f32 %v4880, %v4906
    %v4918 = vmul.f32 %v4881, %v4907
    %v4919 = vmul.f32 %v4882, %v4908
    %v4920 = vmul.f32 %v4883, %v4909
    %v4921 = vmul.f32 %v4884, %v4910
    %v4922 = vmul.f32 %v4885, %v4911
    %vm4923 = vcmask 261120
    %v4924 = vsel %vm4923, %v4912, 0.0
    %4925 = vadd.xlane.f32.xlu0 %v4924
    %v4926 = vpop.xlane.xlu0 %4925
    %v4927 = vsel %vm4923, %v4913, 0.0
    %4928 = vadd.xlane.f32.xlu0 %v4927
    %v4929 = vpop.xlane.xlu0 %4928
    %v4930 = vsel %vm4923, %v4914, 0.0
    %4931 = vadd.xlane.f32.xlu0 %v4930
    %v4932 = vpop.xlane.xlu0 %4931
    %v4933 = vsel %vm4923, %v4915, 0.0
    %4934 = vadd.xlane.f32.xlu0 %v4933
    %v4935 = vpop.xlane.xlu0 %4934
    %v4936 = vsel %vm4923, %v4916, 0.0
    %4937 = vadd.xlane.f32.xlu0 %v4936
    %v4938 = vpop.xlane.xlu0 %4937
    %v4939 = vsel %vm4923, %v4917, 0.0
    %4940 = vadd.xlane.f32.xlu0 %v4939
    %v4941 = vpop.xlane.xlu0 %4940
    %v4942 = vsel %vm4923, %v4918, 0.0
    %4943 = vadd.xlane.f32.xlu0 %v4942
    %v4944 = vpop.xlane.xlu0 %4943
    %v4945 = vsel %vm4923, %v4919, 0.0
    %4946 = vadd.xlane.f32.xlu0 %v4945
    %v4947 = vpop.xlane.xlu0 %4946
    %v4948 = vsel %vm4923, %v4920, 0.0
    %4949 = vadd.xlane.f32.xlu0 %v4948
    %v4950 = vpop.xlane.xlu0 %4949
    %v4951 = vsel %vm4923, %v4921, 0.0
    %4952 = vadd.xlane.f32.xlu0 %v4951
    %v4953 = vpop.xlane.xlu0 %4952
    %v4954 = vsel %vm4923, %v4922, 0.0
    %4955 = vadd.xlane.f32.xlu0 %v4954
    %v4956 = vpop.xlane.xlu0 %4955
    %v4957 = vadd.f32 %v4926, %v4929
    %v4958 = vadd.f32 %v4957, %v4932
    %v4959 = vadd.f32 %v4958, %v4935
    %v4960 = vadd.f32 %v4959, %v4938
    %v4961 = vadd.f32 %v4960, %v4941
    %v4962 = vadd.f32 %v4961, %v4944
    %v4963 = vadd.f32 %v4962, %v4947
    %v4964 = vadd.f32 %v4963, %v4950
    %v4965 = vadd.f32 %v4964, %v4953
    %v4966 = vadd.f32 %v4965, %v4956
    %v4967 = vrot.slane %v4966, 4
    %v4968 = vadd.f32 %v4966, %v4967
    %v4969 = vrot.slane %v4968, 2
    %v4970 = vadd.f32 %v4968, %v4969
    %v4971 = vrot.slane %v4970, 1
    %v4972 = vadd.f32 %v4970, %v4971
    %s4973 = sld [smem:[#allocation3]]
    %v4974 = vstv %s4973
    %v4975 = vadd.f32 %v4972, %v4974
    %vm4976 = vcmp.eq.s32.totalorder %v4898, 0
    %vm4977 = vcmp.eq.s32.totalorder %v4900, 0
    %vm4978 = vmand %vm4976, %vm4977
    %v4979 = vsel %vm4978, %v4975, 0.0
    %s4980 = scalar_lea.vmem %s3, 88
    %v4981 = vld [vmem:[%s4980] sm:$0xff]
    %v4982 = vld [vmem:[%s4980 + $0x8] sm:$0xff]
    %v4983 = vld [vmem:[%s4980 + $0x10] sm:$0xff]
    %v4984 = vld [vmem:[%s4980 + $0x18] sm:$0xff]
    %v4985 = vld [vmem:[%s4980 + $0x20] sm:$0xff]
    %v4986 = vld [vmem:[%s4980 + $0x28] sm:$0xff]
    %v4987 = vld [vmem:[%s4980 + $0x30] sm:$0xff]
    %v4988 = vld [vmem:[%s4980 + $0x38] sm:$0xff]
    %v4989 = vld [vmem:[%s4980 + $0x40] sm:$0xff]
    %v4990 = vld [vmem:[%s4980 + $0x48] sm:$0xff]
    %v4991 = vld [vmem:[%s4980 + $0x50] sm:$0xff]
    %v4992 = vmul.f32 %v4875, %v4981
    %v4993 = vmul.f32 %v4876, %v4982
    %v4994 = vmul.f32 %v4877, %v4983
    %v4995 = vmul.f32 %v4878, %v4984
    %v4996 = vmul.f32 %v4879, %v4985
    %v4997 = vmul.f32 %v4880, %v4986
    %v4998 = vmul.f32 %v4881, %v4987
    %v4999 = vmul.f32 %v4882, %v4988
    %v5000 = vmul.f32 %v4883, %v4989
    %v5001 = vmul.f32 %v4884, %v4990
    %v5002 = vmul.f32 %v4885, %v4991
    %v5003 = vsel %vm4923, %v4992, 0.0
    %5004 = vadd.xlane.f32.xlu0 %v5003
    %v5005 = vpop.xlane.xlu0 %5004
    %v5006 = vsel %vm4923, %v4993, 0.0
    %5007 = vadd.xlane.f32.xlu0 %v5006
    %v5008 = vpop.xlane.xlu0 %5007
    %v5009 = vsel %vm4923, %v4994, 0.0
    %5010 = vadd.xlane.f32.xlu0 %v5009
    %v5011 = vpop.xlane.xlu0 %5010
    %v5012 = vsel %vm4923, %v4995, 0.0
    %5013 = vadd.xlane.f32.xlu0 %v5012
    %v5014 = vpop.xlane.xlu0 %5013
    %v5015 = vsel %vm4923, %v4996, 0.0
    %5016 = vadd.xlane.f32.xlu0 %v5015
    %v5017 = vpop.xlane.xlu0 %5016
    %v5018 = vsel %vm4923, %v4997, 0.0
    %5019 = vadd.xlane.f32.xlu0 %v5018
    %v5020 = vpop.xlane.xlu0 %5019
    %v5021 = vsel %vm4923, %v4998, 0.0
    %5022 = vadd.xlane.f32.xlu0 %v5021
    %v5023 = vpop.xlane.xlu0 %5022
    %v5024 = vsel %vm4923, %v4999, 0.0
    %5025 = vadd.xlane.f32.xlu0 %v5024
    %v5026 = vpop.xlane.xlu0 %5025
    %v5027 = vsel %vm4923, %v5000, 0.0
    %5028 = vadd.xlane.f32.xlu0 %v5027
    %v5029 = vpop.xlane.xlu0 %5028
    %v5030 = vsel %vm4923, %v5001, 0.0
    %5031 = vadd.xlane.f32.xlu0 %v5030
    %v5032 = vpop.xlane.xlu0 %5031
    %v5033 = vsel %vm4923, %v5002, 0.0
    %5034 = vadd.xlane.f32.xlu0 %v5033
    %v5035 = vpop.xlane.xlu0 %5034
    %v5036 = vadd.f32 %v5005, %v5008
    %v5037 = vadd.f32 %v5036, %v5011
    %v5038 = vadd.f32 %v5037, %v5014
    %v5039 = vadd.f32 %v5038, %v5017
    %v5040 = vadd.f32 %v5039, %v5020
    %v5041 = vadd.f32 %v5040, %v5023
    %v5042 = vadd.f32 %v5041, %v5026
    %v5043 = vadd.f32 %v5042, %v5029
    %v5044 = vadd.f32 %v5043, %v5032
    %v5045 = vadd.f32 %v5044, %v5035
    %v5046 = vrot.slane %v5045, 4
    %v5047 = vadd.f32 %v5045, %v5046
    %v5048 = vrot.slane %v5047, 2
    %v5049 = vadd.f32 %v5047, %v5048
    %v5050 = vrot.slane %v5049, 1
    %v5051 = vadd.f32 %v5049, %v5050
    %s5052 = sld [smem:[#allocation3 + $0x1]]
    %v5053 = vstv %s5052
    %v5054 = vadd.f32 %v5051, %v5053
    %vm5055 = vcmp.eq.s32.totalorder %v4900, 1
    %vm5056 = vmand %vm4976, %vm5055
    %v5057 = vsel %vm5056, %v5054, %v4979
    %v5058 = vmul.f32 %v4886, %v4901
    %v5059 = vmul.f32 %v4887, %v4902
    %v5060 = vmul.f32 %v4888, %v4903
    %v5061 = vmul.f32 %v4889, %v4904
    %v5062 = vmul.f32 %v4890, %v4905
    %v5063 = vmul.f32 %v4891, %v4906
    %v5064 = vmul.f32 %v4892, %v4907
    %v5065 = vmul.f32 %v4893, %v4908
    %v5066 = vmul.f32 %v4894, %v4909
    %v5067 = vmul.f32 %v4895, %v4910
    %v5068 = vmul.f32 %v4896, %v4911
    %v5069 = vsel %vm4923, %v5058, 0.0
    %5070 = vadd.xlane.f32.xlu0 %v5069
    %v5071 = vpop.xlane.xlu0 %5070
    %v5072 = vsel %vm4923, %v5059, 0.0
    %5073 = vadd.xlane.f32.xlu0 %v5072
    %v5074 = vpop.xlane.xlu0 %5073
    %v5075 = vsel %vm4923, %v5060, 0.0
    %5076 = vadd.xlane.f32.xlu0 %v5075
    %v5077 = vpop.xlane.xlu0 %5076
    %v5078 = vsel %vm4923, %v5061, 0.0
    %5079 = vadd.xlane.f32.xlu0 %v5078
    %v5080 = vpop.xlane.xlu0 %5079
    %v5081 = vsel %vm4923, %v5062, 0.0
    %5082 = vadd.xlane.f32.xlu0 %v5081
    %v5083 = vpop.xlane.xlu0 %5082
    %v5084 = vsel %vm4923, %v5063, 0.0
    %5085 = vadd.xlane.f32.xlu0 %v5084
    %v5086 = vpop.xlane.xlu0 %5085
    %v5087 = vsel %vm4923, %v5064, 0.0
    %5088 = vadd.xlane.f32.xlu0 %v5087
    %v5089 = vpop.xlane.xlu0 %5088
    %v5090 = vsel %vm4923, %v5065, 0.0
    %5091 = vadd.xlane.f32.xlu0 %v5090
    %v5092 = vpop.xlane.xlu0 %5091
    %v5093 = vsel %vm4923, %v5066, 0.0
    %5094 = vadd.xlane.f32.xlu0 %v5093
    %v5095 = vpop.xlane.xlu0 %5094
    %v5096 = vsel %vm4923, %v5067, 0.0
    %5097 = vadd.xlane.f32.xlu0 %v5096
    %v5098 = vpop.xlane.xlu0 %5097
    %v5099 = vsel %vm4923, %v5068, 0.0
    %5100 = vadd.xlane.f32.xlu0 %v5099
    %v5101 = vpop.xlane.xlu0 %5100
    %v5102 = vadd.f32 %v5071, %v5074
    %v5103 = vadd.f32 %v5102, %v5077
    %v5104 = vadd.f32 %v5103, %v5080
    %v5105 = vadd.f32 %v5104, %v5083
    %v5106 = vadd.f32 %v5105, %v5086
    %v5107 = vadd.f32 %v5106, %v5089
    %v5108 = vadd.f32 %v5107, %v5092
    %v5109 = vadd.f32 %v5108, %v5095
    %v5110 = vadd.f32 %v5109, %v5098
    %v5111 = vadd.f32 %v5110, %v5101
    %v5112 = vrot.slane %v5111, 4
    %v5113 = vadd.f32 %v5111, %v5112
    %v5114 = vrot.slane %v5113, 2
    %v5115 = vadd.f32 %v5113, %v5114
    %v5116 = vrot.slane %v5115, 1
    %v5117 = vadd.f32 %v5115, %v5116
    %v5118 = vadd.f32 %v5117, %v4974
    %vm5119 = vcmp.eq.s32.totalorder %v4898, 1
    %vm5120 = vmand %vm5119, %vm4977
    %v5121 = vsel %vm5120, %v5118, %v5057
    %v5122 = vmul.f32 %v4886, %v4981
    %v5123 = vmul.f32 %v4887, %v4982
    %v5124 = vmul.f32 %v4888, %v4983
    %v5125 = vmul.f32 %v4889, %v4984
    %v5126 = vmul.f32 %v4890, %v4985
    %v5127 = vmul.f32 %v4891, %v4986
    %v5128 = vmul.f32 %v4892, %v4987
    %v5129 = vmul.f32 %v4893, %v4988
    %v5130 = vmul.f32 %v4894, %v4989
    %v5131 = vmul.f32 %v4895, %v4990
    %v5132 = vmul.f32 %v4896, %v4991
    %v5133 = vsel %vm4923, %v5122, 0.0
    %5134 = vadd.xlane.f32.xlu0 %v5133
    %v5135 = vpop.xlane.xlu0 %5134
    %v5136 = vsel %vm4923, %v5123, 0.0
    %5137 = vadd.xlane.f32.xlu0 %v5136
    %v5138 = vpop.xlane.xlu0 %5137
    %v5139 = vsel %vm4923, %v5124, 0.0
    %5140 = vadd.xlane.f32.xlu0 %v5139
    %v5141 = vpop.xlane.xlu0 %5140
    %v5142 = vsel %vm4923, %v5125, 0.0
    %5143 = vadd.xlane.f32.xlu0 %v5142
    %v5144 = vpop.xlane.xlu0 %5143
    %v5145 = vsel %vm4923, %v5126, 0.0
    %5146 = vadd.xlane.f32.xlu0 %v5145
    %v5147 = vpop.xlane.xlu0 %5146
    %v5148 = vsel %vm4923, %v5127, 0.0
    %5149 = vadd.xlane.f32.xlu0 %v5148
    %v5150 = vpop.xlane.xlu0 %5149
    %v5151 = vsel %vm4923, %v5128, 0.0
    %5152 = vadd.xlane.f32.xlu0 %v5151
    %v5153 = vpop.xlane.xlu0 %5152
    %v5154 = vsel %vm4923, %v5129, 0.0
    %5155 = vadd.xlane.f32.xlu0 %v5154
    %v5156 = vpop.xlane.xlu0 %5155
    %v5157 = vsel %vm4923, %v5130, 0.0
    %5158 = vadd.xlane.f32.xlu0 %v5157
    %v5159 = vpop.xlane.xlu0 %5158
    %v5160 = vsel %vm4923, %v5131, 0.0
    %5161 = vadd.xlane.f32.xlu0 %v5160
    %v5162 = vpop.xlane.xlu0 %5161
    %v5163 = vsel %vm4923, %v5132, 0.0
    %5164 = vadd.xlane.f32.xlu0 %v5163
    %v5165 = vpop.xlane.xlu0 %5164
    %v5166 = vadd.f32 %v5135, %v5138
    %v5167 = vadd.f32 %v5166, %v5141
    %v5168 = vadd.f32 %v5167, %v5144
    %v5169 = vadd.f32 %v5168, %v5147
    %v5170 = vadd.f32 %v5169, %v5150
    %v5171 = vadd.f32 %v5170, %v5153
    %v5172 = vadd.f32 %v5171, %v5156
    %v5173 = vadd.f32 %v5172, %v5159
    %v5174 = vadd.f32 %v5173, %v5162
    %v5175 = vadd.f32 %v5174, %v5165
    %v5176 = vrot.slane %v5175, 4
    %v5177 = vadd.f32 %v5175, %v5176
    %v5178 = vrot.slane %v5177, 2
    %v5179 = vadd.f32 %v5177, %v5178
    %v5180 = vrot.slane %v5179, 1
    %v5181 = vadd.f32 %v5179, %v5180
    %v5182 = vadd.f32 %v5181, %v5053
    %vm5183 = vmand %vm5119, %vm5055
    %v5184 = vsel %vm5183, %v5182, %v5121
    %5185 = vst [vmem:[#allocation6] sm:$0x3] %v5184
    // Predicated region
    $region26: #{simple_convnet_forward.1} parent=1 // pred_check
      _
    $region27: #{simple_convnet_forward.1} parent=1 // pred_check_branch
      %5187 = sbr.rel (0) target = $region29
    $region28: #{simple_convnet_forward.1} parent=1 // pred_region
      %s5189 = ssub.s32 32, 32
      %5190 = vsyncadd [#allocation4], %s5189
      %s5192 = sshll.u32 [#allocation6], 4
      %s5193 = int_to_ptr.vmem [resolvable:$true] %s5192
      %5195 = dma.vmem_to_hbm [thread:$0]  %s5193, 32, %s5, [#allocation4]
    $region29: #{simple_convnet_forward.1} parent=1 // pred_fallthru
      _
    // Predicated region
    $region30: #{simple_convnet_forward.1} parent=1 // pred_check
      _
    $region31: #{simple_convnet_forward.1} parent=1 // pred_check_branch
      %5197 = sbr.rel (0) target = $region33
    $region32: #{simple_convnet_forward.1} parent=1 // pred_region
      %5198 = dma.done [#allocation4], 32
    $region33: #{simple_convnet_forward.1} parent=1 // pred_fallthru
      _
    %5199 = vsyncpa [#allocation4], 1
    %5200 = vsyncpa [#allocation5], 1

</llo_original>
